<compile_context>
chip_gen: v7x
topology: tpu7x:2x2x1
jax: 0.10.0
libtpu: 0.0.40
codegen_flags: <defaults>
</compile_context>

<pallas_src>
import numpy as np
import jax
import jax.numpy as jnp
from jax import lax
from jax.experimental import pallas as pl
from jax.experimental.pallas import tpu as pltpu

F = 32              # num_factor
NFM = F // 2        # num_fm = 16
B_BLK = 8           # (user,item) pairs per grid step; B_BLK*NFM = 128 lanes
LANES = B_BLK * NFM # 128
NUM_USER = 64
NUM_ITEM = 64
EPS = 1e-5          # BatchNorm eps


# --------------------------------------------------------------------------
# Pallas kernel: one pair-block (8 pairs) per grid step, lane-dense layout.
#   activations: x[h*W + w, b*NFM + c]   (rows = spatial, lanes = batch*chan)
#
# misc slab rows (f32, broadcast over the 8-pair batch within each lane group):
#   0..4  : conv1..conv5 shift = (bias - running_mean)*bn_scale + beta
#   5     : predict_layer bias
#   8..11 : conv1 2x2 tap weights (BN scale folded), tap = 2*di + dj
# --------------------------------------------------------------------------
def convncf_kernel(u_ref, v_ref, misc_ref, wconv_ref, wp_ref, out_ref):
    u = u_ref[0]                       # (2, 16, 128): u[di, h, b*16+c] = eu[b, 2h+di]
    v = v_ref[0]                       # (2, 16, 128): v[dj, w, b*16+c] = ev[b, 2w+dj]
    misc = misc_ref[...]               # (16, 128) f32

    # ---- conv1: Conv2d(1, NFM, (2,2), stride=2) on outer(u,v) + BN + ReLU --
    # Pure VPU broadcasting in f32 (no M=1 matmuls).
    p0 = v[0] * misc[8] + v[1] * misc[9]      # (16, 128)  sum_dj ev*W1s[c,0,dj]
    p1 = v[0] * misc[10] + v[1] * misc[11]    # (16, 128)  sum_dj ev*W1s[c,1,dj]
    x = u[0][:, None, :] * p0[None, :, :] + u[1][:, None, :] * p1[None, :, :]
    x = x.reshape((F // 2) * (F // 2), LANES)           # (256, 128)
    x = jnp.maximum(x + misc[0][None, :], 0.0)          # shift + ReLU (f32)

    # ---- conv2..conv5: one fused (m*m, 512) @ (512, 128) matmul per layer ---
    n = F // 2
    for layer in range(4):
        m = n // 2
        x6 = x.reshape(m, 2, m, 2, LANES)
        # Fuse the 4 stride-2 taps along the lane axis; single bf16 cast.
        lhs = jnp.concatenate(
            [x6[:, 0, :, 0], x6[:, 0, :, 1], x6[:, 1, :, 0], x6[:, 1, :, 1]],
            axis=-1).reshape(m * m, 4 * LANES).astype(jnp.bfloat16)
        y = jnp.dot(lhs, wconv_ref[layer],               # (m*m, 128), f32 acc
                    preferred_element_type=jnp.float32)
        x = jnp.maximum(y + misc[1 + layer][None, :], 0.0)
        n = m

    # ---- predict_layer: Linear(NFM, 1); x is (1, 128) with lanes b*NFM+c ----
    pred = jnp.dot(x, wp_ref[...], preferred_element_type=jnp.float32)  # (1, 8)
    out_ref[0] = pred + misc[5:6, 0:B_BLK]               # single 8-lane store


# --------------------------------------------------------------------------
# Wrapper: parameter folding/packing, lane-dense embedding layout, pallas_call.
# --------------------------------------------------------------------------
def convncf_forward_pallas(eu, ev, conv_W, conv_b, wp, bp):
    """eu, ev: (B_total, F) gathered embeddings. Returns (B_total,) predictions."""
    b_total = eu.shape[0]
    assert b_total % B_BLK == 0, "batch must be a multiple of 8 (one lane block)"
    nblk = b_total // B_BLK

    # Eval-mode BatchNorm parameters (see TODO at top).
    gamma = jnp.ones((NFM,), jnp.float32)
    beta = jnp.zeros((NFM,), jnp.float32)
    run_mean = jnp.zeros((NFM,), jnp.float32)
    run_var = jnp.ones((NFM,), jnp.float32)
    scale = gamma / jnp.sqrt(run_var + EPS)               # folded into conv weights

    eye = jnp.eye(B_BLK, dtype=jnp.float32)

    # ---- misc slab (16, 128) f32: shifts, predict bias, conv1 tap weights ----
    misc = jnp.zeros((16, LANES), jnp.float32)
    shift_rows = jnp.stack([jnp.tile((conv_b[l] - run_mean) * scale + beta, B_BLK)
                            for l in range(5)])
    misc = misc.at[0:5].set(shift_rows)
    misc = misc.at[5].set(jnp.broadcast_to(bp.reshape(1), (LANES,)))
    w1s = conv_W[0][:, 0] * scale[:, None, None]          # (c, di, dj), BN folded
    w1_rows = jnp.stack([jnp.tile(w1s[:, di, dj], B_BLK)
                         for di in range(2) for dj in range(2)])
    misc = misc.at[8:12].set(w1_rows)

    # ---- conv2..5 fused weights: (4, 512, 128) bf16, block-diag over batch ----
    # row = tap*128 + b*16 + c_in,  col = b*16 + c_out
    wconv = []
    for l in range(1, 5):
        ws = conv_W[l] * scale[:, None, None, None]        # (co, ci, di, dj)
        taps = jnp.stack([ws[:, :, di, dj].T               # (4, ci, co)
                          for di in range(2) for dj in range(2)])
        big = jnp.einsum('tic,ab->taibc', taps, eye)       # (4, B, ci, B, co)
        wconv.append(big.reshape(4 * LANES, LANES))
    wconv = jnp.stack(wconv).astype(jnp.bfloat16)          # (4, 512, 128)

    # ---- predict layer as a (128, 8) block-diag matrix ----
    wp_big = jnp.einsum('c,ab->acb', wp.reshape(NFM).astype(jnp.float32), eye)
    wp_big = wp_big.reshape(LANES, B_BLK)                  # (128, 8)

    # ---- embeddings: parity split + lane-dense (batch*channel) broadcast ----
    def lane_dense(e):
        r = e.astype(jnp.float32).reshape(nblk, B_BLK, F // 2, 2)  # [blk, b, h, d]
        r = jnp.transpose(r, (0, 3, 2, 1))                         # [blk, d, h, b]
        r = jnp.broadcast_to(r[..., None], (nblk, 2, F // 2, B_BLK, NFM))
        return r.reshape(nblk, 2, F // 2, LANES)
    u_e = lane_dense(eu)
    v_e = lane_dense(ev)

    out = pl.pallas_call(
        convncf_kernel,
        out_shape=jax.ShapeDtypeStruct((nblk, 1, B_BLK), jnp.float32),
        grid=(nblk,),
        in_specs=[
            pl.BlockSpec((1, 2, F // 2, LANES), lambda i: (i, 0, 0, 0)),   # u
            pl.BlockSpec((1, 2, F // 2, LANES), lambda i: (i, 0, 0, 0)),   # v
            pl.BlockSpec((16, LANES), lambda i: (0, 0)),                   # misc (resident)
            pl.BlockSpec((4, 4 * LANES, LANES), lambda i: (0, 0, 0)),      # conv2..5 weights
            pl.BlockSpec((LANES, B_BLK), lambda i: (0, 0)),                # predict matrix
        ],
        out_specs=pl.BlockSpec((1, 1, B_BLK), lambda i: (i, 0, 0)),
        compiler_params=pltpu.CompilerParams(
            dimension_semantics=("parallel",)),           # 2nd TensorCore on v7x
    )(u_e, v_e, misc, wconv, wp_big)
    return out.reshape(b_total)


# --------------------------------------------------------------------------
# Pure-JAX reference (mirrors the PyTorch forward, eval-mode BN, f32).
# --------------------------------------------------------------------------
def convncf_forward_reference(eu, ev, conv_W, conv_b, wp, bp):
    x = jnp.einsum('mi,mj->mij', eu, ev)[:, None, :, :]          # (B, 1, F, F) NCHW
    for l in range(5):
        x = lax.conv_general_dilated(
            x, conv_W[l], window_strides=(2, 2), padding='VALID',
            dimension_numbers=('NCHW', 'OIHW', 'NCHW'),
            precision=lax.Precision.HIGHEST)
        x = x + conv_b[l].reshape(1, -1, 1, 1)
        x = x / jnp.sqrt(1.0 + EPS)                               # BN eval
        x = jnp.maximum(x, 0.0)
    x = x.reshape(x.shape[0], -1)                                 # (B, NFM)
    return (x @ wp.reshape(1, NFM).T + bp).reshape(-1)


if __name__ == "__main__":
    key = jax.random.PRNGKey(0)
    keys = jax.random.split(key, 16)
    B_TOTAL = 32                                                  # 4 pair-blocks of 8

    # Deterministic parameter init (shapes per ConvNCF.__init__).
    embed_user_w = 0.01 * jax.random.normal(keys[0], (NUM_USER, F), jnp.float32)
    embed_item_w = 0.01 * jax.random.normal(keys[1], (NUM_ITEM, F), jnp.float32)
    user = jax.random.randint(keys[2], (B_TOTAL,), 0, NUM_USER)
    item = jax.random.randint(keys[3], (B_TOTAL,), 0, NUM_ITEM)

    c_in_list = [1] + [NFM] * 4
    conv_W, conv_b = [], []
    for l in range(5):
        conv_W.append(0.01 * jax.random.normal(keys[4 + l], (NFM, c_in_list[l], 2, 2),
                                               jnp.float32))
        conv_b.append(0.1 * jax.random.normal(keys[9 + l], (NFM,), jnp.float32))
    wp = jax.random.uniform(keys[14], (1, NFM), jnp.float32, -0.5, 0.5)  # predict_layer.weight
    bp = jnp.zeros((1,), jnp.float32)                                    # predict_layer.bias

    # Embedding lookup (tiny gather kept in plain JAX).
    eu = embed_user_w[user]          # (B_TOTAL, F)
    ev = embed_item_w[item]          # (B_TOTAL, F)

    pred = jax.block_until_ready(convncf_forward_pallas(eu, ev, conv_W, conv_b, wp, bp))
    ref = jax.block_until_ready(convncf_forward_reference(eu, ev, conv_W, conv_b, wp, bp))

    # atol loosened slightly because conv2..conv5 use bf16 MXU operands
    # (f32 accumulation); conv1 and the predict layer remain f32.
    if not np.allclose(np.asarray(pred), np.asarray(ref), rtol=1e-2, atol=3e-3):
        raise AssertionError(
            f"mismatch: max abs err = {np.max(np.abs(np.asarray(pred) - np.asarray(ref)))}")

    print("KERNEL_OK")
</pallas_src>

<mosaic_0001>
module attributes {stable_mosaic.version = 11 : i64} {
  func.func @convncf_kernel(%arg0: i32, %arg1: memref<1x2x16x128xf32, #tpu.memory_space<vmem>>, %arg2: memref<1x2x16x128xf32, #tpu.memory_space<vmem>>, %arg3: memref<16x128xf32, #tpu.memory_space<vmem>>, %arg4: memref<4x512x128xbf16, #tpu.memory_space<vmem>>, %arg5: memref<128x8xf32, #tpu.memory_space<vmem>>, %arg6: memref<1x1x8xf32, #tpu.memory_space<vmem>>) attributes {dimension_semantics = [#tpu.dimension_semantics<parallel>], iteration_bounds = array<i64: 4>, scalar_prefetch = 0 : i64, scratch_operands = 0 : i64, tpu.core_type = #tpu.core_type<tc>, window_params = [{transform_indices = @transform_0, window_bounds = array<i64: 1, 2, 16, 128>}, {transform_indices = @transform_1, window_bounds = array<i64: 1, 2, 16, 128>}, {pipeline_mode = #tpu.pipeline_mode<synchronous>, transform_indices = @transform_2, window_bounds = array<i64: 16, 128>}, {pipeline_mode = #tpu.pipeline_mode<synchronous>, transform_indices = @transform_3, window_bounds = array<i64: 4, 512, 128>}, {pipeline_mode = #tpu.pipeline_mode<synchronous>, transform_indices = @transform_4, window_bounds = array<i64: 128, 8>}, {transform_indices = @transform_5, window_bounds = array<i64: 1, 1, 8>}]} {
    %c0 = arith.constant 0 : index
    %c0_0 = arith.constant 0 : index
    %c0_1 = arith.constant 0 : index
    %c0_2 = arith.constant 0 : index
    %0 = vector.load %arg1[%c0, %c0_0, %c0_1, %c0_2] : memref<1x2x16x128xf32, #tpu.memory_space<vmem>>, vector<1x2x16x128xf32>
    %1 = vector.shape_cast %0 : vector<1x2x16x128xf32> to vector<2x16x128xf32>
    %c0_3 = arith.constant 0 : index
    %c0_4 = arith.constant 0 : index
    %c0_5 = arith.constant 0 : index
    %c0_6 = arith.constant 0 : index
    %2 = vector.load %arg2[%c0_3, %c0_4, %c0_5, %c0_6] : memref<1x2x16x128xf32, #tpu.memory_space<vmem>>, vector<1x2x16x128xf32>
    %3 = vector.shape_cast %2 : vector<1x2x16x128xf32> to vector<2x16x128xf32>
    %c0_7 = arith.constant 0 : index
    %c0_8 = arith.constant 0 : index
    %4 = vector.load %arg3[%c0_7, %c0_8] : memref<16x128xf32, #tpu.memory_space<vmem>>, vector<16x128xf32>
    %5 = vector.extract_strided_slice %3 {offsets = [0, 0, 0], sizes = [1, 16, 128], strides = [1, 1, 1]} : vector<2x16x128xf32> to vector<1x16x128xf32>
    %6 = vector.shape_cast %5 : vector<1x16x128xf32> to vector<16x128xf32>
    %7 = vector.extract_strided_slice %4 {offsets = [8, 0], sizes = [1, 128], strides = [1, 1]} : vector<16x128xf32> to vector<1x128xf32>
    %8 = vector.shape_cast %7 : vector<1x128xf32> to vector<128xf32>
    %9 = vector.shape_cast %8 : vector<128xf32> to vector<1x128xf32>
    %10 = vector.broadcast %9 : vector<1x128xf32> to vector<16x128xf32>
    %11 = arith.mulf %6, %10 : vector<16x128xf32>
    %12 = vector.extract_strided_slice %3 {offsets = [1, 0, 0], sizes = [1, 16, 128], strides = [1, 1, 1]} : vector<2x16x128xf32> to vector<1x16x128xf32>
    %13 = vector.shape_cast %12 : vector<1x16x128xf32> to vector<16x128xf32>
    %14 = vector.extract_strided_slice %4 {offsets = [9, 0], sizes = [1, 128], strides = [1, 1]} : vector<16x128xf32> to vector<1x128xf32>
    %15 = vector.shape_cast %14 : vector<1x128xf32> to vector<128xf32>
    %16 = vector.shape_cast %15 : vector<128xf32> to vector<1x128xf32>
    %17 = vector.broadcast %16 : vector<1x128xf32> to vector<16x128xf32>
    %18 = arith.mulf %13, %17 : vector<16x128xf32>
    %19 = arith.addf %11, %18 : vector<16x128xf32>
    %20 = vector.extract_strided_slice %3 {offsets = [0, 0, 0], sizes = [1, 16, 128], strides = [1, 1, 1]} : vector<2x16x128xf32> to vector<1x16x128xf32>
    %21 = vector.shape_cast %20 : vector<1x16x128xf32> to vector<16x128xf32>
    %22 = vector.extract_strided_slice %4 {offsets = [10, 0], sizes = [1, 128], strides = [1, 1]} : vector<16x128xf32> to vector<1x128xf32>
    %23 = vector.shape_cast %22 : vector<1x128xf32> to vector<128xf32>
    %24 = vector.shape_cast %23 : vector<128xf32> to vector<1x128xf32>
    %25 = vector.broadcast %24 : vector<1x128xf32> to vector<16x128xf32>
    %26 = arith.mulf %21, %25 : vector<16x128xf32>
    %27 = vector.extract_strided_slice %3 {offsets = [1, 0, 0], sizes = [1, 16, 128], strides = [1, 1, 1]} : vector<2x16x128xf32> to vector<1x16x128xf32>
    %28 = vector.shape_cast %27 : vector<1x16x128xf32> to vector<16x128xf32>
    %29 = vector.extract_strided_slice %4 {offsets = [11, 0], sizes = [1, 128], strides = [1, 1]} : vector<16x128xf32> to vector<1x128xf32>
    %30 = vector.shape_cast %29 : vector<1x128xf32> to vector<128xf32>
    %31 = vector.shape_cast %30 : vector<128xf32> to vector<1x128xf32>
    %32 = vector.broadcast %31 : vector<1x128xf32> to vector<16x128xf32>
    %33 = arith.mulf %28, %32 : vector<16x128xf32>
    %34 = arith.addf %26, %33 : vector<16x128xf32>
    %35 = vector.extract_strided_slice %1 {offsets = [0, 0, 0], sizes = [1, 16, 128], strides = [1, 1, 1]} : vector<2x16x128xf32> to vector<1x16x128xf32>
    %36 = vector.shape_cast %35 : vector<1x16x128xf32> to vector<16x128xf32>
    %37 = vector.shape_cast %36 : vector<16x128xf32> to vector<16x1x128xf32>
    %38 = vector.shape_cast %19 : vector<16x128xf32> to vector<1x16x128xf32>
    %39 = vector.broadcast %37 : vector<16x1x128xf32> to vector<16x16x128xf32>
    %40 = vector.broadcast %38 : vector<1x16x128xf32> to vector<16x16x128xf32>
    %41 = arith.mulf %39, %40 : vector<16x16x128xf32>
    %42 = vector.extract_strided_slice %1 {offsets = [1, 0, 0], sizes = [1, 16, 128], strides = [1, 1, 1]} : vector<2x16x128xf32> to vector<1x16x128xf32>
    %43 = vector.shape_cast %42 : vector<1x16x128xf32> to vector<16x128xf32>
    %44 = vector.shape_cast %43 : vector<16x128xf32> to vector<16x1x128xf32>
    %45 = vector.shape_cast %34 : vector<16x128xf32> to vector<1x16x128xf32>
    %46 = vector.broadcast %44 : vector<16x1x128xf32> to vector<16x16x128xf32>
    %47 = vector.broadcast %45 : vector<1x16x128xf32> to vector<16x16x128xf32>
    %48 = arith.mulf %46, %47 : vector<16x16x128xf32>
    %49 = arith.addf %41, %48 : vector<16x16x128xf32>
    %50 = vector.shape_cast %49 : vector<16x16x128xf32> to vector<256x128xf32>
    %51 = vector.extract_strided_slice %4 {offsets = [0, 0], sizes = [1, 128], strides = [1, 1]} : vector<16x128xf32> to vector<1x128xf32>
    %52 = vector.shape_cast %51 : vector<1x128xf32> to vector<128xf32>
    %53 = vector.shape_cast %52 : vector<128xf32> to vector<1x128xf32>
    %54 = vector.broadcast %53 : vector<1x128xf32> to vector<256x128xf32>
    %55 = arith.addf %50, %54 : vector<256x128xf32>
    %cst = arith.constant 0.000000e+00 : f32
    %56 = vector.broadcast %cst : f32 to vector<256x128xf32>
    %57 = arith.maximumf %55, %56 : vector<256x128xf32>
    %58 = vector.shape_cast %57 : vector<256x128xf32> to vector<8x2x8x2x128xf32>
    %59 = vector.extract_strided_slice %58 {offsets = [0, 0, 0, 0, 0], sizes = [8, 1, 8, 1, 128], strides = [1, 1, 1, 1, 1]} : vector<8x2x8x2x128xf32> to vector<8x1x8x1x128xf32>
    %60 = vector.shape_cast %59 : vector<8x1x8x1x128xf32> to vector<8x8x128xf32>
    %61 = vector.extract_strided_slice %58 {offsets = [0, 0, 0, 1, 0], sizes = [8, 1, 8, 1, 128], strides = [1, 1, 1, 1, 1]} : vector<8x2x8x2x128xf32> to vector<8x1x8x1x128xf32>
    %62 = vector.shape_cast %61 : vector<8x1x8x1x128xf32> to vector<8x8x128xf32>
    %63 = vector.extract_strided_slice %58 {offsets = [0, 1, 0, 0, 0], sizes = [8, 1, 8, 1, 128], strides = [1, 1, 1, 1, 1]} : vector<8x2x8x2x128xf32> to vector<8x1x8x1x128xf32>
    %64 = vector.shape_cast %63 : vector<8x1x8x1x128xf32> to vector<8x8x128xf32>
    %65 = vector.extract_strided_slice %58 {offsets = [0, 1, 0, 1, 0], sizes = [8, 1, 8, 1, 128], strides = [1, 1, 1, 1, 1]} : vector<8x2x8x2x128xf32> to vector<8x1x8x1x128xf32>
    %66 = vector.shape_cast %65 : vector<8x1x8x1x128xf32> to vector<8x8x128xf32>
    %67 = tpu.concatenate %60, %62, %64, %66 in 2 : vector<8x8x128xf32>, vector<8x8x128xf32>, vector<8x8x128xf32>, vector<8x8x128xf32> -> vector<8x8x512xf32>
    %68 = vector.shape_cast %67 : vector<8x8x512xf32> to vector<64x512xf32>
    %69 = arith.truncf %68 : vector<64x512xf32> to vector<64x512xbf16>
    %c0_9 = arith.constant 0 : index
    %c0_10 = arith.constant 0 : index
    %c0_11 = arith.constant 0 : index
    %70 = vector.load %arg4[%c0_9, %c0_10, %c0_11] : memref<4x512x128xbf16, #tpu.memory_space<vmem>>, vector<1x512x128xbf16>
    %71 = vector.shape_cast %70 : vector<1x512x128xbf16> to vector<512x128xbf16>
    %cst_12 = arith.constant dense<0.000000e+00> : vector<64x128xf32>
    %72 = tpu.matmul %69, %71, %cst_12 {dimension_numbers = #tpu.dot_dimension_numbers<[1], [0], [0], [1], [0, 0, 1, 1], [], []>} : vector<64x512xbf16>, vector<512x128xbf16>, vector<64x128xf32> -> vector<64x128xf32>
    %73 = vector.extract_strided_slice %4 {offsets = [1, 0], sizes = [1, 128], strides = [1, 1]} : vector<16x128xf32> to vector<1x128xf32>
    %74 = vector.shape_cast %73 : vector<1x128xf32> to vector<128xf32>
    %75 = vector.shape_cast %74 : vector<128xf32> to vector<1x128xf32>
    %76 = vector.broadcast %75 : vector<1x128xf32> to vector<64x128xf32>
    %77 = arith.addf %72, %76 : vector<64x128xf32>
    %cst_13 = arith.constant 0.000000e+00 : f32
    %78 = vector.broadcast %cst_13 : f32 to vector<64x128xf32>
    %79 = arith.maximumf %77, %78 : vector<64x128xf32>
    %80 = vector.shape_cast %79 : vector<64x128xf32> to vector<4x2x4x2x128xf32>
    %81 = vector.extract_strided_slice %80 {offsets = [0, 0, 0, 0, 0], sizes = [4, 1, 4, 1, 128], strides = [1, 1, 1, 1, 1]} : vector<4x2x4x2x128xf32> to vector<4x1x4x1x128xf32>
    %82 = vector.shape_cast %81 : vector<4x1x4x1x128xf32> to vector<4x4x128xf32>
    %83 = vector.extract_strided_slice %80 {offsets = [0, 0, 0, 1, 0], sizes = [4, 1, 4, 1, 128], strides = [1, 1, 1, 1, 1]} : vector<4x2x4x2x128xf32> to vector<4x1x4x1x128xf32>
    %84 = vector.shape_cast %83 : vector<4x1x4x1x128xf32> to vector<4x4x128xf32>
    %85 = vector.extract_strided_slice %80 {offsets = [0, 1, 0, 0, 0], sizes = [4, 1, 4, 1, 128], strides = [1, 1, 1, 1, 1]} : vector<4x2x4x2x128xf32> to vector<4x1x4x1x128xf32>
    %86 = vector.shape_cast %85 : vector<4x1x4x1x128xf32> to vector<4x4x128xf32>
    %87 = vector.extract_strided_slice %80 {offsets = [0, 1, 0, 1, 0], sizes = [4, 1, 4, 1, 128], strides = [1, 1, 1, 1, 1]} : vector<4x2x4x2x128xf32> to vector<4x1x4x1x128xf32>
    %88 = vector.shape_cast %87 : vector<4x1x4x1x128xf32> to vector<4x4x128xf32>
    %89 = tpu.concatenate %82, %84, %86, %88 in 2 : vector<4x4x128xf32>, vector<4x4x128xf32>, vector<4x4x128xf32>, vector<4x4x128xf32> -> vector<4x4x512xf32>
    %90 = vector.shape_cast %89 : vector<4x4x512xf32> to vector<16x512xf32>
    %91 = arith.truncf %90 : vector<16x512xf32> to vector<16x512xbf16>
    %c1 = arith.constant 1 : index
    %c0_14 = arith.constant 0 : index
    %c0_15 = arith.constant 0 : index
    %92 = vector.load %arg4[%c1, %c0_14, %c0_15] : memref<4x512x128xbf16, #tpu.memory_space<vmem>>, vector<1x512x128xbf16>
    %93 = vector.shape_cast %92 : vector<1x512x128xbf16> to vector<512x128xbf16>
    %cst_16 = arith.constant dense<0.000000e+00> : vector<16x128xf32>
    %94 = tpu.matmul %91, %93, %cst_16 {dimension_numbers = #tpu.dot_dimension_numbers<[1], [0], [0], [1], [0, 0, 1, 1], [], []>} : vector<16x512xbf16>, vector<512x128xbf16>, vector<16x128xf32> -> vector<16x128xf32>
    %95 = vector.extract_strided_slice %4 {offsets = [2, 0], sizes = [1, 128], strides = [1, 1]} : vector<16x128xf32> to vector<1x128xf32>
    %96 = vector.shape_cast %95 : vector<1x128xf32> to vector<128xf32>
    %97 = vector.shape_cast %96 : vector<128xf32> to vector<1x128xf32>
    %98 = vector.broadcast %97 : vector<1x128xf32> to vector<16x128xf32>
    %99 = arith.addf %94, %98 : vector<16x128xf32>
    %cst_17 = arith.constant 0.000000e+00 : f32
    %100 = vector.broadcast %cst_17 : f32 to vector<16x128xf32>
    %101 = arith.maximumf %99, %100 : vector<16x128xf32>
    %102 = vector.shape_cast %101 : vector<16x128xf32> to vector<2x2x2x2x128xf32>
    %103 = vector.extract_strided_slice %102 {offsets = [0, 0, 0, 0, 0], sizes = [2, 1, 2, 1, 128], strides = [1, 1, 1, 1, 1]} : vector<2x2x2x2x128xf32> to vector<2x1x2x1x128xf32>
    %104 = vector.shape_cast %103 : vector<2x1x2x1x128xf32> to vector<2x2x128xf32>
    %105 = vector.extract_strided_slice %102 {offsets = [0, 0, 0, 1, 0], sizes = [2, 1, 2, 1, 128], strides = [1, 1, 1, 1, 1]} : vector<2x2x2x2x128xf32> to vector<2x1x2x1x128xf32>
    %106 = vector.shape_cast %105 : vector<2x1x2x1x128xf32> to vector<2x2x128xf32>
    %107 = vector.extract_strided_slice %102 {offsets = [0, 1, 0, 0, 0], sizes = [2, 1, 2, 1, 128], strides = [1, 1, 1, 1, 1]} : vector<2x2x2x2x128xf32> to vector<2x1x2x1x128xf32>
    %108 = vector.shape_cast %107 : vector<2x1x2x1x128xf32> to vector<2x2x128xf32>
    %109 = vector.extract_strided_slice %102 {offsets = [0, 1, 0, 1, 0], sizes = [2, 1, 2, 1, 128], strides = [1, 1, 1, 1, 1]} : vector<2x2x2x2x128xf32> to vector<2x1x2x1x128xf32>
    %110 = vector.shape_cast %109 : vector<2x1x2x1x128xf32> to vector<2x2x128xf32>
    %111 = tpu.concatenate %104, %106, %108, %110 in 2 : vector<2x2x128xf32>, vector<2x2x128xf32>, vector<2x2x128xf32>, vector<2x2x128xf32> -> vector<2x2x512xf32>
    %112 = vector.shape_cast %111 : vector<2x2x512xf32> to vector<4x512xf32>
    %113 = arith.truncf %112 : vector<4x512xf32> to vector<4x512xbf16>
    %c2 = arith.constant 2 : index
    %c0_18 = arith.constant 0 : index
    %c0_19 = arith.constant 0 : index
    %114 = vector.load %arg4[%c2, %c0_18, %c0_19] : memref<4x512x128xbf16, #tpu.memory_space<vmem>>, vector<1x512x128xbf16>
    %115 = vector.shape_cast %114 : vector<1x512x128xbf16> to vector<512x128xbf16>
    %cst_20 = arith.constant dense<0.000000e+00> : vector<4x128xf32>
    %116 = tpu.matmul %113, %115, %cst_20 {dimension_numbers = #tpu.dot_dimension_numbers<[1], [0], [0], [1], [0, 0, 1, 1], [], []>} : vector<4x512xbf16>, vector<512x128xbf16>, vector<4x128xf32> -> vector<4x128xf32>
    %117 = vector.extract_strided_slice %4 {offsets = [3, 0], sizes = [1, 128], strides = [1, 1]} : vector<16x128xf32> to vector<1x128xf32>
    %118 = vector.shape_cast %117 : vector<1x128xf32> to vector<128xf32>
    %119 = vector.shape_cast %118 : vector<128xf32> to vector<1x128xf32>
    %120 = vector.broadcast %119 : vector<1x128xf32> to vector<4x128xf32>
    %121 = arith.addf %116, %120 : vector<4x128xf32>
    %cst_21 = arith.constant 0.000000e+00 : f32
    %122 = vector.broadcast %cst_21 : f32 to vector<4x128xf32>
    %123 = arith.maximumf %121, %122 : vector<4x128xf32>
    %124 = vector.shape_cast %123 : vector<4x128xf32> to vector<1x2x1x2x128xf32>
    %125 = vector.extract_strided_slice %124 {offsets = [0, 0, 0, 0, 0], sizes = [1, 1, 1, 1, 128], strides = [1, 1, 1, 1, 1]} : vector<1x2x1x2x128xf32> to vector<1x1x1x1x128xf32>
    %126 = vector.shape_cast %125 : vector<1x1x1x1x128xf32> to vector<1x1x128xf32>
    %127 = vector.extract_strided_slice %124 {offsets = [0, 0, 0, 1, 0], sizes = [1, 1, 1, 1, 128], strides = [1, 1, 1, 1, 1]} : vector<1x2x1x2x128xf32> to vector<1x1x1x1x128xf32>
    %128 = vector.shape_cast %127 : vector<1x1x1x1x128xf32> to vector<1x1x128xf32>
    %129 = vector.extract_strided_slice %124 {offsets = [0, 1, 0, 0, 0], sizes = [1, 1, 1, 1, 128], strides = [1, 1, 1, 1, 1]} : vector<1x2x1x2x128xf32> to vector<1x1x1x1x128xf32>
    %130 = vector.shape_cast %129 : vector<1x1x1x1x128xf32> to vector<1x1x128xf32>
    %131 = vector.extract_strided_slice %124 {offsets = [0, 1, 0, 1, 0], sizes = [1, 1, 1, 1, 128], strides = [1, 1, 1, 1, 1]} : vector<1x2x1x2x128xf32> to vector<1x1x1x1x128xf32>
    %132 = vector.shape_cast %131 : vector<1x1x1x1x128xf32> to vector<1x1x128xf32>
    %133 = tpu.concatenate %126, %128, %130, %132 in 2 : vector<1x1x128xf32>, vector<1x1x128xf32>, vector<1x1x128xf32>, vector<1x1x128xf32> -> vector<1x1x512xf32>
    %134 = vector.shape_cast %133 : vector<1x1x512xf32> to vector<1x512xf32>
    %135 = arith.truncf %134 : vector<1x512xf32> to vector<1x512xbf16>
    %c3 = arith.constant 3 : index
    %c0_22 = arith.constant 0 : index
    %c0_23 = arith.constant 0 : index
    %136 = vector.load %arg4[%c3, %c0_22, %c0_23] : memref<4x512x128xbf16, #tpu.memory_space<vmem>>, vector<1x512x128xbf16>
    %137 = vector.shape_cast %136 : vector<1x512x128xbf16> to vector<512x128xbf16>
    %cst_24 = arith.constant dense<0.000000e+00> : vector<1x128xf32>
    %138 = tpu.matmul %135, %137, %cst_24 {dimension_numbers = #tpu.dot_dimension_numbers<[1], [0], [0], [1], [0, 0, 1, 1], [], []>} : vector<1x512xbf16>, vector<512x128xbf16>, vector<1x128xf32> -> vector<1x128xf32>
    %139 = vector.extract_strided_slice %4 {offsets = [4, 0], sizes = [1, 128], strides = [1, 1]} : vector<16x128xf32> to vector<1x128xf32>
    %140 = vector.shape_cast %139 : vector<1x128xf32> to vector<128xf32>
    %141 = vector.shape_cast %140 : vector<128xf32> to vector<1x128xf32>
    %142 = arith.addf %138, %141 : vector<1x128xf32>
    %cst_25 = arith.constant 0.000000e+00 : f32
    %143 = vector.broadcast %cst_25 : f32 to vector<1x128xf32>
    %144 = arith.maximumf %142, %143 : vector<1x128xf32>
    %c0_26 = arith.constant 0 : index
    %c0_27 = arith.constant 0 : index
    %145 = vector.load %arg5[%c0_26, %c0_27] : memref<128x8xf32, #tpu.memory_space<vmem>>, vector<128x8xf32>
    %cst_28 = arith.constant dense<0.000000e+00> : vector<1x8xf32>
    %146 = tpu.matmul %144, %145, %cst_28 {dimension_numbers = #tpu.dot_dimension_numbers<[1], [0], [0], [1], [0, 0, 1, 1], [], []>} : vector<1x128xf32>, vector<128x8xf32>, vector<1x8xf32> -> vector<1x8xf32>
    %147 = vector.extract_strided_slice %4 {offsets = [5, 0], sizes = [1, 8], strides = [1, 1]} : vector<16x128xf32> to vector<1x8xf32>
    %148 = arith.addf %146, %147 : vector<1x8xf32>
    %c0_29 = arith.constant 0 : index
    %c0_30 = arith.constant 0 : index
    %c0_31 = arith.constant 0 : index
    %149 = vector.load %arg6[%c0_29, %c0_30, %c0_31] : memref<1x1x8xf32, #tpu.memory_space<vmem>>, vector<1x1x8xf32>
    %150 = vector.shape_cast %149 : vector<1x1x8xf32> to vector<1x8xf32>
    %151 = vector.shape_cast %148 : vector<1x8xf32> to vector<1x1x8xf32>
    tpu.vector_store %arg6[%c0_29, %c0_30, %c0_31], %151 {strides = array<i32>} : memref<1x1x8xf32, #tpu.memory_space<vmem>>, vector<1x1x8xf32>,
    return
  }
  func.func @transform_0(%arg0: i32) -> (i32, i32, i32, i32) {
    %c0_i32 = arith.constant 0 : i32
    %c0_i32_0 = arith.constant 0 : i32
    %c0_i32_1 = arith.constant 0 : i32
    %c0_i32_2 = arith.constant 0 : i32
    return %arg0, %c0_i32, %c0_i32_0, %c0_i32_1 : i32, i32, i32, i32
  }
  func.func @transform_1(%arg0: i32) -> (i32, i32, i32, i32) {
    %c0_i32 = arith.constant 0 : i32
    %c0_i32_0 = arith.constant 0 : i32
    %c0_i32_1 = arith.constant 0 : i32
    %c0_i32_2 = arith.constant 0 : i32
    return %arg0, %c0_i32, %c0_i32_0, %c0_i32_1 : i32, i32, i32, i32
  }
  func.func @transform_2(%arg0: i32) -> (i32, i32) {
    %c0_i32 = arith.constant 0 : i32
    %c0_i32_0 = arith.constant 0 : i32
    %c0_i32_1 = arith.constant 0 : i32
    return %c0_i32, %c0_i32_0 : i32, i32
  }
  func.func @transform_3(%arg0: i32) -> (i32, i32, i32) {
    %c0_i32 = arith.constant 0 : i32
    %c0_i32_0 = arith.constant 0 : i32
    %c0_i32_1 = arith.constant 0 : i32
    %c0_i32_2 = arith.constant 0 : i32
    return %c0_i32, %c0_i32_0, %c0_i32_1 : i32, i32, i32
  }
  func.func @transform_4(%arg0: i32) -> (i32, i32) {
    %c0_i32 = arith.constant 0 : i32
    %c0_i32_0 = arith.constant 0 : i32
    %c0_i32_1 = arith.constant 0 : i32
    return %c0_i32, %c0_i32_0 : i32, i32
  }
  func.func @transform_5(%arg0: i32) -> (i32, i32, i32) {
    %c0_i32 = arith.constant 0 : i32
    %c0_i32_0 = arith.constant 0 : i32
    %c0_i32_1 = arith.constant 0 : i32
    return %arg0, %c0_i32, %c0_i32_0 : i32, i32, i32
  }
}

</mosaic_0001>

<llo_original>
// kernel: tpu_custom_call.1
$region0: #{tpu_custom_call.1}
  #allocation0 [shape = 'u32[]', space=smem, size = 0x4, offset = 0x4, fixed_abs, tag = 'smem constant byte address 0x4 - core index']
  #allocation1 [shape = 'u32[144,128]{1,0:T(1,128)}', space=vmem, size = 0x12000, scoped, tag = 'internal scratch']
  %s0 = inlined_call_operand.vmem [shape: f32[4,2,16,128], index: 0, kind: input, shape index: {}]
  %s1 = inlined_call_operand.hbm [shape: f32[4,2,16,128], index: 1, kind: input, shape index: {}]
  %s2 = inlined_call_operand.hbm [shape: f32[16,128], index: 2, kind: input, shape index: {}]
  %s3 = inlined_call_operand.hbm [shape: bf16[4,512,128], index: 3, kind: input, shape index: {}]
  %s4 = inlined_call_operand.vmem [shape: f32[128,8], index: 4, kind: input, shape index: {}]
  %s5 = inlined_call_operand.hbm [shape: f32[4,1,8], index: 5, kind: output, shape index: {}]
  %s6 = sld [smem:[#allocation0]]
  $region65: #{tpu_custom_call.1} parent=0
    _
  %s8 = ssub.s32 1, %s6
  %s9 = scalar_select 0, %s8, %s6
  $region1: #{tpu_custom_call.1} parent=0
    #allocation2 [shape = 'u8[32768]{0}', space=vmem, size = 0x8000, scoped, tag = 'input window, operand 1']
    #allocation3 [shape = 's32[2]{0}', space=sflag, size = 0x8, scoped, tag = 'scoped memory for tpu_custom_call.1']
    #allocation4 [shape = 's32[2]{0}', space=sflag, size = 0x8, scoped, tag = 'scoped memory for tpu_custom_call.1']
    #allocation5 [shape = 'u8[8192]{0}', space=vmem, size = 0x2000, scoped, tag = 'input window, operand 2, single buffered']
    #allocation6 [shape = 's32[1]{0}', space=sflag, size = 0x4, scoped, tag = 'scoped memory for tpu_custom_call.1']
    #allocation7 [shape = 'u8[524288]{0}', space=vmem, size = 0x80000, scoped, tag = 'input window, operand 3, single buffered']
    #allocation8 [shape = 'u8[1024]{0}', space=vmem, size = 0x400, scoped, tag = 'output window, operand 0']
    %10 = vsyncpa [#allocation3], 0
    %s11 = scalar_lea.sflag [#allocation3], 1
    %12 = vsyncpa %s11, 0
    %13 = vsyncpa [#allocation6], 0
    %14 = vsyncpa [#allocation4], 0
    %s15 = scalar_lea.sflag [#allocation4], 1
    %16 = vsyncpa %s15, 0
    loop: start=0, step=1, limit=6
    $region2: #{tpu_custom_call.1} parent=1 // loop_pre_header
      _
    $region3: #{tpu_custom_call.1} parent=1 // loop_header
      %s18 = sphi 0, %s22
      %p19 = scmp.ge.s32.totalorder %s18, 6
      %s28 = sphi 0, %s30
      %s31 = sphi 0, %s28
      %s32 = sphi 0, %s31
      %s48 = sphi 0, %s32
      %s54 = sphi 0, %s56
      %s57 = sphi 0, %s54
      %s58 = sphi 0, %s57
      %s74 = sphi 0, %s58
      %s78 = sphi 0, %s78
      %s80 = sphi 0, %s78
      %s81 = sphi 0, %s80
      %s95 = sphi 0, %s81
      %s99 = sphi 0, %s99
      %s101 = sphi 0, %s99
      %s102 = sphi 0, %s101
      %s116 = sphi 0, %s102
      %s120 = sphi 0, %s120
      %s122 = sphi 0, %s120
      %s123 = sphi 0, %s122
      %s137 = sphi 0, %s123
      %s143 = sphi 0, %s145
      %s146 = sphi 0, %s143
      %s147 = sphi 0, %s146
      %s163 = sphi 0, %s147
    $region4: #{tpu_custom_call.1} parent=1 // loop_header_branch
      %21 = sbr.rel (%p19) target = $region8
    $region5: #{tpu_custom_call.1} parent=1 // loop_body
      %s23 = ssub.s32 %s18, 1
      %s24 = ssub.s32 %s18, 2
      %s25 = sadd.s32 %s18, 1
      %s26 = ssub.s32 %s18, %s25
      %p27 = scmp.eq.s32.totalorder %s26, 0
      %s29 = sadd.s32 %s28, 1
      %s30 = scalar_select %p27, %s28, %s29
      %p33 = pneg %p27
      %p34 = scmp.eq.s32.totalorder %s18, 3
      %p35 = por %p33, %p34
      %p36 = scmp.ne.s32.totalorder %s28, %s31
      %p37 = scmp.eq.s32.totalorder %s18, 0
      %p38 = por %p36, %p37
      %p39 = scmp.ne.s32.totalorder %s28, %s31
      %p40 = scmp.eq.s32.totalorder %s23, 3
      %p41 = por %p39, %p40
      %p42 = scmp.ne.s32.totalorder %s31, %s32
      %p43 = scmp.eq.s32.totalorder %s23, 0
      %p44 = por %p42, %p43
      %p45 = scmp.ne.s32.totalorder %s31, %s32
      %p46 = scmp.eq.s32.totalorder %s24, 3
      %p47 = por %p45, %p46
      %p49 = scmp.ne.s32.totalorder %s32, %s48
      %p50 = scmp.eq.s32.totalorder %s24, 0
      %p51 = por %p49, %p50
      %s52 = ssub.s32 %s18, %s25
      %p53 = scmp.eq.s32.totalorder %s52, 0
      %s55 = sadd.s32 %s54, 1
      %s56 = scalar_select %p53, %s54, %s55
      %p59 = pneg %p53
      %p60 = scmp.eq.s32.totalorder %s18, 3
      %p61 = por %p59, %p60
      %p62 = scmp.ne.s32.totalorder %s54, %s57
      %p63 = scmp.eq.s32.totalorder %s18, 0
      %p64 = por %p62, %p63
      %p65 = scmp.ne.s32.totalorder %s54, %s57
      %p66 = scmp.eq.s32.totalorder %s23, 3
      %p67 = por %p65, %p66
      %p68 = scmp.ne.s32.totalorder %s57, %s58
      %p69 = scmp.eq.s32.totalorder %s23, 0
      %p70 = por %p68, %p69
      %p71 = scmp.ne.s32.totalorder %s57, %s58
      %p72 = scmp.eq.s32.totalorder %s24, 3
      %p73 = por %p71, %p72
      %p75 = scmp.ne.s32.totalorder %s58, %s74
      %p76 = scmp.eq.s32.totalorder %s24, 0
      %p77 = por %p75, %p76
      %s79 = sadd.s32 %s78, 1
      %p82 = scmp.eq.s32.totalorder %s18, 3
      %p83 = scmp.ne.s32.totalorder %s78, %s80
      %p84 = scmp.eq.s32.totalorder %s18, 0
      %p85 = por %p83, %p84
      %p86 = scmp.ne.s32.totalorder %s78, %s80
      %p87 = scmp.eq.s32.totalorder %s23, 3
      %p88 = por %p86, %p87
      %p89 = scmp.ne.s32.totalorder %s80, %s81
      %p90 = scmp.eq.s32.totalorder %s23, 0
      %p91 = por %p89, %p90
      %p92 = scmp.ne.s32.totalorder %s80, %s81
      %p93 = scmp.eq.s32.totalorder %s24, 3
      %p94 = por %p92, %p93
      %p96 = scmp.ne.s32.totalorder %s81, %s95
      %p97 = scmp.eq.s32.totalorder %s24, 0
      %p98 = por %p96, %p97
      %s100 = sadd.s32 %s99, 1
      %p103 = scmp.eq.s32.totalorder %s18, 3
      %p104 = scmp.ne.s32.totalorder %s99, %s101
      %p105 = scmp.eq.s32.totalorder %s18, 0
      %p106 = por %p104, %p105
      %p107 = scmp.ne.s32.totalorder %s99, %s101
      %p108 = scmp.eq.s32.totalorder %s23, 3
      %p109 = por %p107, %p108
      %p110 = scmp.ne.s32.totalorder %s101, %s102
      %p111 = scmp.eq.s32.totalorder %s23, 0
      %p112 = por %p110, %p111
      %p113 = scmp.ne.s32.totalorder %s101, %s102
      %p114 = scmp.eq.s32.totalorder %s24, 3
      %p115 = por %p113, %p114
      %p117 = scmp.ne.s32.totalorder %s102, %s116
      %p118 = scmp.eq.s32.totalorder %s24, 0
      %p119 = por %p117, %p118
      %s121 = sadd.s32 %s120, 1
      %p124 = scmp.eq.s32.totalorder %s18, 3
      %p125 = scmp.ne.s32.totalorder %s120, %s122
      %p126 = scmp.eq.s32.totalorder %s18, 0
      %p127 = por %p125, %p126
      %p128 = scmp.ne.s32.totalorder %s120, %s122
      %p129 = scmp.eq.s32.totalorder %s23, 3
      %p130 = por %p128, %p129
      %p131 = scmp.ne.s32.totalorder %s122, %s123
      %p132 = scmp.eq.s32.totalorder %s23, 0
      %p133 = por %p131, %p132
      %p134 = scmp.ne.s32.totalorder %s122, %s123
      %p135 = scmp.eq.s32.totalorder %s24, 3
      %p136 = por %p134, %p135
      %p138 = scmp.ne.s32.totalorder %s123, %s137
      %p139 = scmp.eq.s32.totalorder %s24, 0
      %p140 = por %p138, %p139
      %s141 = ssub.s32 %s18, %s25
      %p142 = scmp.eq.s32.totalorder %s141, 0
      %s144 = sadd.s32 %s143, 1
      %s145 = scalar_select %p142, %s143, %s144
      %p148 = pneg %p142
      %p149 = scmp.eq.s32.totalorder %s18, 3
      %p150 = por %p148, %p149
      %p151 = scmp.ne.s32.totalorder %s143, %s146
      %p152 = scmp.eq.s32.totalorder %s18, 0
      %p153 = por %p151, %p152
      %p154 = scmp.ne.s32.totalorder %s143, %s146
      %p155 = scmp.eq.s32.totalorder %s23, 3
      %p156 = por %p154, %p155
      %p157 = scmp.ne.s32.totalorder %s146, %s147
      %p158 = scmp.eq.s32.totalorder %s23, 0
      %p159 = por %p157, %p158
      %p160 = scmp.ne.s32.totalorder %s146, %s147
      %p161 = scmp.eq.s32.totalorder %s24, 3
      %p162 = por %p160, %p161
      %p164 = scmp.ne.s32.totalorder %s147, %s163
      %p165 = scmp.eq.s32.totalorder %s24, 0
      %p166 = por %p164, %p165
      %p167 = scmp.le.s32.totalorder 1, %s18
      %p168 = scmp.lt.s32.totalorder %s18, 5
      %p169 = pnand %p167, %p168
      %p170 = pneg %p169
      // Predicated region
      $region9: #{tpu_custom_call.1} parent=5 // pred_check
        _
      $region10: #{tpu_custom_call.1} parent=5 // pred_check_branch
        %172 = sbr.rel (%p169) target = $region12
      $region11: #{tpu_custom_call.1} parent=5 // pred_region
        %s173 = ssub.s32 %s18, 1
        // Predicated region
        $region13: #{tpu_custom_call.1} parent=11 // pred_check
          %p174 = pneg %p91
        $region14: #{tpu_custom_call.1} parent=11 // pred_check_branch
          %176 = sbr.rel (%p174) target = $region16
        $region15: #{tpu_custom_call.1} parent=11 // pred_region
          %s178 = ssub.s32 256, 256
          %179 = vsyncadd [#allocation6], %s178
          %s180 = sshll.u32 [#allocation5], 4
          %s181 = int_to_ptr.vmem [resolvable:$true] %s180
          %186 = dma.hbm_to_vmem [thread:$0]  %s2, 256, %s181, [#allocation6], 128, 128, 8
        $region16: #{tpu_custom_call.1} parent=11 // pred_fallthru
          _
        // Predicated region
        $region17: #{tpu_custom_call.1} parent=11 // pred_check
          %p187 = pneg %p112
        $region18: #{tpu_custom_call.1} parent=11 // pred_check_branch
          %189 = sbr.rel (%p187) target = $region20
        $region19: #{tpu_custom_call.1} parent=11 // pred_region
          %s191 = ssub.s32 16384, 16384
          %192 = vsyncadd [#allocation6], %s191
          %s193 = sshll.u32 [#allocation7], 4
          %s194 = int_to_ptr.vmem [resolvable:$true] %s193
          %199 = dma.hbm_to_vmem [thread:$0]  %s3, 16384, %s194, [#allocation6], 64, 64, 4
        $region20: #{tpu_custom_call.1} parent=11 // pred_fallthru
          _
        // Predicated region
        $region21: #{tpu_custom_call.1} parent=11 // pred_check
          %p200 = pneg %p133
        $region22: #{tpu_custom_call.1} parent=11 // pred_check_branch
          %202 = sbr.rel (%p200) target = $region24
        $region23: #{tpu_custom_call.1} parent=11 // pred_region
          _
        $region24: #{tpu_custom_call.1} parent=11 // pred_fallthru
          _
      $region12: #{tpu_custom_call.1} parent=5 // pred_fallthru
        _
      %p203 = scmp.lt.s32.totalorder %s18, 4
      // Predicated region
      $region25: #{tpu_custom_call.1} parent=5 // pred_check
        %p204 = pneg %p203
      $region26: #{tpu_custom_call.1} parent=5 // pred_check_branch
        %206 = sbr.rel (%p204) target = $region28
      $region27: #{tpu_custom_call.1} parent=5 // pred_region
        // Predicated region
        $region29: #{tpu_custom_call.1} parent=27 // pred_check
          %p207 = pneg %p38
        $region30: #{tpu_custom_call.1} parent=27 // pred_check_branch
          %209 = sbr.rel (%p207) target = $region32
        $region31: #{tpu_custom_call.1} parent=27 // pred_region
          %p210 = scmp.lt.s32.totalorder %s18, 3
          %s211 = scalar_select %p210, %s18, 3
          %s212 = smul.addr %s211, 4
          %s213 = smul.addr %s212, 8
          %s214 = scalar_lea.vmem %s0, %s213
        $region32: #{tpu_custom_call.1} parent=27 // pred_fallthru
          _
        // Predicated region
        $region33: #{tpu_custom_call.1} parent=27 // pred_check
          %p215 = pneg %p64
        $region34: #{tpu_custom_call.1} parent=27 // pred_check_branch
          %217 = sbr.rel (%p215) target = $region36
        $region35: #{tpu_custom_call.1} parent=27 // pred_region
          %s218 = sand.u32 %s54, 1
          %s219 = scalar_lea.sflag [#allocation3], %s218
          %s220 = sand.u32 %s54, 1
          %s221 = smul.addr %s220, 32
          %s222 = scalar_lea.vmem [#allocation2], %s221
          %s224 = ssub.s32 512, 512
          %225 = vsyncadd %s219, %s224
          %s226 = smul.addr %s18, 4
          %s227 = smul.addr %s226, 128
          %s228 = scalar_lea.hbm %s1, %s227
          %s229 = sshll.u32 %s222, 4
          %s230 = int_to_ptr.vmem [resolvable:$true] %s229
          %235 = dma.hbm_to_vmem [thread:$0]  %s228, 512, %s230, %s219, 128, 128, 8
        $region36: #{tpu_custom_call.1} parent=27 // pred_fallthru
          _
      $region28: #{tpu_custom_call.1} parent=5 // pred_fallthru
        _
      %p236 = scmp.le.s32.totalorder 1, %s18
      %p237 = scmp.lt.s32.totalorder %s18, 5
      %p238 = pnand %p236, %p237
      %p239 = pneg %p238
      // Predicated region
      $region37: #{tpu_custom_call.1} parent=5 // pred_check
        _
      $region38: #{tpu_custom_call.1} parent=5 // pred_check_branch
        %241 = sbr.rel (%p238) target = $region40
      $region39: #{tpu_custom_call.1} parent=5 // pred_region
        %s242 = ssub.s32 %s18, 1
        %s243 = sand.u32 %s57, 1
        %s244 = scalar_lea.sflag [#allocation3], %s243
        %s245 = sand.u32 %s57, 1
        %s246 = smul.addr %s245, 32
        %s247 = scalar_lea.vmem [#allocation2], %s246
        // Predicated region
        $region41: #{tpu_custom_call.1} parent=39 // pred_check
          %p248 = pneg %p70
        $region42: #{tpu_custom_call.1} parent=39 // pred_check_branch
          %250 = sbr.rel (%p248) target = $region44
        $region43: #{tpu_custom_call.1} parent=39 // pred_region
          %251 = dma.done %s244, 512
        $region44: #{tpu_custom_call.1} parent=39 // pred_fallthru
          _
        // Predicated region
        $region45: #{tpu_custom_call.1} parent=39 // pred_check
          %p252 = pneg %p91
        $region46: #{tpu_custom_call.1} parent=39 // pred_check_branch
          %254 = sbr.rel (%p252) target = $region48
        $region47: #{tpu_custom_call.1} parent=39 // pred_region
          %255 = dma.done [#allocation6], 256
        $region48: #{tpu_custom_call.1} parent=39 // pred_fallthru
          _
        // Predicated region
        $region49: #{tpu_custom_call.1} parent=39 // pred_check
          %p256 = pneg %p112
        $region50: #{tpu_custom_call.1} parent=39 // pred_check_branch
          %258 = sbr.rel (%p256) target = $region52
        $region51: #{tpu_custom_call.1} parent=39 // pred_region
          %259 = dma.done [#allocation6], 16384
        $region52: #{tpu_custom_call.1} parent=39 // pred_fallthru
          _
        %p260 = scmp.lt.s32.totalorder %s23, 3
        %s261 = scalar_select %p260, %s23, 3
        %s262 = smul.addr %s261, 4
        %s263 = smul.addr %s262, 8
        %s264 = scalar_lea.vmem %s0, %s263
        %p265 = pneg %p44
        %p266 = pneg %p41
        %s267 = sand.u32 %s57, 1
        %s268 = scalar_lea.sflag [#allocation3], %s267
        %s269 = sand.u32 %s57, 1
        %s270 = smul.addr %s269, 32
        %s271 = scalar_lea.vmem [#allocation2], %s270
        %p272 = pneg %p70
        %p273 = pneg %p67
        %p274 = pneg %p91
        %p275 = pneg %p88
        %p276 = pneg %p112
        %p277 = pneg %p109
        %p278 = pneg %p133
        %p279 = pneg %p130
        %p280 = pneg %p159
        %p281 = pneg %p156
        %s282 = sand.u32 %s146, 1
        %s283 = scalar_lea.sflag [#allocation4], %s282
        %s284 = sand.u32 %s146, 1
        %s285 = scalar_lea.vmem [#allocation8], %s284
        %p286 = scmp.lt.s32.totalorder %s23, 3
        %s287 = scalar_select %p286, %s23, 3
        %s288 = smul.addr %s287, 4
        %s289 = smul.addr %s288, 8
        %s290 = scalar_lea.vmem %s0, %s289
        %v292 = vld [vmem:[%s290] sm:$0xff]
        %v293 = vld [vmem:[%s290 + $0x8] sm:$0xff]
        %v294 = vld [vmem:[%s290 + $0x10] sm:$0xff]
        %v295 = vld [vmem:[%s290 + $0x18] sm:$0xff]
        %v296 = vld [vmem:[%s247] sm:$0xff]
        %v297 = vld [vmem:[%s247 + $0x8] sm:$0xff]
        %v298 = vld [vmem:[%s247 + $0x10] sm:$0xff]
        %v299 = vld [vmem:[%s247 + $0x18] sm:$0xff]
        %v300 = vld [vmem:[#allocation5] sm:$0xff]
        %v301 = vld [vmem:[#allocation5 + $0x8] sm:$0xff]
        %v302 = vlaneseq
        %v303 = vshrl.u32 %v302, 7
        %v304 = vsub.s32 0, %v303
        %v305 = vrot.slane %v301, %v304
        %v306 = vmul.f32 %v296, %v305
        %v307 = vmul.f32 %v297, %v305
        %v308 = vlaneseq
        %v309 = vshrl.u32 %v308, 7
        %v310 = vsub.s32 1, %v309
        %v311 = vrot.slane %v301, %v310
        %v312 = vmul.f32 %v298, %v311
        %v313 = vmul.f32 %v299, %v311
        %v314 = vadd.f32 %v306, %v312
        %v315 = vadd.f32 %v307, %v313
        %v316 = vlaneseq
        %v317 = vshrl.u32 %v316, 7
        %v318 = vsub.s32 2, %v317
        %v319 = vrot.slane %v301, %v318
        %v320 = vmul.f32 %v296, %v319
        %v321 = vmul.f32 %v297, %v319
        %v322 = vlaneseq
        %v323 = vshrl.u32 %v322, 7
        %v324 = vsub.s32 3, %v323
        %v325 = vrot.slane %v301, %v324
        %v326 = vmul.f32 %v298, %v325
        %v327 = vmul.f32 %v299, %v325
        %v328 = vadd.f32 %v320, %v326
        %v329 = vadd.f32 %v321, %v327
        %v332 = vcombine.high %v292, %v292
        %v334 = vunpack.c.l.s4 1966171168
        %v335 = vunpack.c.0.s8 %v334
        %v336 = vlaneseq
        %v337 = vshrl.u32 %v336, 7
        %v338 = vsub.s32 %v335, %v337
        %v339 = vrot.slane %v292, %v338
        %v341 = vunpack.c.l.s4 1966171168
        %v342 = vunpack.c.0.s8 %v341
        %v343 = vlaneseq
        %v344 = vshrl.u32 %v343, 7
        %v345 = vsub.s32 %v342, %v344
        %v346 = vrot.slane %v332, %v345
        %v347 = vcombine.high %v339, %v339
        %v348 = vcombine.high %v346, %v346
        %v350 = vunpack.c.l.s4 1966171168
        %v351 = vunpack.c.0.s8 %v350
        %v352 = vlaneseq
        %v353 = vshrl.u32 %v352, 7
        %v354 = vsub.s32 %v351, %v353
        %v355 = vrot.slane %v339, %v354
        %v357 = vunpack.c.l.s4 1966171168
        %v358 = vunpack.c.0.s8 %v357
        %v359 = vlaneseq
        %v360 = vshrl.u32 %v359, 7
        %v361 = vsub.s32 %v358, %v360
        %v362 = vrot.slane %v346, %v361
        %v364 = vunpack.c.l.s4 1966171168
        %v365 = vunpack.c.0.s8 %v364
        %v366 = vlaneseq
        %v367 = vshrl.u32 %v366, 7
        %v368 = vsub.s32 %v365, %v367
        %v369 = vrot.slane %v347, %v368
        %v371 = vunpack.c.l.s4 1966171168
        %v372 = vunpack.c.0.s8 %v371
        %v373 = vlaneseq
        %v374 = vshrl.u32 %v373, 7
        %v375 = vsub.s32 %v372, %v374
        %v376 = vrot.slane %v348, %v375
        %v377 = vcombine.high %v355, %v355
        %v378 = vcombine.high %v362, %v362
        %v379 = vcombine.high %v369, %v369
        %v380 = vcombine.high %v376, %v376
        %v381 = vcombine.high %v293, %v293
        %v383 = vunpack.c.l.s4 1966171168
        %v384 = vunpack.c.0.s8 %v383
        %v385 = vlaneseq
        %v386 = vshrl.u32 %v385, 7
        %v387 = vsub.s32 %v384, %v386
        %v388 = vrot.slane %v293, %v387
        %v390 = vunpack.c.l.s4 1966171168
        %v391 = vunpack.c.0.s8 %v390
        %v392 = vlaneseq
        %v393 = vshrl.u32 %v392, 7
        %v394 = vsub.s32 %v391, %v393
        %v395 = vrot.slane %v381, %v394
        %v396 = vcombine.high %v388, %v388
        %v397 = vcombine.high %v395, %v395
        %v399 = vunpack.c.l.s4 1966171168
        %v400 = vunpack.c.0.s8 %v399
        %v401 = vlaneseq
        %v402 = vshrl.u32 %v401, 7
        %v403 = vsub.s32 %v400, %v402
        %v404 = vrot.slane %v388, %v403
        %v406 = vunpack.c.l.s4 1966171168
        %v407 = vunpack.c.0.s8 %v406
        %v408 = vlaneseq
        %v409 = vshrl.u32 %v408, 7
        %v410 = vsub.s32 %v407, %v409
        %v411 = vrot.slane %v395, %v410
        %v413 = vunpack.c.l.s4 1966171168
        %v414 = vunpack.c.0.s8 %v413
        %v415 = vlaneseq
        %v416 = vshrl.u32 %v415, 7
        %v417 = vsub.s32 %v414, %v416
        %v418 = vrot.slane %v396, %v417
        %v420 = vunpack.c.l.s4 1966171168
        %v421 = vunpack.c.0.s8 %v420
        %v422 = vlaneseq
        %v423 = vshrl.u32 %v422, 7
        %v424 = vsub.s32 %v421, %v423
        %v425 = vrot.slane %v397, %v424
        %v426 = vcombine.high %v404, %v404
        %v427 = vcombine.high %v411, %v411
        %v428 = vcombine.high %v418, %v418
        %v429 = vcombine.high %v425, %v425
        %v430 = vlaneseq
        %v431 = vshrl.u32 %v430, 7
        %v432 = vsub.s32 0, %v431
        %v433 = vrot.slane %v355, %v432
        %v434 = vlaneseq
        %v435 = vshrl.u32 %v434, 7
        %v436 = vsub.s32 0, %v435
        %v437 = vrot.slane %v369, %v436
        %v438 = vlaneseq
        %v439 = vshrl.u32 %v438, 7
        %v440 = vsub.s32 0, %v439
        %v441 = vrot.slane %v377, %v440
        %v442 = vlaneseq
        %v443 = vshrl.u32 %v442, 7
        %v444 = vsub.s32 0, %v443
        %v445 = vrot.slane %v379, %v444
        %v446 = vlaneseq
        %v447 = vshrl.u32 %v446, 7
        %v448 = vsub.s32 0, %v447
        %v449 = vrot.slane %v362, %v448
        %v450 = vlaneseq
        %v451 = vshrl.u32 %v450, 7
        %v452 = vsub.s32 0, %v451
        %v453 = vrot.slane %v376, %v452
        %v454 = vlaneseq
        %v455 = vshrl.u32 %v454, 7
        %v456 = vsub.s32 0, %v455
        %v457 = vrot.slane %v378, %v456
        %v458 = vlaneseq
        %v459 = vshrl.u32 %v458, 7
        %v460 = vsub.s32 0, %v459
        %v461 = vrot.slane %v380, %v460
        %v462 = vlaneseq
        %v463 = vshrl.u32 %v462, 7
        %v464 = vsub.s32 0, %v463
        %v465 = vrot.slane %v404, %v464
        %v466 = vlaneseq
        %v467 = vshrl.u32 %v466, 7
        %v468 = vsub.s32 0, %v467
        %v469 = vrot.slane %v418, %v468
        %v470 = vlaneseq
        %v471 = vshrl.u32 %v470, 7
        %v472 = vsub.s32 0, %v471
        %v473 = vrot.slane %v426, %v472
        %v474 = vlaneseq
        %v475 = vshrl.u32 %v474, 7
        %v476 = vsub.s32 0, %v475
        %v477 = vrot.slane %v428, %v476
        %v478 = vlaneseq
        %v479 = vshrl.u32 %v478, 7
        %v480 = vsub.s32 0, %v479
        %v481 = vrot.slane %v411, %v480
        %v482 = vlaneseq
        %v483 = vshrl.u32 %v482, 7
        %v484 = vsub.s32 0, %v483
        %v485 = vrot.slane %v425, %v484
        %v486 = vlaneseq
        %v487 = vshrl.u32 %v486, 7
        %v488 = vsub.s32 0, %v487
        %v489 = vrot.slane %v427, %v488
        %v490 = vlaneseq
        %v491 = vshrl.u32 %v490, 7
        %v492 = vsub.s32 0, %v491
        %v493 = vrot.slane %v429, %v492
        %v510 = vmul.f32 %v433, %v314
        %v511 = vmul.f32 %v433, %v315
        %v512 = vmul.f32 %v437, %v314
        %v513 = vmul.f32 %v437, %v315
        %v514 = vmul.f32 %v441, %v314
        %v515 = vmul.f32 %v441, %v315
        %v516 = vmul.f32 %v445, %v314
        %v517 = vmul.f32 %v445, %v315
        %v518 = vmul.f32 %v449, %v314
        %v519 = vmul.f32 %v449, %v315
        %v520 = vmul.f32 %v453, %v314
        %v521 = vmul.f32 %v453, %v315
        %v522 = vmul.f32 %v457, %v314
        %v523 = vmul.f32 %v457, %v315
        %v524 = vmul.f32 %v461, %v314
        %v525 = vmul.f32 %v461, %v315
        %v526 = vmul.f32 %v465, %v314
        %v527 = vmul.f32 %v465, %v315
        %v528 = vmul.f32 %v469, %v314
        %v529 = vmul.f32 %v469, %v315
        %v530 = vmul.f32 %v473, %v314
        %v531 = vmul.f32 %v473, %v315
        %v532 = vmul.f32 %v477, %v314
        %v533 = vmul.f32 %v477, %v315
        %v534 = vmul.f32 %v481, %v314
        %v535 = vmul.f32 %v481, %v315
        %v536 = vmul.f32 %v485, %v314
        %v537 = vmul.f32 %v485, %v315
        %v538 = vmul.f32 %v489, %v314
        %v539 = vmul.f32 %v489, %v315
        %v540 = vmul.f32 %v493, %v314
        %v541 = vmul.f32 %v493, %v315
        %v544 = vcombine.high %v294, %v294
        %v546 = vunpack.c.l.s4 1966171168
        %v547 = vunpack.c.0.s8 %v546
        %v548 = vlaneseq
        %v549 = vshrl.u32 %v548, 7
        %v550 = vsub.s32 %v547, %v549
        %v551 = vrot.slane %v294, %v550
        %v553 = vunpack.c.l.s4 1966171168
        %v554 = vunpack.c.0.s8 %v553
        %v555 = vlaneseq
        %v556 = vshrl.u32 %v555, 7
        %v557 = vsub.s32 %v554, %v556
        %v558 = vrot.slane %v544, %v557
        %v559 = vcombine.high %v551, %v551
        %v560 = vcombine.high %v558, %v558
        %v562 = vunpack.c.l.s4 1966171168
        %v563 = vunpack.c.0.s8 %v562
        %v564 = vlaneseq
        %v565 = vshrl.u32 %v564, 7
        %v566 = vsub.s32 %v563, %v565
        %v567 = vrot.slane %v551, %v566
        %v569 = vunpack.c.l.s4 1966171168
        %v570 = vunpack.c.0.s8 %v569
        %v571 = vlaneseq
        %v572 = vshrl.u32 %v571, 7
        %v573 = vsub.s32 %v570, %v572
        %v574 = vrot.slane %v558, %v573
        %v576 = vunpack.c.l.s4 1966171168
        %v577 = vunpack.c.0.s8 %v576
        %v578 = vlaneseq
        %v579 = vshrl.u32 %v578, 7
        %v580 = vsub.s32 %v577, %v579
        %v581 = vrot.slane %v559, %v580
        %v583 = vunpack.c.l.s4 1966171168
        %v584 = vunpack.c.0.s8 %v583
        %v585 = vlaneseq
        %v586 = vshrl.u32 %v585, 7
        %v587 = vsub.s32 %v584, %v586
        %v588 = vrot.slane %v560, %v587
        %v589 = vcombine.high %v567, %v567
        %v590 = vcombine.high %v574, %v574
        %v591 = vcombine.high %v581, %v581
        %v592 = vcombine.high %v588, %v588
        %v593 = vcombine.high %v295, %v295
        %v595 = vunpack.c.l.s4 1966171168
        %v596 = vunpack.c.0.s8 %v595
        %v597 = vlaneseq
        %v598 = vshrl.u32 %v597, 7
        %v599 = vsub.s32 %v596, %v598
        %v600 = vrot.slane %v295, %v599
        %v602 = vunpack.c.l.s4 1966171168
        %v603 = vunpack.c.0.s8 %v602
        %v604 = vlaneseq
        %v605 = vshrl.u32 %v604, 7
        %v606 = vsub.s32 %v603, %v605
        %v607 = vrot.slane %v593, %v606
        %v608 = vcombine.high %v600, %v600
        %v609 = vcombine.high %v607, %v607
        %v611 = vunpack.c.l.s4 1966171168
        %v612 = vunpack.c.0.s8 %v611
        %v613 = vlaneseq
        %v614 = vshrl.u32 %v613, 7
        %v615 = vsub.s32 %v612, %v614
        %v616 = vrot.slane %v600, %v615
        %v618 = vunpack.c.l.s4 1966171168
        %v619 = vunpack.c.0.s8 %v618
        %v620 = vlaneseq
        %v621 = vshrl.u32 %v620, 7
        %v622 = vsub.s32 %v619, %v621
        %v623 = vrot.slane %v607, %v622
        %v625 = vunpack.c.l.s4 1966171168
        %v626 = vunpack.c.0.s8 %v625
        %v627 = vlaneseq
        %v628 = vshrl.u32 %v627, 7
        %v629 = vsub.s32 %v626, %v628
        %v630 = vrot.slane %v608, %v629
        %v632 = vunpack.c.l.s4 1966171168
        %v633 = vunpack.c.0.s8 %v632
        %v634 = vlaneseq
        %v635 = vshrl.u32 %v634, 7
        %v636 = vsub.s32 %v633, %v635
        %v637 = vrot.slane %v609, %v636
        %v638 = vcombine.high %v616, %v616
        %v639 = vcombine.high %v623, %v623
        %v640 = vcombine.high %v630, %v630
        %v641 = vcombine.high %v637, %v637
        %v642 = vlaneseq
        %v643 = vshrl.u32 %v642, 7
        %v644 = vsub.s32 0, %v643
        %v645 = vrot.slane %v567, %v644
        %v646 = vlaneseq
        %v647 = vshrl.u32 %v646, 7
        %v648 = vsub.s32 0, %v647
        %v649 = vrot.slane %v581, %v648
        %v650 = vlaneseq
        %v651 = vshrl.u32 %v650, 7
        %v652 = vsub.s32 0, %v651
        %v653 = vrot.slane %v589, %v652
        %v654 = vlaneseq
        %v655 = vshrl.u32 %v654, 7
        %v656 = vsub.s32 0, %v655
        %v657 = vrot.slane %v591, %v656
        %v658 = vlaneseq
        %v659 = vshrl.u32 %v658, 7
        %v660 = vsub.s32 0, %v659
        %v661 = vrot.slane %v574, %v660
        %v662 = vlaneseq
        %v663 = vshrl.u32 %v662, 7
        %v664 = vsub.s32 0, %v663
        %v665 = vrot.slane %v588, %v664
        %v666 = vlaneseq
        %v667 = vshrl.u32 %v666, 7
        %v668 = vsub.s32 0, %v667
        %v669 = vrot.slane %v590, %v668
        %v670 = vlaneseq
        %v671 = vshrl.u32 %v670, 7
        %v672 = vsub.s32 0, %v671
        %v673 = vrot.slane %v592, %v672
        %v674 = vlaneseq
        %v675 = vshrl.u32 %v674, 7
        %v676 = vsub.s32 0, %v675
        %v677 = vrot.slane %v616, %v676
        %v678 = vlaneseq
        %v679 = vshrl.u32 %v678, 7
        %v680 = vsub.s32 0, %v679
        %v681 = vrot.slane %v630, %v680
        %v682 = vlaneseq
        %v683 = vshrl.u32 %v682, 7
        %v684 = vsub.s32 0, %v683
        %v685 = vrot.slane %v638, %v684
        %v686 = vlaneseq
        %v687 = vshrl.u32 %v686, 7
        %v688 = vsub.s32 0, %v687
        %v689 = vrot.slane %v640, %v688
        %v690 = vlaneseq
        %v691 = vshrl.u32 %v690, 7
        %v692 = vsub.s32 0, %v691
        %v693 = vrot.slane %v623, %v692
        %v694 = vlaneseq
        %v695 = vshrl.u32 %v694, 7
        %v696 = vsub.s32 0, %v695
        %v697 = vrot.slane %v637, %v696
        %v698 = vlaneseq
        %v699 = vshrl.u32 %v698, 7
        %v700 = vsub.s32 0, %v699
        %v701 = vrot.slane %v639, %v700
        %v702 = vlaneseq
        %v703 = vshrl.u32 %v702, 7
        %v704 = vsub.s32 0, %v703
        %v705 = vrot.slane %v641, %v704
        %v722 = vmul.f32 %v645, %v328
        %v723 = vmul.f32 %v645, %v329
        %v724 = vmul.f32 %v649, %v328
        %v725 = vmul.f32 %v649, %v329
        %v726 = vmul.f32 %v653, %v328
        %v727 = vmul.f32 %v653, %v329
        %v728 = vmul.f32 %v657, %v328
        %v729 = vmul.f32 %v657, %v329
        %v730 = vmul.f32 %v661, %v328
        %v731 = vmul.f32 %v661, %v329
        %v732 = vmul.f32 %v665, %v328
        %v733 = vmul.f32 %v665, %v329
        %v734 = vmul.f32 %v669, %v328
        %v735 = vmul.f32 %v669, %v329
        %v736 = vmul.f32 %v673, %v328
        %v737 = vmul.f32 %v673, %v329
        %v738 = vmul.f32 %v677, %v328
        %v739 = vmul.f32 %v677, %v329
        %v740 = vmul.f32 %v681, %v328
        %v741 = vmul.f32 %v681, %v329
        %v742 = vmul.f32 %v685, %v328
        %v743 = vmul.f32 %v685, %v329
        %v744 = vmul.f32 %v689, %v328
        %v745 = vmul.f32 %v689, %v329
        %v746 = vmul.f32 %v693, %v328
        %v747 = vmul.f32 %v693, %v329
        %v748 = vmul.f32 %v697, %v328
        %v749 = vmul.f32 %v697, %v329
        %v750 = vmul.f32 %v701, %v328
        %v751 = vmul.f32 %v701, %v329
        %v752 = vmul.f32 %v705, %v328
        %v753 = vmul.f32 %v705, %v329
        %v754 = vadd.f32 %v510, %v722
        %v755 = vadd.f32 %v511, %v723
        %v756 = vadd.f32 %v512, %v724
        %v757 = vadd.f32 %v513, %v725
        %v758 = vadd.f32 %v514, %v726
        %v759 = vadd.f32 %v515, %v727
        %v760 = vadd.f32 %v516, %v728
        %v761 = vadd.f32 %v517, %v729
        %v762 = vadd.f32 %v518, %v730
        %v763 = vadd.f32 %v519, %v731
        %v764 = vadd.f32 %v520, %v732
        %v765 = vadd.f32 %v521, %v733
        %v766 = vadd.f32 %v522, %v734
        %v767 = vadd.f32 %v523, %v735
        %v768 = vadd.f32 %v524, %v736
        %v769 = vadd.f32 %v525, %v737
        %v770 = vadd.f32 %v526, %v738
        %v771 = vadd.f32 %v527, %v739
        %v772 = vadd.f32 %v528, %v740
        %v773 = vadd.f32 %v529, %v741
        %v774 = vadd.f32 %v530, %v742
        %v775 = vadd.f32 %v531, %v743
        %v776 = vadd.f32 %v532, %v744
        %v777 = vadd.f32 %v533, %v745
        %v778 = vadd.f32 %v534, %v746
        %v779 = vadd.f32 %v535, %v747
        %v780 = vadd.f32 %v536, %v748
        %v781 = vadd.f32 %v537, %v749
        %v782 = vadd.f32 %v538, %v750
        %v783 = vadd.f32 %v539, %v751
        %v784 = vadd.f32 %v540, %v752
        %v785 = vadd.f32 %v541, %v753
        %v786 = vlaneseq
        %v787 = vshrl.u32 %v786, 7
        %v788 = vsub.s32 0, %v787
        %v789 = vrot.slane %v300, %v788
        %v790 = vadd.f32 %v754, %v789
        %v791 = vadd.f32 %v755, %v789
        %v792 = vadd.f32 %v756, %v789
        %v793 = vadd.f32 %v757, %v789
        %v794 = vadd.f32 %v758, %v789
        %v795 = vadd.f32 %v759, %v789
        %v796 = vadd.f32 %v760, %v789
        %v797 = vadd.f32 %v761, %v789
        %v798 = vadd.f32 %v762, %v789
        %v799 = vadd.f32 %v763, %v789
        %v800 = vadd.f32 %v764, %v789
        %v801 = vadd.f32 %v765, %v789
        %v802 = vadd.f32 %v766, %v789
        %v803 = vadd.f32 %v767, %v789
        %v804 = vadd.f32 %v768, %v789
        %v805 = vadd.f32 %v769, %v789
        %v806 = vadd.f32 %v770, %v789
        %v807 = vadd.f32 %v771, %v789
        %v808 = vadd.f32 %v772, %v789
        %v809 = vadd.f32 %v773, %v789
        %v810 = vadd.f32 %v774, %v789
        %v811 = vadd.f32 %v775, %v789
        %v812 = vadd.f32 %v776, %v789
        %v813 = vadd.f32 %v777, %v789
        %v814 = vadd.f32 %v778, %v789
        %v815 = vadd.f32 %v779, %v789
        %v816 = vadd.f32 %v780, %v789
        %v817 = vadd.f32 %v781, %v789
        %v818 = vadd.f32 %v782, %v789
        %v819 = vadd.f32 %v783, %v789
        %v820 = vadd.f32 %v784, %v789
        %v821 = vadd.f32 %v785, %v789
        %v822 = vmax.f32 %v790, 0.0
        %v823 = vmax.f32 %v791, 0.0
        %v824 = vmax.f32 %v792, 0.0
        %v825 = vmax.f32 %v793, 0.0
        %v826 = vmax.f32 %v794, 0.0
        %v827 = vmax.f32 %v795, 0.0
        %v828 = vmax.f32 %v796, 0.0
        %v829 = vmax.f32 %v797, 0.0
        %v830 = vmax.f32 %v798, 0.0
        %v831 = vmax.f32 %v799, 0.0
        %v832 = vmax.f32 %v800, 0.0
        %v833 = vmax.f32 %v801, 0.0
        %v834 = vmax.f32 %v802, 0.0
        %v835 = vmax.f32 %v803, 0.0
        %v836 = vmax.f32 %v804, 0.0
        %v837 = vmax.f32 %v805, 0.0
        %v838 = vmax.f32 %v806, 0.0
        %v839 = vmax.f32 %v807, 0.0
        %v840 = vmax.f32 %v808, 0.0
        %v841 = vmax.f32 %v809, 0.0
        %v842 = vmax.f32 %v810, 0.0
        %v843 = vmax.f32 %v811, 0.0
        %v844 = vmax.f32 %v812, 0.0
        %v845 = vmax.f32 %v813, 0.0
        %v846 = vmax.f32 %v814, 0.0
        %v847 = vmax.f32 %v815, 0.0
        %v848 = vmax.f32 %v816, 0.0
        %v849 = vmax.f32 %v817, 0.0
        %v850 = vmax.f32 %v818, 0.0
        %v851 = vmax.f32 %v819, 0.0
        %v852 = vmax.f32 %v820, 0.0
        %v853 = vmax.f32 %v821, 0.0
        %v886 = vcombine.high %v822, %v822
        %v888 = vunpack.c.l.s4 1983009808
        %v889 = vunpack.c.0.s8 %v888
        %v890 = vlaneseq
        %v891 = vshrl.u32 %v890, 7
        %v892 = vsub.s32 %v889, %v891
        %v893 = vrot.slane %v822, %v892
        %v895 = vunpack.c.l.s4 1983009808
        %v896 = vunpack.c.0.s8 %v895
        %v897 = vlaneseq
        %v898 = vshrl.u32 %v897, 7
        %v899 = vsub.s32 %v896, %v898
        %v900 = vrot.slane %v886, %v899
        %v901 = vcombine.high %v893, %v893
        %v902 = vcombine.high %v900, %v900
        %v903 = vcombine.high %v823, %v823
        %v905 = vunpack.c.l.s4 1983009808
        %v906 = vunpack.c.0.s8 %v905
        %v907 = vlaneseq
        %v908 = vshrl.u32 %v907, 7
        %v909 = vsub.s32 %v906, %v908
        %v910 = vrot.slane %v823, %v909
        %v912 = vunpack.c.l.s4 1983009808
        %v913 = vunpack.c.0.s8 %v912
        %v914 = vlaneseq
        %v915 = vshrl.u32 %v914, 7
        %v916 = vsub.s32 %v913, %v915
        %v917 = vrot.slane %v903, %v916
        %v918 = vcombine.high %v910, %v910
        %v919 = vcombine.high %v917, %v917
        %v920 = vcombine.high %v824, %v824
        %v922 = vunpack.c.l.s4 1983009808
        %v923 = vunpack.c.0.s8 %v922
        %v924 = vlaneseq
        %v925 = vshrl.u32 %v924, 7
        %v926 = vsub.s32 %v923, %v925
        %v927 = vrot.slane %v824, %v926
        %v929 = vunpack.c.l.s4 1983009808
        %v930 = vunpack.c.0.s8 %v929
        %v931 = vlaneseq
        %v932 = vshrl.u32 %v931, 7
        %v933 = vsub.s32 %v930, %v932
        %v934 = vrot.slane %v920, %v933
        %v935 = vcombine.high %v927, %v927
        %v936 = vcombine.high %v934, %v934
        %v937 = vcombine.high %v825, %v825
        %v939 = vunpack.c.l.s4 1983009808
        %v940 = vunpack.c.0.s8 %v939
        %v941 = vlaneseq
        %v942 = vshrl.u32 %v941, 7
        %v943 = vsub.s32 %v940, %v942
        %v944 = vrot.slane %v825, %v943
        %v946 = vunpack.c.l.s4 1983009808
        %v947 = vunpack.c.0.s8 %v946
        %v948 = vlaneseq
        %v949 = vshrl.u32 %v948, 7
        %v950 = vsub.s32 %v947, %v949
        %v951 = vrot.slane %v937, %v950
        %v952 = vcombine.high %v944, %v944
        %v953 = vcombine.high %v951, %v951
        %v954 = vcombine.high %v826, %v826
        %v956 = vunpack.c.l.s4 1983009808
        %v957 = vunpack.c.0.s8 %v956
        %v958 = vlaneseq
        %v959 = vshrl.u32 %v958, 7
        %v960 = vsub.s32 %v957, %v959
        %v961 = vrot.slane %v826, %v960
        %v963 = vunpack.c.l.s4 1983009808
        %v964 = vunpack.c.0.s8 %v963
        %v965 = vlaneseq
        %v966 = vshrl.u32 %v965, 7
        %v967 = vsub.s32 %v964, %v966
        %v968 = vrot.slane %v954, %v967
        %v969 = vcombine.high %v961, %v961
        %v970 = vcombine.high %v968, %v968
        %v971 = vcombine.high %v827, %v827
        %v973 = vunpack.c.l.s4 1983009808
        %v974 = vunpack.c.0.s8 %v973
        %v975 = vlaneseq
        %v976 = vshrl.u32 %v975, 7
        %v977 = vsub.s32 %v974, %v976
        %v978 = vrot.slane %v827, %v977
        %v980 = vunpack.c.l.s4 1983009808
        %v981 = vunpack.c.0.s8 %v980
        %v982 = vlaneseq
        %v983 = vshrl.u32 %v982, 7
        %v984 = vsub.s32 %v981, %v983
        %v985 = vrot.slane %v971, %v984
        %v986 = vcombine.high %v978, %v978
        %v987 = vcombine.high %v985, %v985
        %v988 = vcombine.high %v828, %v828
        %v990 = vunpack.c.l.s4 1983009808
        %v991 = vunpack.c.0.s8 %v990
        %v992 = vlaneseq
        %v993 = vshrl.u32 %v992, 7
        %v994 = vsub.s32 %v991, %v993
        %v995 = vrot.slane %v828, %v994
        %v997 = vunpack.c.l.s4 1983009808
        %v998 = vunpack.c.0.s8 %v997
        %v999 = vlaneseq
        %v1000 = vshrl.u32 %v999, 7
        %v1001 = vsub.s32 %v998, %v1000
        %v1002 = vrot.slane %v988, %v1001
        %v1003 = vcombine.high %v995, %v995
        %v1004 = vcombine.high %v1002, %v1002
        %v1005 = vcombine.high %v829, %v829
        %v1007 = vunpack.c.l.s4 1983009808
        %v1008 = vunpack.c.0.s8 %v1007
        %v1009 = vlaneseq
        %v1010 = vshrl.u32 %v1009, 7
        %v1011 = vsub.s32 %v1008, %v1010
        %v1012 = vrot.slane %v829, %v1011
        %v1014 = vunpack.c.l.s4 1983009808
        %v1015 = vunpack.c.0.s8 %v1014
        %v1016 = vlaneseq
        %v1017 = vshrl.u32 %v1016, 7
        %v1018 = vsub.s32 %v1015, %v1017
        %v1019 = vrot.slane %v1005, %v1018
        %v1020 = vcombine.high %v1012, %v1012
        %v1021 = vcombine.high %v1019, %v1019
        %v1022 = vcombine.high %v830, %v830
        %v1024 = vunpack.c.l.s4 1983009808
        %v1025 = vunpack.c.0.s8 %v1024
        %v1026 = vlaneseq
        %v1027 = vshrl.u32 %v1026, 7
        %v1028 = vsub.s32 %v1025, %v1027
        %v1029 = vrot.slane %v830, %v1028
        %v1031 = vunpack.c.l.s4 1983009808
        %v1032 = vunpack.c.0.s8 %v1031
        %v1033 = vlaneseq
        %v1034 = vshrl.u32 %v1033, 7
        %v1035 = vsub.s32 %v1032, %v1034
        %v1036 = vrot.slane %v1022, %v1035
        %v1037 = vcombine.high %v1029, %v1029
        %v1038 = vcombine.high %v1036, %v1036
        %v1039 = vcombine.high %v831, %v831
        %v1041 = vunpack.c.l.s4 1983009808
        %v1042 = vunpack.c.0.s8 %v1041
        %v1043 = vlaneseq
        %v1044 = vshrl.u32 %v1043, 7
        %v1045 = vsub.s32 %v1042, %v1044
        %v1046 = vrot.slane %v831, %v1045
        %v1048 = vunpack.c.l.s4 1983009808
        %v1049 = vunpack.c.0.s8 %v1048
        %v1050 = vlaneseq
        %v1051 = vshrl.u32 %v1050, 7
        %v1052 = vsub.s32 %v1049, %v1051
        %v1053 = vrot.slane %v1039, %v1052
        %v1054 = vcombine.high %v1046, %v1046
        %v1055 = vcombine.high %v1053, %v1053
        %v1056 = vcombine.high %v832, %v832
        %v1058 = vunpack.c.l.s4 1983009808
        %v1059 = vunpack.c.0.s8 %v1058
        %v1060 = vlaneseq
        %v1061 = vshrl.u32 %v1060, 7
        %v1062 = vsub.s32 %v1059, %v1061
        %v1063 = vrot.slane %v832, %v1062
        %v1065 = vunpack.c.l.s4 1983009808
        %v1066 = vunpack.c.0.s8 %v1065
        %v1067 = vlaneseq
        %v1068 = vshrl.u32 %v1067, 7
        %v1069 = vsub.s32 %v1066, %v1068
        %v1070 = vrot.slane %v1056, %v1069
        %v1071 = vcombine.high %v1063, %v1063
        %v1072 = vcombine.high %v1070, %v1070
        %v1073 = vcombine.high %v833, %v833
        %v1075 = vunpack.c.l.s4 1983009808
        %v1076 = vunpack.c.0.s8 %v1075
        %v1077 = vlaneseq
        %v1078 = vshrl.u32 %v1077, 7
        %v1079 = vsub.s32 %v1076, %v1078
        %v1080 = vrot.slane %v833, %v1079
        %v1082 = vunpack.c.l.s4 1983009808
        %v1083 = vunpack.c.0.s8 %v1082
        %v1084 = vlaneseq
        %v1085 = vshrl.u32 %v1084, 7
        %v1086 = vsub.s32 %v1083, %v1085
        %v1087 = vrot.slane %v1073, %v1086
        %v1088 = vcombine.high %v1080, %v1080
        %v1089 = vcombine.high %v1087, %v1087
        %v1090 = vcombine.high %v834, %v834
        %v1092 = vunpack.c.l.s4 1983009808
        %v1093 = vunpack.c.0.s8 %v1092
        %v1094 = vlaneseq
        %v1095 = vshrl.u32 %v1094, 7
        %v1096 = vsub.s32 %v1093, %v1095
        %v1097 = vrot.slane %v834, %v1096
        %v1099 = vunpack.c.l.s4 1983009808
        %v1100 = vunpack.c.0.s8 %v1099
        %v1101 = vlaneseq
        %v1102 = vshrl.u32 %v1101, 7
        %v1103 = vsub.s32 %v1100, %v1102
        %v1104 = vrot.slane %v1090, %v1103
        %v1105 = vcombine.high %v1097, %v1097
        %v1106 = vcombine.high %v1104, %v1104
        %v1107 = vcombine.high %v835, %v835
        %v1109 = vunpack.c.l.s4 1983009808
        %v1110 = vunpack.c.0.s8 %v1109
        %v1111 = vlaneseq
        %v1112 = vshrl.u32 %v1111, 7
        %v1113 = vsub.s32 %v1110, %v1112
        %v1114 = vrot.slane %v835, %v1113
        %v1116 = vunpack.c.l.s4 1983009808
        %v1117 = vunpack.c.0.s8 %v1116
        %v1118 = vlaneseq
        %v1119 = vshrl.u32 %v1118, 7
        %v1120 = vsub.s32 %v1117, %v1119
        %v1121 = vrot.slane %v1107, %v1120
        %v1122 = vcombine.high %v1114, %v1114
        %v1123 = vcombine.high %v1121, %v1121
        %v1124 = vcombine.high %v836, %v836
        %v1126 = vunpack.c.l.s4 1983009808
        %v1127 = vunpack.c.0.s8 %v1126
        %v1128 = vlaneseq
        %v1129 = vshrl.u32 %v1128, 7
        %v1130 = vsub.s32 %v1127, %v1129
        %v1131 = vrot.slane %v836, %v1130
        %v1133 = vunpack.c.l.s4 1983009808
        %v1134 = vunpack.c.0.s8 %v1133
        %v1135 = vlaneseq
        %v1136 = vshrl.u32 %v1135, 7
        %v1137 = vsub.s32 %v1134, %v1136
        %v1138 = vrot.slane %v1124, %v1137
        %v1139 = vcombine.high %v1131, %v1131
        %v1140 = vcombine.high %v1138, %v1138
        %v1141 = vcombine.high %v837, %v837
        %v1143 = vunpack.c.l.s4 1983009808
        %v1144 = vunpack.c.0.s8 %v1143
        %v1145 = vlaneseq
        %v1146 = vshrl.u32 %v1145, 7
        %v1147 = vsub.s32 %v1144, %v1146
        %v1148 = vrot.slane %v837, %v1147
        %v1150 = vunpack.c.l.s4 1983009808
        %v1151 = vunpack.c.0.s8 %v1150
        %v1152 = vlaneseq
        %v1153 = vshrl.u32 %v1152, 7
        %v1154 = vsub.s32 %v1151, %v1153
        %v1155 = vrot.slane %v1141, %v1154
        %v1156 = vcombine.high %v1148, %v1148
        %v1157 = vcombine.high %v1155, %v1155
        %v1158 = vcombine.high %v838, %v838
        %v1160 = vunpack.c.l.s4 1983009808
        %v1161 = vunpack.c.0.s8 %v1160
        %v1162 = vlaneseq
        %v1163 = vshrl.u32 %v1162, 7
        %v1164 = vsub.s32 %v1161, %v1163
        %v1165 = vrot.slane %v838, %v1164
        %v1167 = vunpack.c.l.s4 1983009808
        %v1168 = vunpack.c.0.s8 %v1167
        %v1169 = vlaneseq
        %v1170 = vshrl.u32 %v1169, 7
        %v1171 = vsub.s32 %v1168, %v1170
        %v1172 = vrot.slane %v1158, %v1171
        %v1173 = vcombine.high %v1165, %v1165
        %v1174 = vcombine.high %v1172, %v1172
        %v1175 = vcombine.high %v839, %v839
        %v1177 = vunpack.c.l.s4 1983009808
        %v1178 = vunpack.c.0.s8 %v1177
        %v1179 = vlaneseq
        %v1180 = vshrl.u32 %v1179, 7
        %v1181 = vsub.s32 %v1178, %v1180
        %v1182 = vrot.slane %v839, %v1181
        %v1184 = vunpack.c.l.s4 1983009808
        %v1185 = vunpack.c.0.s8 %v1184
        %v1186 = vlaneseq
        %v1187 = vshrl.u32 %v1186, 7
        %v1188 = vsub.s32 %v1185, %v1187
        %v1189 = vrot.slane %v1175, %v1188
        %v1190 = vcombine.high %v1182, %v1182
        %v1191 = vcombine.high %v1189, %v1189
        %v1192 = vcombine.high %v840, %v840
        %v1194 = vunpack.c.l.s4 1983009808
        %v1195 = vunpack.c.0.s8 %v1194
        %v1196 = vlaneseq
        %v1197 = vshrl.u32 %v1196, 7
        %v1198 = vsub.s32 %v1195, %v1197
        %v1199 = vrot.slane %v840, %v1198
        %v1201 = vunpack.c.l.s4 1983009808
        %v1202 = vunpack.c.0.s8 %v1201
        %v1203 = vlaneseq
        %v1204 = vshrl.u32 %v1203, 7
        %v1205 = vsub.s32 %v1202, %v1204
        %v1206 = vrot.slane %v1192, %v1205
        %v1207 = vcombine.high %v1199, %v1199
        %v1208 = vcombine.high %v1206, %v1206
        %v1209 = vcombine.high %v841, %v841
        %v1211 = vunpack.c.l.s4 1983009808
        %v1212 = vunpack.c.0.s8 %v1211
        %v1213 = vlaneseq
        %v1214 = vshrl.u32 %v1213, 7
        %v1215 = vsub.s32 %v1212, %v1214
        %v1216 = vrot.slane %v841, %v1215
        %v1218 = vunpack.c.l.s4 1983009808
        %v1219 = vunpack.c.0.s8 %v1218
        %v1220 = vlaneseq
        %v1221 = vshrl.u32 %v1220, 7
        %v1222 = vsub.s32 %v1219, %v1221
        %v1223 = vrot.slane %v1209, %v1222
        %v1224 = vcombine.high %v1216, %v1216
        %v1225 = vcombine.high %v1223, %v1223
        %v1226 = vcombine.high %v842, %v842
        %v1228 = vunpack.c.l.s4 1983009808
        %v1229 = vunpack.c.0.s8 %v1228
        %v1230 = vlaneseq
        %v1231 = vshrl.u32 %v1230, 7
        %v1232 = vsub.s32 %v1229, %v1231
        %v1233 = vrot.slane %v842, %v1232
        %v1235 = vunpack.c.l.s4 1983009808
        %v1236 = vunpack.c.0.s8 %v1235
        %v1237 = vlaneseq
        %v1238 = vshrl.u32 %v1237, 7
        %v1239 = vsub.s32 %v1236, %v1238
        %v1240 = vrot.slane %v1226, %v1239
        %v1241 = vcombine.high %v1233, %v1233
        %v1242 = vcombine.high %v1240, %v1240
        %v1243 = vcombine.high %v843, %v843
        %v1245 = vunpack.c.l.s4 1983009808
        %v1246 = vunpack.c.0.s8 %v1245
        %v1247 = vlaneseq
        %v1248 = vshrl.u32 %v1247, 7
        %v1249 = vsub.s32 %v1246, %v1248
        %v1250 = vrot.slane %v843, %v1249
        %v1252 = vunpack.c.l.s4 1983009808
        %v1253 = vunpack.c.0.s8 %v1252
        %v1254 = vlaneseq
        %v1255 = vshrl.u32 %v1254, 7
        %v1256 = vsub.s32 %v1253, %v1255
        %v1257 = vrot.slane %v1243, %v1256
        %v1258 = vcombine.high %v1250, %v1250
        %v1259 = vcombine.high %v1257, %v1257
        %v1260 = vcombine.high %v844, %v844
        %v1262 = vunpack.c.l.s4 1983009808
        %v1263 = vunpack.c.0.s8 %v1262
        %v1264 = vlaneseq
        %v1265 = vshrl.u32 %v1264, 7
        %v1266 = vsub.s32 %v1263, %v1265
        %v1267 = vrot.slane %v844, %v1266
        %v1269 = vunpack.c.l.s4 1983009808
        %v1270 = vunpack.c.0.s8 %v1269
        %v1271 = vlaneseq
        %v1272 = vshrl.u32 %v1271, 7
        %v1273 = vsub.s32 %v1270, %v1272
        %v1274 = vrot.slane %v1260, %v1273
        %v1275 = vcombine.high %v1267, %v1267
        %v1276 = vcombine.high %v1274, %v1274
        %v1277 = vcombine.high %v845, %v845
        %v1279 = vunpack.c.l.s4 1983009808
        %v1280 = vunpack.c.0.s8 %v1279
        %v1281 = vlaneseq
        %v1282 = vshrl.u32 %v1281, 7
        %v1283 = vsub.s32 %v1280, %v1282
        %v1284 = vrot.slane %v845, %v1283
        %v1286 = vunpack.c.l.s4 1983009808
        %v1287 = vunpack.c.0.s8 %v1286
        %v1288 = vlaneseq
        %v1289 = vshrl.u32 %v1288, 7
        %v1290 = vsub.s32 %v1287, %v1289
        %v1291 = vrot.slane %v1277, %v1290
        %v1292 = vcombine.high %v1284, %v1284
        %v1293 = vcombine.high %v1291, %v1291
        %v1294 = vcombine.high %v846, %v846
        %v1296 = vunpack.c.l.s4 1983009808
        %v1297 = vunpack.c.0.s8 %v1296
        %v1298 = vlaneseq
        %v1299 = vshrl.u32 %v1298, 7
        %v1300 = vsub.s32 %v1297, %v1299
        %v1301 = vrot.slane %v846, %v1300
        %v1303 = vunpack.c.l.s4 1983009808
        %v1304 = vunpack.c.0.s8 %v1303
        %v1305 = vlaneseq
        %v1306 = vshrl.u32 %v1305, 7
        %v1307 = vsub.s32 %v1304, %v1306
        %v1308 = vrot.slane %v1294, %v1307
        %v1309 = vcombine.high %v1301, %v1301
        %v1310 = vcombine.high %v1308, %v1308
        %v1311 = vcombine.high %v847, %v847
        %v1313 = vunpack.c.l.s4 1983009808
        %v1314 = vunpack.c.0.s8 %v1313
        %v1315 = vlaneseq
        %v1316 = vshrl.u32 %v1315, 7
        %v1317 = vsub.s32 %v1314, %v1316
        %v1318 = vrot.slane %v847, %v1317
        %v1320 = vunpack.c.l.s4 1983009808
        %v1321 = vunpack.c.0.s8 %v1320
        %v1322 = vlaneseq
        %v1323 = vshrl.u32 %v1322, 7
        %v1324 = vsub.s32 %v1321, %v1323
        %v1325 = vrot.slane %v1311, %v1324
        %v1326 = vcombine.high %v1318, %v1318
        %v1327 = vcombine.high %v1325, %v1325
        %v1328 = vcombine.high %v848, %v848
        %v1330 = vunpack.c.l.s4 1983009808
        %v1331 = vunpack.c.0.s8 %v1330
        %v1332 = vlaneseq
        %v1333 = vshrl.u32 %v1332, 7
        %v1334 = vsub.s32 %v1331, %v1333
        %v1335 = vrot.slane %v848, %v1334
        %v1337 = vunpack.c.l.s4 1983009808
        %v1338 = vunpack.c.0.s8 %v1337
        %v1339 = vlaneseq
        %v1340 = vshrl.u32 %v1339, 7
        %v1341 = vsub.s32 %v1338, %v1340
        %v1342 = vrot.slane %v1328, %v1341
        %v1343 = vcombine.high %v1335, %v1335
        %v1344 = vcombine.high %v1342, %v1342
        %v1345 = vcombine.high %v849, %v849
        %v1347 = vunpack.c.l.s4 1983009808
        %v1348 = vunpack.c.0.s8 %v1347
        %v1349 = vlaneseq
        %v1350 = vshrl.u32 %v1349, 7
        %v1351 = vsub.s32 %v1348, %v1350
        %v1352 = vrot.slane %v849, %v1351
        %v1354 = vunpack.c.l.s4 1983009808
        %v1355 = vunpack.c.0.s8 %v1354
        %v1356 = vlaneseq
        %v1357 = vshrl.u32 %v1356, 7
        %v1358 = vsub.s32 %v1355, %v1357
        %v1359 = vrot.slane %v1345, %v1358
        %v1360 = vcombine.high %v1352, %v1352
        %v1361 = vcombine.high %v1359, %v1359
        %v1362 = vcombine.high %v850, %v850
        %v1364 = vunpack.c.l.s4 1983009808
        %v1365 = vunpack.c.0.s8 %v1364
        %v1366 = vlaneseq
        %v1367 = vshrl.u32 %v1366, 7
        %v1368 = vsub.s32 %v1365, %v1367
        %v1369 = vrot.slane %v850, %v1368
        %v1371 = vunpack.c.l.s4 1983009808
        %v1372 = vunpack.c.0.s8 %v1371
        %v1373 = vlaneseq
        %v1374 = vshrl.u32 %v1373, 7
        %v1375 = vsub.s32 %v1372, %v1374
        %v1376 = vrot.slane %v1362, %v1375
        %v1377 = vcombine.high %v1369, %v1369
        %v1378 = vcombine.high %v1376, %v1376
        %v1379 = vcombine.high %v851, %v851
        %v1381 = vunpack.c.l.s4 1983009808
        %v1382 = vunpack.c.0.s8 %v1381
        %v1383 = vlaneseq
        %v1384 = vshrl.u32 %v1383, 7
        %v1385 = vsub.s32 %v1382, %v1384
        %v1386 = vrot.slane %v851, %v1385
        %v1388 = vunpack.c.l.s4 1983009808
        %v1389 = vunpack.c.0.s8 %v1388
        %v1390 = vlaneseq
        %v1391 = vshrl.u32 %v1390, 7
        %v1392 = vsub.s32 %v1389, %v1391
        %v1393 = vrot.slane %v1379, %v1392
        %v1394 = vcombine.high %v1386, %v1386
        %v1395 = vcombine.high %v1393, %v1393
        %v1396 = vcombine.high %v852, %v852
        %v1398 = vunpack.c.l.s4 1983009808
        %v1399 = vunpack.c.0.s8 %v1398
        %v1400 = vlaneseq
        %v1401 = vshrl.u32 %v1400, 7
        %v1402 = vsub.s32 %v1399, %v1401
        %v1403 = vrot.slane %v852, %v1402
        %v1405 = vunpack.c.l.s4 1983009808
        %v1406 = vunpack.c.0.s8 %v1405
        %v1407 = vlaneseq
        %v1408 = vshrl.u32 %v1407, 7
        %v1409 = vsub.s32 %v1406, %v1408
        %v1410 = vrot.slane %v1396, %v1409
        %v1411 = vcombine.high %v1403, %v1403
        %v1412 = vcombine.high %v1410, %v1410
        %v1413 = vcombine.high %v853, %v853
        %v1415 = vunpack.c.l.s4 1983009808
        %v1416 = vunpack.c.0.s8 %v1415
        %v1417 = vlaneseq
        %v1418 = vshrl.u32 %v1417, 7
        %v1419 = vsub.s32 %v1416, %v1418
        %v1420 = vrot.slane %v853, %v1419
        %v1422 = vunpack.c.l.s4 1983009808
        %v1423 = vunpack.c.0.s8 %v1422
        %v1424 = vlaneseq
        %v1425 = vshrl.u32 %v1424, 7
        %v1426 = vsub.s32 %v1423, %v1425
        %v1427 = vrot.slane %v1413, %v1426
        %v1428 = vcombine.high %v1420, %v1420
        %v1429 = vcombine.high %v1427, %v1427
        %v1430 = vlaneseq
        %v1431 = vshrl.u32 %v1430, 7
        %v1432 = vsub.s32 0, %v1431
        %v1433 = vrot.slane %v893, %v1432
        %v1434 = vlaneseq
        %v1435 = vshrl.u32 %v1434, 7
        %v1436 = vsub.s32 0, %v1435
        %v1437 = vrot.slane %v901, %v1436
        %v1438 = vlaneseq
        %v1439 = vshrl.u32 %v1438, 7
        %v1440 = vsub.s32 0, %v1439
        %v1441 = vrot.slane %v900, %v1440
        %v1442 = vlaneseq
        %v1443 = vshrl.u32 %v1442, 7
        %v1444 = vsub.s32 0, %v1443
        %v1445 = vrot.slane %v902, %v1444
        %v1446 = vlaneseq
        %v1447 = vshrl.u32 %v1446, 7
        %v1448 = vsub.s32 0, %v1447
        %v1449 = vrot.slane %v910, %v1448
        %v1450 = vlaneseq
        %v1451 = vshrl.u32 %v1450, 7
        %v1452 = vsub.s32 0, %v1451
        %v1453 = vrot.slane %v918, %v1452
        %v1454 = vlaneseq
        %v1455 = vshrl.u32 %v1454, 7
        %v1456 = vsub.s32 0, %v1455
        %v1457 = vrot.slane %v917, %v1456
        %v1458 = vlaneseq
        %v1459 = vshrl.u32 %v1458, 7
        %v1460 = vsub.s32 0, %v1459
        %v1461 = vrot.slane %v919, %v1460
        %v1462 = vlaneseq
        %v1463 = vshrl.u32 %v1462, 7
        %v1464 = vsub.s32 0, %v1463
        %v1465 = vrot.slane %v961, %v1464
        %v1466 = vlaneseq
        %v1467 = vshrl.u32 %v1466, 7
        %v1468 = vsub.s32 0, %v1467
        %v1469 = vrot.slane %v969, %v1468
        %v1470 = vlaneseq
        %v1471 = vshrl.u32 %v1470, 7
        %v1472 = vsub.s32 0, %v1471
        %v1473 = vrot.slane %v968, %v1472
        %v1474 = vlaneseq
        %v1475 = vshrl.u32 %v1474, 7
        %v1476 = vsub.s32 0, %v1475
        %v1477 = vrot.slane %v970, %v1476
        %v1478 = vlaneseq
        %v1479 = vshrl.u32 %v1478, 7
        %v1480 = vsub.s32 0, %v1479
        %v1481 = vrot.slane %v978, %v1480
        %v1482 = vlaneseq
        %v1483 = vshrl.u32 %v1482, 7
        %v1484 = vsub.s32 0, %v1483
        %v1485 = vrot.slane %v986, %v1484
        %v1486 = vlaneseq
        %v1487 = vshrl.u32 %v1486, 7
        %v1488 = vsub.s32 0, %v1487
        %v1489 = vrot.slane %v985, %v1488
        %v1490 = vlaneseq
        %v1491 = vshrl.u32 %v1490, 7
        %v1492 = vsub.s32 0, %v1491
        %v1493 = vrot.slane %v987, %v1492
        %v1494 = vlaneseq
        %v1495 = vshrl.u32 %v1494, 7
        %v1496 = vsub.s32 0, %v1495
        %v1497 = vrot.slane %v1029, %v1496
        %v1498 = vlaneseq
        %v1499 = vshrl.u32 %v1498, 7
        %v1500 = vsub.s32 0, %v1499
        %v1501 = vrot.slane %v1037, %v1500
        %v1502 = vlaneseq
        %v1503 = vshrl.u32 %v1502, 7
        %v1504 = vsub.s32 0, %v1503
        %v1505 = vrot.slane %v1036, %v1504
        %v1506 = vlaneseq
        %v1507 = vshrl.u32 %v1506, 7
        %v1508 = vsub.s32 0, %v1507
        %v1509 = vrot.slane %v1038, %v1508
        %v1510 = vlaneseq
        %v1511 = vshrl.u32 %v1510, 7
        %v1512 = vsub.s32 0, %v1511
        %v1513 = vrot.slane %v1046, %v1512
        %v1514 = vlaneseq
        %v1515 = vshrl.u32 %v1514, 7
        %v1516 = vsub.s32 0, %v1515
        %v1517 = vrot.slane %v1054, %v1516
        %v1518 = vlaneseq
        %v1519 = vshrl.u32 %v1518, 7
        %v1520 = vsub.s32 0, %v1519
        %v1521 = vrot.slane %v1053, %v1520
        %v1522 = vlaneseq
        %v1523 = vshrl.u32 %v1522, 7
        %v1524 = vsub.s32 0, %v1523
        %v1525 = vrot.slane %v1055, %v1524
        %v1526 = vlaneseq
        %v1527 = vshrl.u32 %v1526, 7
        %v1528 = vsub.s32 0, %v1527
        %v1529 = vrot.slane %v1097, %v1528
        %v1530 = vlaneseq
        %v1531 = vshrl.u32 %v1530, 7
        %v1532 = vsub.s32 0, %v1531
        %v1533 = vrot.slane %v1105, %v1532
        %v1534 = vlaneseq
        %v1535 = vshrl.u32 %v1534, 7
        %v1536 = vsub.s32 0, %v1535
        %v1537 = vrot.slane %v1104, %v1536
        %v1538 = vlaneseq
        %v1539 = vshrl.u32 %v1538, 7
        %v1540 = vsub.s32 0, %v1539
        %v1541 = vrot.slane %v1106, %v1540
        %v1542 = vlaneseq
        %v1543 = vshrl.u32 %v1542, 7
        %v1544 = vsub.s32 0, %v1543
        %v1545 = vrot.slane %v1114, %v1544
        %v1546 = vlaneseq
        %v1547 = vshrl.u32 %v1546, 7
        %v1548 = vsub.s32 0, %v1547
        %v1549 = vrot.slane %v1122, %v1548
        %v1550 = vlaneseq
        %v1551 = vshrl.u32 %v1550, 7
        %v1552 = vsub.s32 0, %v1551
        %v1553 = vrot.slane %v1121, %v1552
        %v1554 = vlaneseq
        %v1555 = vshrl.u32 %v1554, 7
        %v1556 = vsub.s32 0, %v1555
        %v1557 = vrot.slane %v1123, %v1556
        %v1558 = vlaneseq
        %v1559 = vshrl.u32 %v1558, 7
        %v1560 = vsub.s32 0, %v1559
        %v1561 = vrot.slane %v1165, %v1560
        %v1562 = vlaneseq
        %v1563 = vshrl.u32 %v1562, 7
        %v1564 = vsub.s32 0, %v1563
        %v1565 = vrot.slane %v1173, %v1564
        %v1566 = vlaneseq
        %v1567 = vshrl.u32 %v1566, 7
        %v1568 = vsub.s32 0, %v1567
        %v1569 = vrot.slane %v1172, %v1568
        %v1570 = vlaneseq
        %v1571 = vshrl.u32 %v1570, 7
        %v1572 = vsub.s32 0, %v1571
        %v1573 = vrot.slane %v1174, %v1572
        %v1574 = vlaneseq
        %v1575 = vshrl.u32 %v1574, 7
        %v1576 = vsub.s32 0, %v1575
        %v1577 = vrot.slane %v1182, %v1576
        %v1578 = vlaneseq
        %v1579 = vshrl.u32 %v1578, 7
        %v1580 = vsub.s32 0, %v1579
        %v1581 = vrot.slane %v1190, %v1580
        %v1582 = vlaneseq
        %v1583 = vshrl.u32 %v1582, 7
        %v1584 = vsub.s32 0, %v1583
        %v1585 = vrot.slane %v1189, %v1584
        %v1586 = vlaneseq
        %v1587 = vshrl.u32 %v1586, 7
        %v1588 = vsub.s32 0, %v1587
        %v1589 = vrot.slane %v1191, %v1588
        %v1590 = vlaneseq
        %v1591 = vshrl.u32 %v1590, 7
        %v1592 = vsub.s32 0, %v1591
        %v1593 = vrot.slane %v1233, %v1592
        %v1594 = vlaneseq
        %v1595 = vshrl.u32 %v1594, 7
        %v1596 = vsub.s32 0, %v1595
        %v1597 = vrot.slane %v1241, %v1596
        %v1598 = vlaneseq
        %v1599 = vshrl.u32 %v1598, 7
        %v1600 = vsub.s32 0, %v1599
        %v1601 = vrot.slane %v1240, %v1600
        %v1602 = vlaneseq
        %v1603 = vshrl.u32 %v1602, 7
        %v1604 = vsub.s32 0, %v1603
        %v1605 = vrot.slane %v1242, %v1604
        %v1606 = vlaneseq
        %v1607 = vshrl.u32 %v1606, 7
        %v1608 = vsub.s32 0, %v1607
        %v1609 = vrot.slane %v1250, %v1608
        %v1610 = vlaneseq
        %v1611 = vshrl.u32 %v1610, 7
        %v1612 = vsub.s32 0, %v1611
        %v1613 = vrot.slane %v1258, %v1612
        %v1614 = vlaneseq
        %v1615 = vshrl.u32 %v1614, 7
        %v1616 = vsub.s32 0, %v1615
        %v1617 = vrot.slane %v1257, %v1616
        %v1618 = vlaneseq
        %v1619 = vshrl.u32 %v1618, 7
        %v1620 = vsub.s32 0, %v1619
        %v1621 = vrot.slane %v1259, %v1620
        %v1622 = vlaneseq
        %v1623 = vshrl.u32 %v1622, 7
        %v1624 = vsub.s32 0, %v1623
        %v1625 = vrot.slane %v1301, %v1624
        %v1626 = vlaneseq
        %v1627 = vshrl.u32 %v1626, 7
        %v1628 = vsub.s32 0, %v1627
        %v1629 = vrot.slane %v1309, %v1628
        %v1630 = vlaneseq
        %v1631 = vshrl.u32 %v1630, 7
        %v1632 = vsub.s32 0, %v1631
        %v1633 = vrot.slane %v1308, %v1632
        %v1634 = vlaneseq
        %v1635 = vshrl.u32 %v1634, 7
        %v1636 = vsub.s32 0, %v1635
        %v1637 = vrot.slane %v1310, %v1636
        %v1638 = vlaneseq
        %v1639 = vshrl.u32 %v1638, 7
        %v1640 = vsub.s32 0, %v1639
        %v1641 = vrot.slane %v1318, %v1640
        %v1642 = vlaneseq
        %v1643 = vshrl.u32 %v1642, 7
        %v1644 = vsub.s32 0, %v1643
        %v1645 = vrot.slane %v1326, %v1644
        %v1646 = vlaneseq
        %v1647 = vshrl.u32 %v1646, 7
        %v1648 = vsub.s32 0, %v1647
        %v1649 = vrot.slane %v1325, %v1648
        %v1650 = vlaneseq
        %v1651 = vshrl.u32 %v1650, 7
        %v1652 = vsub.s32 0, %v1651
        %v1653 = vrot.slane %v1327, %v1652
        %v1654 = vlaneseq
        %v1655 = vshrl.u32 %v1654, 7
        %v1656 = vsub.s32 0, %v1655
        %v1657 = vrot.slane %v1369, %v1656
        %v1658 = vlaneseq
        %v1659 = vshrl.u32 %v1658, 7
        %v1660 = vsub.s32 0, %v1659
        %v1661 = vrot.slane %v1377, %v1660
        %v1662 = vlaneseq
        %v1663 = vshrl.u32 %v1662, 7
        %v1664 = vsub.s32 0, %v1663
        %v1665 = vrot.slane %v1376, %v1664
        %v1666 = vlaneseq
        %v1667 = vshrl.u32 %v1666, 7
        %v1668 = vsub.s32 0, %v1667
        %v1669 = vrot.slane %v1378, %v1668
        %v1670 = vlaneseq
        %v1671 = vshrl.u32 %v1670, 7
        %v1672 = vsub.s32 0, %v1671
        %v1673 = vrot.slane %v1386, %v1672
        %v1674 = vlaneseq
        %v1675 = vshrl.u32 %v1674, 7
        %v1676 = vsub.s32 0, %v1675
        %v1677 = vrot.slane %v1394, %v1676
        %v1678 = vlaneseq
        %v1679 = vshrl.u32 %v1678, 7
        %v1680 = vsub.s32 0, %v1679
        %v1681 = vrot.slane %v1393, %v1680
        %v1682 = vlaneseq
        %v1683 = vshrl.u32 %v1682, 7
        %v1684 = vsub.s32 0, %v1683
        %v1685 = vrot.slane %v1395, %v1684
        %vm1686 = vcmask 1041409
        %v1687 = vsel %vm1686, %v1437, %v1433
        %vm1688 = vcmask 1042434
        %v1689 = vsel %vm1688, %v1441, %v1687
        %vm1690 = vcmask 1043459
        %v1691 = vsel %vm1690, %v1445, %v1689
        %vm1692 = vcmask 1044484
        %v1693 = vsel %vm1692, %v1449, %v1691
        %vm1694 = vcmask 1045509
        %v1695 = vsel %vm1694, %v1453, %v1693
        %vm1696 = vcmask 1046534
        %v1697 = vsel %vm1696, %v1457, %v1695
        %vm1698 = vcmask 1047559
        %v1699 = vsel %vm1698, %v1461, %v1697
        %v1700 = vsel %vm1686, %v1469, %v1465
        %v1701 = vsel %vm1688, %v1473, %v1700
        %v1702 = vsel %vm1690, %v1477, %v1701
        %v1703 = vsel %vm1692, %v1481, %v1702
        %v1704 = vsel %vm1694, %v1485, %v1703
        %v1705 = vsel %vm1696, %v1489, %v1704
        %v1706 = vsel %vm1698, %v1493, %v1705
        %v1707 = vsel %vm1686, %v1501, %v1497
        %v1708 = vsel %vm1688, %v1505, %v1707
        %v1709 = vsel %vm1690, %v1509, %v1708
        %v1710 = vsel %vm1692, %v1513, %v1709
        %v1711 = vsel %vm1694, %v1517, %v1710
        %v1712 = vsel %vm1696, %v1521, %v1711
        %v1713 = vsel %vm1698, %v1525, %v1712
        %v1714 = vsel %vm1686, %v1533, %v1529
        %v1715 = vsel %vm1688, %v1537, %v1714
        %v1716 = vsel %vm1690, %v1541, %v1715
        %v1717 = vsel %vm1692, %v1545, %v1716
        %v1718 = vsel %vm1694, %v1549, %v1717
        %v1719 = vsel %vm1696, %v1553, %v1718
        %v1720 = vsel %vm1698, %v1557, %v1719
        %v1721 = vsel %vm1686, %v1565, %v1561
        %v1722 = vsel %vm1688, %v1569, %v1721
        %v1723 = vsel %vm1690, %v1573, %v1722
        %v1724 = vsel %vm1692, %v1577, %v1723
        %v1725 = vsel %vm1694, %v1581, %v1724
        %v1726 = vsel %vm1696, %v1585, %v1725
        %v1727 = vsel %vm1698, %v1589, %v1726
        %v1728 = vsel %vm1686, %v1597, %v1593
        %v1729 = vsel %vm1688, %v1601, %v1728
        %v1730 = vsel %vm1690, %v1605, %v1729
        %v1731 = vsel %vm1692, %v1609, %v1730
        %v1732 = vsel %vm1694, %v1613, %v1731
        %v1733 = vsel %vm1696, %v1617, %v1732
        %v1734 = vsel %vm1698, %v1621, %v1733
        %v1735 = vsel %vm1686, %v1629, %v1625
        %v1736 = vsel %vm1688, %v1633, %v1735
        %v1737 = vsel %vm1690, %v1637, %v1736
        %v1738 = vsel %vm1692, %v1641, %v1737
        %v1739 = vsel %vm1694, %v1645, %v1738
        %v1740 = vsel %vm1696, %v1649, %v1739
        %v1741 = vsel %vm1698, %v1653, %v1740
        %v1742 = vsel %vm1686, %v1661, %v1657
        %v1743 = vsel %vm1688, %v1665, %v1742
        %v1744 = vsel %vm1690, %v1669, %v1743
        %v1745 = vsel %vm1692, %v1673, %v1744
        %v1746 = vsel %vm1694, %v1677, %v1745
        %v1747 = vsel %vm1696, %v1681, %v1746
        %v1748 = vsel %vm1698, %v1685, %v1747
        %v1757 = vlaneseq
        %v1758 = vshrl.u32 %v1757, 7
        %v1759 = vsub.s32 1, %v1758
        %v1760 = vrot.slane %v893, %v1759
        %v1761 = vlaneseq
        %v1762 = vshrl.u32 %v1761, 7
        %v1763 = vsub.s32 1, %v1762
        %v1764 = vrot.slane %v901, %v1763
        %v1765 = vlaneseq
        %v1766 = vshrl.u32 %v1765, 7
        %v1767 = vsub.s32 1, %v1766
        %v1768 = vrot.slane %v900, %v1767
        %v1769 = vlaneseq
        %v1770 = vshrl.u32 %v1769, 7
        %v1771 = vsub.s32 1, %v1770
        %v1772 = vrot.slane %v902, %v1771
        %v1773 = vlaneseq
        %v1774 = vshrl.u32 %v1773, 7
        %v1775 = vsub.s32 1, %v1774
        %v1776 = vrot.slane %v910, %v1775
        %v1777 = vlaneseq
        %v1778 = vshrl.u32 %v1777, 7
        %v1779 = vsub.s32 1, %v1778
        %v1780 = vrot.slane %v918, %v1779
        %v1781 = vlaneseq
        %v1782 = vshrl.u32 %v1781, 7
        %v1783 = vsub.s32 1, %v1782
        %v1784 = vrot.slane %v917, %v1783
        %v1785 = vlaneseq
        %v1786 = vshrl.u32 %v1785, 7
        %v1787 = vsub.s32 1, %v1786
        %v1788 = vrot.slane %v919, %v1787
        %v1789 = vlaneseq
        %v1790 = vshrl.u32 %v1789, 7
        %v1791 = vsub.s32 1, %v1790
        %v1792 = vrot.slane %v961, %v1791
        %v1793 = vlaneseq
        %v1794 = vshrl.u32 %v1793, 7
        %v1795 = vsub.s32 1, %v1794
        %v1796 = vrot.slane %v969, %v1795
        %v1797 = vlaneseq
        %v1798 = vshrl.u32 %v1797, 7
        %v1799 = vsub.s32 1, %v1798
        %v1800 = vrot.slane %v968, %v1799
        %v1801 = vlaneseq
        %v1802 = vshrl.u32 %v1801, 7
        %v1803 = vsub.s32 1, %v1802
        %v1804 = vrot.slane %v970, %v1803
        %v1805 = vlaneseq
        %v1806 = vshrl.u32 %v1805, 7
        %v1807 = vsub.s32 1, %v1806
        %v1808 = vrot.slane %v978, %v1807
        %v1809 = vlaneseq
        %v1810 = vshrl.u32 %v1809, 7
        %v1811 = vsub.s32 1, %v1810
        %v1812 = vrot.slane %v986, %v1811
        %v1813 = vlaneseq
        %v1814 = vshrl.u32 %v1813, 7
        %v1815 = vsub.s32 1, %v1814
        %v1816 = vrot.slane %v985, %v1815
        %v1817 = vlaneseq
        %v1818 = vshrl.u32 %v1817, 7
        %v1819 = vsub.s32 1, %v1818
        %v1820 = vrot.slane %v987, %v1819
        %v1821 = vlaneseq
        %v1822 = vshrl.u32 %v1821, 7
        %v1823 = vsub.s32 1, %v1822
        %v1824 = vrot.slane %v1029, %v1823
        %v1825 = vlaneseq
        %v1826 = vshrl.u32 %v1825, 7
        %v1827 = vsub.s32 1, %v1826
        %v1828 = vrot.slane %v1037, %v1827
        %v1829 = vlaneseq
        %v1830 = vshrl.u32 %v1829, 7
        %v1831 = vsub.s32 1, %v1830
        %v1832 = vrot.slane %v1036, %v1831
        %v1833 = vlaneseq
        %v1834 = vshrl.u32 %v1833, 7
        %v1835 = vsub.s32 1, %v1834
        %v1836 = vrot.slane %v1038, %v1835
        %v1837 = vlaneseq
        %v1838 = vshrl.u32 %v1837, 7
        %v1839 = vsub.s32 1, %v1838
        %v1840 = vrot.slane %v1046, %v1839
        %v1841 = vlaneseq
        %v1842 = vshrl.u32 %v1841, 7
        %v1843 = vsub.s32 1, %v1842
        %v1844 = vrot.slane %v1054, %v1843
        %v1845 = vlaneseq
        %v1846 = vshrl.u32 %v1845, 7
        %v1847 = vsub.s32 1, %v1846
        %v1848 = vrot.slane %v1053, %v1847
        %v1849 = vlaneseq
        %v1850 = vshrl.u32 %v1849, 7
        %v1851 = vsub.s32 1, %v1850
        %v1852 = vrot.slane %v1055, %v1851
        %v1853 = vlaneseq
        %v1854 = vshrl.u32 %v1853, 7
        %v1855 = vsub.s32 1, %v1854
        %v1856 = vrot.slane %v1097, %v1855
        %v1857 = vlaneseq
        %v1858 = vshrl.u32 %v1857, 7
        %v1859 = vsub.s32 1, %v1858
        %v1860 = vrot.slane %v1105, %v1859
        %v1861 = vlaneseq
        %v1862 = vshrl.u32 %v1861, 7
        %v1863 = vsub.s32 1, %v1862
        %v1864 = vrot.slane %v1104, %v1863
        %v1865 = vlaneseq
        %v1866 = vshrl.u32 %v1865, 7
        %v1867 = vsub.s32 1, %v1866
        %v1868 = vrot.slane %v1106, %v1867
        %v1869 = vlaneseq
        %v1870 = vshrl.u32 %v1869, 7
        %v1871 = vsub.s32 1, %v1870
        %v1872 = vrot.slane %v1114, %v1871
        %v1873 = vlaneseq
        %v1874 = vshrl.u32 %v1873, 7
        %v1875 = vsub.s32 1, %v1874
        %v1876 = vrot.slane %v1122, %v1875
        %v1877 = vlaneseq
        %v1878 = vshrl.u32 %v1877, 7
        %v1879 = vsub.s32 1, %v1878
        %v1880 = vrot.slane %v1121, %v1879
        %v1881 = vlaneseq
        %v1882 = vshrl.u32 %v1881, 7
        %v1883 = vsub.s32 1, %v1882
        %v1884 = vrot.slane %v1123, %v1883
        %v1885 = vlaneseq
        %v1886 = vshrl.u32 %v1885, 7
        %v1887 = vsub.s32 1, %v1886
        %v1888 = vrot.slane %v1165, %v1887
        %v1889 = vlaneseq
        %v1890 = vshrl.u32 %v1889, 7
        %v1891 = vsub.s32 1, %v1890
        %v1892 = vrot.slane %v1173, %v1891
        %v1893 = vlaneseq
        %v1894 = vshrl.u32 %v1893, 7
        %v1895 = vsub.s32 1, %v1894
        %v1896 = vrot.slane %v1172, %v1895
        %v1897 = vlaneseq
        %v1898 = vshrl.u32 %v1897, 7
        %v1899 = vsub.s32 1, %v1898
        %v1900 = vrot.slane %v1174, %v1899
        %v1901 = vlaneseq
        %v1902 = vshrl.u32 %v1901, 7
        %v1903 = vsub.s32 1, %v1902
        %v1904 = vrot.slane %v1182, %v1903
        %v1905 = vlaneseq
        %v1906 = vshrl.u32 %v1905, 7
        %v1907 = vsub.s32 1, %v1906
        %v1908 = vrot.slane %v1190, %v1907
        %v1909 = vlaneseq
        %v1910 = vshrl.u32 %v1909, 7
        %v1911 = vsub.s32 1, %v1910
        %v1912 = vrot.slane %v1189, %v1911
        %v1913 = vlaneseq
        %v1914 = vshrl.u32 %v1913, 7
        %v1915 = vsub.s32 1, %v1914
        %v1916 = vrot.slane %v1191, %v1915
        %v1917 = vlaneseq
        %v1918 = vshrl.u32 %v1917, 7
        %v1919 = vsub.s32 1, %v1918
        %v1920 = vrot.slane %v1233, %v1919
        %v1921 = vlaneseq
        %v1922 = vshrl.u32 %v1921, 7
        %v1923 = vsub.s32 1, %v1922
        %v1924 = vrot.slane %v1241, %v1923
        %v1925 = vlaneseq
        %v1926 = vshrl.u32 %v1925, 7
        %v1927 = vsub.s32 1, %v1926
        %v1928 = vrot.slane %v1240, %v1927
        %v1929 = vlaneseq
        %v1930 = vshrl.u32 %v1929, 7
        %v1931 = vsub.s32 1, %v1930
        %v1932 = vrot.slane %v1242, %v1931
        %v1933 = vlaneseq
        %v1934 = vshrl.u32 %v1933, 7
        %v1935 = vsub.s32 1, %v1934
        %v1936 = vrot.slane %v1250, %v1935
        %v1937 = vlaneseq
        %v1938 = vshrl.u32 %v1937, 7
        %v1939 = vsub.s32 1, %v1938
        %v1940 = vrot.slane %v1258, %v1939
        %v1941 = vlaneseq
        %v1942 = vshrl.u32 %v1941, 7
        %v1943 = vsub.s32 1, %v1942
        %v1944 = vrot.slane %v1257, %v1943
        %v1945 = vlaneseq
        %v1946 = vshrl.u32 %v1945, 7
        %v1947 = vsub.s32 1, %v1946
        %v1948 = vrot.slane %v1259, %v1947
        %v1949 = vlaneseq
        %v1950 = vshrl.u32 %v1949, 7
        %v1951 = vsub.s32 1, %v1950
        %v1952 = vrot.slane %v1301, %v1951
        %v1953 = vlaneseq
        %v1954 = vshrl.u32 %v1953, 7
        %v1955 = vsub.s32 1, %v1954
        %v1956 = vrot.slane %v1309, %v1955
        %v1957 = vlaneseq
        %v1958 = vshrl.u32 %v1957, 7
        %v1959 = vsub.s32 1, %v1958
        %v1960 = vrot.slane %v1308, %v1959
        %v1961 = vlaneseq
        %v1962 = vshrl.u32 %v1961, 7
        %v1963 = vsub.s32 1, %v1962
        %v1964 = vrot.slane %v1310, %v1963
        %v1965 = vlaneseq
        %v1966 = vshrl.u32 %v1965, 7
        %v1967 = vsub.s32 1, %v1966
        %v1968 = vrot.slane %v1318, %v1967
        %v1969 = vlaneseq
        %v1970 = vshrl.u32 %v1969, 7
        %v1971 = vsub.s32 1, %v1970
        %v1972 = vrot.slane %v1326, %v1971
        %v1973 = vlaneseq
        %v1974 = vshrl.u32 %v1973, 7
        %v1975 = vsub.s32 1, %v1974
        %v1976 = vrot.slane %v1325, %v1975
        %v1977 = vlaneseq
        %v1978 = vshrl.u32 %v1977, 7
        %v1979 = vsub.s32 1, %v1978
        %v1980 = vrot.slane %v1327, %v1979
        %v1981 = vlaneseq
        %v1982 = vshrl.u32 %v1981, 7
        %v1983 = vsub.s32 1, %v1982
        %v1984 = vrot.slane %v1369, %v1983
        %v1985 = vlaneseq
        %v1986 = vshrl.u32 %v1985, 7
        %v1987 = vsub.s32 1, %v1986
        %v1988 = vrot.slane %v1377, %v1987
        %v1989 = vlaneseq
        %v1990 = vshrl.u32 %v1989, 7
        %v1991 = vsub.s32 1, %v1990
        %v1992 = vrot.slane %v1376, %v1991
        %v1993 = vlaneseq
        %v1994 = vshrl.u32 %v1993, 7
        %v1995 = vsub.s32 1, %v1994
        %v1996 = vrot.slane %v1378, %v1995
        %v1997 = vlaneseq
        %v1998 = vshrl.u32 %v1997, 7
        %v1999 = vsub.s32 1, %v1998
        %v2000 = vrot.slane %v1386, %v1999
        %v2001 = vlaneseq
        %v2002 = vshrl.u32 %v2001, 7
        %v2003 = vsub.s32 1, %v2002
        %v2004 = vrot.slane %v1394, %v2003
        %v2005 = vlaneseq
        %v2006 = vshrl.u32 %v2005, 7
        %v2007 = vsub.s32 1, %v2006
        %v2008 = vrot.slane %v1393, %v2007
        %v2009 = vlaneseq
        %v2010 = vshrl.u32 %v2009, 7
        %v2011 = vsub.s32 1, %v2010
        %v2012 = vrot.slane %v1395, %v2011
        %v2013 = vsel %vm1686, %v1764, %v1760
        %v2014 = vsel %vm1688, %v1768, %v2013
        %v2015 = vsel %vm1690, %v1772, %v2014
        %v2016 = vsel %vm1692, %v1776, %v2015
        %v2017 = vsel %vm1694, %v1780, %v2016
        %v2018 = vsel %vm1696, %v1784, %v2017
        %v2019 = vsel %vm1698, %v1788, %v2018
        %v2020 = vsel %vm1686, %v1796, %v1792
        %v2021 = vsel %vm1688, %v1800, %v2020
        %v2022 = vsel %vm1690, %v1804, %v2021
        %v2023 = vsel %vm1692, %v1808, %v2022
        %v2024 = vsel %vm1694, %v1812, %v2023
        %v2025 = vsel %vm1696, %v1816, %v2024
        %v2026 = vsel %vm1698, %v1820, %v2025
        %v2027 = vsel %vm1686, %v1828, %v1824
        %v2028 = vsel %vm1688, %v1832, %v2027
        %v2029 = vsel %vm1690, %v1836, %v2028
        %v2030 = vsel %vm1692, %v1840, %v2029
        %v2031 = vsel %vm1694, %v1844, %v2030
        %v2032 = vsel %vm1696, %v1848, %v2031
        %v2033 = vsel %vm1698, %v1852, %v2032
        %v2034 = vsel %vm1686, %v1860, %v1856
        %v2035 = vsel %vm1688, %v1864, %v2034
        %v2036 = vsel %vm1690, %v1868, %v2035
        %v2037 = vsel %vm1692, %v1872, %v2036
        %v2038 = vsel %vm1694, %v1876, %v2037
        %v2039 = vsel %vm1696, %v1880, %v2038
        %v2040 = vsel %vm1698, %v1884, %v2039
        %v2041 = vsel %vm1686, %v1892, %v1888
        %v2042 = vsel %vm1688, %v1896, %v2041
        %v2043 = vsel %vm1690, %v1900, %v2042
        %v2044 = vsel %vm1692, %v1904, %v2043
        %v2045 = vsel %vm1694, %v1908, %v2044
        %v2046 = vsel %vm1696, %v1912, %v2045
        %v2047 = vsel %vm1698, %v1916, %v2046
        %v2048 = vsel %vm1686, %v1924, %v1920
        %v2049 = vsel %vm1688, %v1928, %v2048
        %v2050 = vsel %vm1690, %v1932, %v2049
        %v2051 = vsel %vm1692, %v1936, %v2050
        %v2052 = vsel %vm1694, %v1940, %v2051
        %v2053 = vsel %vm1696, %v1944, %v2052
        %v2054 = vsel %vm1698, %v1948, %v2053
        %v2055 = vsel %vm1686, %v1956, %v1952
        %v2056 = vsel %vm1688, %v1960, %v2055
        %v2057 = vsel %vm1690, %v1964, %v2056
        %v2058 = vsel %vm1692, %v1968, %v2057
        %v2059 = vsel %vm1694, %v1972, %v2058
        %v2060 = vsel %vm1696, %v1976, %v2059
        %v2061 = vsel %vm1698, %v1980, %v2060
        %v2062 = vsel %vm1686, %v1988, %v1984
        %v2063 = vsel %vm1688, %v1992, %v2062
        %v2064 = vsel %vm1690, %v1996, %v2063
        %v2065 = vsel %vm1692, %v2000, %v2064
        %v2066 = vsel %vm1694, %v2004, %v2065
        %v2067 = vsel %vm1696, %v2008, %v2066
        %v2068 = vsel %vm1698, %v2012, %v2067
        %v2077 = vlaneseq
        %v2078 = vshrl.u32 %v2077, 7
        %v2079 = vsub.s32 0, %v2078
        %v2080 = vrot.slane %v927, %v2079
        %v2081 = vlaneseq
        %v2082 = vshrl.u32 %v2081, 7
        %v2083 = vsub.s32 0, %v2082
        %v2084 = vrot.slane %v935, %v2083
        %v2085 = vlaneseq
        %v2086 = vshrl.u32 %v2085, 7
        %v2087 = vsub.s32 0, %v2086
        %v2088 = vrot.slane %v934, %v2087
        %v2089 = vlaneseq
        %v2090 = vshrl.u32 %v2089, 7
        %v2091 = vsub.s32 0, %v2090
        %v2092 = vrot.slane %v936, %v2091
        %v2093 = vlaneseq
        %v2094 = vshrl.u32 %v2093, 7
        %v2095 = vsub.s32 0, %v2094
        %v2096 = vrot.slane %v944, %v2095
        %v2097 = vlaneseq
        %v2098 = vshrl.u32 %v2097, 7
        %v2099 = vsub.s32 0, %v2098
        %v2100 = vrot.slane %v952, %v2099
        %v2101 = vlaneseq
        %v2102 = vshrl.u32 %v2101, 7
        %v2103 = vsub.s32 0, %v2102
        %v2104 = vrot.slane %v951, %v2103
        %v2105 = vlaneseq
        %v2106 = vshrl.u32 %v2105, 7
        %v2107 = vsub.s32 0, %v2106
        %v2108 = vrot.slane %v953, %v2107
        %v2109 = vlaneseq
        %v2110 = vshrl.u32 %v2109, 7
        %v2111 = vsub.s32 0, %v2110
        %v2112 = vrot.slane %v995, %v2111
        %v2113 = vlaneseq
        %v2114 = vshrl.u32 %v2113, 7
        %v2115 = vsub.s32 0, %v2114
        %v2116 = vrot.slane %v1003, %v2115
        %v2117 = vlaneseq
        %v2118 = vshrl.u32 %v2117, 7
        %v2119 = vsub.s32 0, %v2118
        %v2120 = vrot.slane %v1002, %v2119
        %v2121 = vlaneseq
        %v2122 = vshrl.u32 %v2121, 7
        %v2123 = vsub.s32 0, %v2122
        %v2124 = vrot.slane %v1004, %v2123
        %v2125 = vlaneseq
        %v2126 = vshrl.u32 %v2125, 7
        %v2127 = vsub.s32 0, %v2126
        %v2128 = vrot.slane %v1012, %v2127
        %v2129 = vlaneseq
        %v2130 = vshrl.u32 %v2129, 7
        %v2131 = vsub.s32 0, %v2130
        %v2132 = vrot.slane %v1020, %v2131
        %v2133 = vlaneseq
        %v2134 = vshrl.u32 %v2133, 7
        %v2135 = vsub.s32 0, %v2134
        %v2136 = vrot.slane %v1019, %v2135
        %v2137 = vlaneseq
        %v2138 = vshrl.u32 %v2137, 7
        %v2139 = vsub.s32 0, %v2138
        %v2140 = vrot.slane %v1021, %v2139
        %v2141 = vlaneseq
        %v2142 = vshrl.u32 %v2141, 7
        %v2143 = vsub.s32 0, %v2142
        %v2144 = vrot.slane %v1063, %v2143
        %v2145 = vlaneseq
        %v2146 = vshrl.u32 %v2145, 7
        %v2147 = vsub.s32 0, %v2146
        %v2148 = vrot.slane %v1071, %v2147
        %v2149 = vlaneseq
        %v2150 = vshrl.u32 %v2149, 7
        %v2151 = vsub.s32 0, %v2150
        %v2152 = vrot.slane %v1070, %v2151
        %v2153 = vlaneseq
        %v2154 = vshrl.u32 %v2153, 7
        %v2155 = vsub.s32 0, %v2154
        %v2156 = vrot.slane %v1072, %v2155
        %v2157 = vlaneseq
        %v2158 = vshrl.u32 %v2157, 7
        %v2159 = vsub.s32 0, %v2158
        %v2160 = vrot.slane %v1080, %v2159
        %v2161 = vlaneseq
        %v2162 = vshrl.u32 %v2161, 7
        %v2163 = vsub.s32 0, %v2162
        %v2164 = vrot.slane %v1088, %v2163
        %v2165 = vlaneseq
        %v2166 = vshrl.u32 %v2165, 7
        %v2167 = vsub.s32 0, %v2166
        %v2168 = vrot.slane %v1087, %v2167
        %v2169 = vlaneseq
        %v2170 = vshrl.u32 %v2169, 7
        %v2171 = vsub.s32 0, %v2170
        %v2172 = vrot.slane %v1089, %v2171
        %v2173 = vlaneseq
        %v2174 = vshrl.u32 %v2173, 7
        %v2175 = vsub.s32 0, %v2174
        %v2176 = vrot.slane %v1131, %v2175
        %v2177 = vlaneseq
        %v2178 = vshrl.u32 %v2177, 7
        %v2179 = vsub.s32 0, %v2178
        %v2180 = vrot.slane %v1139, %v2179
        %v2181 = vlaneseq
        %v2182 = vshrl.u32 %v2181, 7
        %v2183 = vsub.s32 0, %v2182
        %v2184 = vrot.slane %v1138, %v2183
        %v2185 = vlaneseq
        %v2186 = vshrl.u32 %v2185, 7
        %v2187 = vsub.s32 0, %v2186
        %v2188 = vrot.slane %v1140, %v2187
        %v2189 = vlaneseq
        %v2190 = vshrl.u32 %v2189, 7
        %v2191 = vsub.s32 0, %v2190
        %v2192 = vrot.slane %v1148, %v2191
        %v2193 = vlaneseq
        %v2194 = vshrl.u32 %v2193, 7
        %v2195 = vsub.s32 0, %v2194
        %v2196 = vrot.slane %v1156, %v2195
        %v2197 = vlaneseq
        %v2198 = vshrl.u32 %v2197, 7
        %v2199 = vsub.s32 0, %v2198
        %v2200 = vrot.slane %v1155, %v2199
        %v2201 = vlaneseq
        %v2202 = vshrl.u32 %v2201, 7
        %v2203 = vsub.s32 0, %v2202
        %v2204 = vrot.slane %v1157, %v2203
        %v2205 = vlaneseq
        %v2206 = vshrl.u32 %v2205, 7
        %v2207 = vsub.s32 0, %v2206
        %v2208 = vrot.slane %v1199, %v2207
        %v2209 = vlaneseq
        %v2210 = vshrl.u32 %v2209, 7
        %v2211 = vsub.s32 0, %v2210
        %v2212 = vrot.slane %v1207, %v2211
        %v2213 = vlaneseq
        %v2214 = vshrl.u32 %v2213, 7
        %v2215 = vsub.s32 0, %v2214
        %v2216 = vrot.slane %v1206, %v2215
        %v2217 = vlaneseq
        %v2218 = vshrl.u32 %v2217, 7
        %v2219 = vsub.s32 0, %v2218
        %v2220 = vrot.slane %v1208, %v2219
        %v2221 = vlaneseq
        %v2222 = vshrl.u32 %v2221, 7
        %v2223 = vsub.s32 0, %v2222
        %v2224 = vrot.slane %v1216, %v2223
        %v2225 = vlaneseq
        %v2226 = vshrl.u32 %v2225, 7
        %v2227 = vsub.s32 0, %v2226
        %v2228 = vrot.slane %v1224, %v2227
        %v2229 = vlaneseq
        %v2230 = vshrl.u32 %v2229, 7
        %v2231 = vsub.s32 0, %v2230
        %v2232 = vrot.slane %v1223, %v2231
        %v2233 = vlaneseq
        %v2234 = vshrl.u32 %v2233, 7
        %v2235 = vsub.s32 0, %v2234
        %v2236 = vrot.slane %v1225, %v2235
        %v2237 = vlaneseq
        %v2238 = vshrl.u32 %v2237, 7
        %v2239 = vsub.s32 0, %v2238
        %v2240 = vrot.slane %v1267, %v2239
        %v2241 = vlaneseq
        %v2242 = vshrl.u32 %v2241, 7
        %v2243 = vsub.s32 0, %v2242
        %v2244 = vrot.slane %v1275, %v2243
        %v2245 = vlaneseq
        %v2246 = vshrl.u32 %v2245, 7
        %v2247 = vsub.s32 0, %v2246
        %v2248 = vrot.slane %v1274, %v2247
        %v2249 = vlaneseq
        %v2250 = vshrl.u32 %v2249, 7
        %v2251 = vsub.s32 0, %v2250
        %v2252 = vrot.slane %v1276, %v2251
        %v2253 = vlaneseq
        %v2254 = vshrl.u32 %v2253, 7
        %v2255 = vsub.s32 0, %v2254
        %v2256 = vrot.slane %v1284, %v2255
        %v2257 = vlaneseq
        %v2258 = vshrl.u32 %v2257, 7
        %v2259 = vsub.s32 0, %v2258
        %v2260 = vrot.slane %v1292, %v2259
        %v2261 = vlaneseq
        %v2262 = vshrl.u32 %v2261, 7
        %v2263 = vsub.s32 0, %v2262
        %v2264 = vrot.slane %v1291, %v2263
        %v2265 = vlaneseq
        %v2266 = vshrl.u32 %v2265, 7
        %v2267 = vsub.s32 0, %v2266
        %v2268 = vrot.slane %v1293, %v2267
        %v2269 = vlaneseq
        %v2270 = vshrl.u32 %v2269, 7
        %v2271 = vsub.s32 0, %v2270
        %v2272 = vrot.slane %v1335, %v2271
        %v2273 = vlaneseq
        %v2274 = vshrl.u32 %v2273, 7
        %v2275 = vsub.s32 0, %v2274
        %v2276 = vrot.slane %v1343, %v2275
        %v2277 = vlaneseq
        %v2278 = vshrl.u32 %v2277, 7
        %v2279 = vsub.s32 0, %v2278
        %v2280 = vrot.slane %v1342, %v2279
        %v2281 = vlaneseq
        %v2282 = vshrl.u32 %v2281, 7
        %v2283 = vsub.s32 0, %v2282
        %v2284 = vrot.slane %v1344, %v2283
        %v2285 = vlaneseq
        %v2286 = vshrl.u32 %v2285, 7
        %v2287 = vsub.s32 0, %v2286
        %v2288 = vrot.slane %v1352, %v2287
        %v2289 = vlaneseq
        %v2290 = vshrl.u32 %v2289, 7
        %v2291 = vsub.s32 0, %v2290
        %v2292 = vrot.slane %v1360, %v2291
        %v2293 = vlaneseq
        %v2294 = vshrl.u32 %v2293, 7
        %v2295 = vsub.s32 0, %v2294
        %v2296 = vrot.slane %v1359, %v2295
        %v2297 = vlaneseq
        %v2298 = vshrl.u32 %v2297, 7
        %v2299 = vsub.s32 0, %v2298
        %v2300 = vrot.slane %v1361, %v2299
        %v2301 = vlaneseq
        %v2302 = vshrl.u32 %v2301, 7
        %v2303 = vsub.s32 0, %v2302
        %v2304 = vrot.slane %v1403, %v2303
        %v2305 = vlaneseq
        %v2306 = vshrl.u32 %v2305, 7
        %v2307 = vsub.s32 0, %v2306
        %v2308 = vrot.slane %v1411, %v2307
        %v2309 = vlaneseq
        %v2310 = vshrl.u32 %v2309, 7
        %v2311 = vsub.s32 0, %v2310
        %v2312 = vrot.slane %v1410, %v2311
        %v2313 = vlaneseq
        %v2314 = vshrl.u32 %v2313, 7
        %v2315 = vsub.s32 0, %v2314
        %v2316 = vrot.slane %v1412, %v2315
        %v2317 = vlaneseq
        %v2318 = vshrl.u32 %v2317, 7
        %v2319 = vsub.s32 0, %v2318
        %v2320 = vrot.slane %v1420, %v2319
        %v2321 = vlaneseq
        %v2322 = vshrl.u32 %v2321, 7
        %v2323 = vsub.s32 0, %v2322
        %v2324 = vrot.slane %v1428, %v2323
        %v2325 = vlaneseq
        %v2326 = vshrl.u32 %v2325, 7
        %v2327 = vsub.s32 0, %v2326
        %v2328 = vrot.slane %v1427, %v2327
        %v2329 = vlaneseq
        %v2330 = vshrl.u32 %v2329, 7
        %v2331 = vsub.s32 0, %v2330
        %v2332 = vrot.slane %v1429, %v2331
        %v2333 = vsel %vm1686, %v2084, %v2080
        %v2334 = vsel %vm1688, %v2088, %v2333
        %v2335 = vsel %vm1690, %v2092, %v2334
        %v2336 = vsel %vm1692, %v2096, %v2335
        %v2337 = vsel %vm1694, %v2100, %v2336
        %v2338 = vsel %vm1696, %v2104, %v2337
        %v2339 = vsel %vm1698, %v2108, %v2338
        %v2340 = vsel %vm1686, %v2116, %v2112
        %v2341 = vsel %vm1688, %v2120, %v2340
        %v2342 = vsel %vm1690, %v2124, %v2341
        %v2343 = vsel %vm1692, %v2128, %v2342
        %v2344 = vsel %vm1694, %v2132, %v2343
        %v2345 = vsel %vm1696, %v2136, %v2344
        %v2346 = vsel %vm1698, %v2140, %v2345
        %v2347 = vsel %vm1686, %v2148, %v2144
        %v2348 = vsel %vm1688, %v2152, %v2347
        %v2349 = vsel %vm1690, %v2156, %v2348
        %v2350 = vsel %vm1692, %v2160, %v2349
        %v2351 = vsel %vm1694, %v2164, %v2350
        %v2352 = vsel %vm1696, %v2168, %v2351
        %v2353 = vsel %vm1698, %v2172, %v2352
        %v2354 = vsel %vm1686, %v2180, %v2176
        %v2355 = vsel %vm1688, %v2184, %v2354
        %v2356 = vsel %vm1690, %v2188, %v2355
        %v2357 = vsel %vm1692, %v2192, %v2356
        %v2358 = vsel %vm1694, %v2196, %v2357
        %v2359 = vsel %vm1696, %v2200, %v2358
        %v2360 = vsel %vm1698, %v2204, %v2359
        %v2361 = vsel %vm1686, %v2212, %v2208
        %v2362 = vsel %vm1688, %v2216, %v2361
        %v2363 = vsel %vm1690, %v2220, %v2362
        %v2364 = vsel %vm1692, %v2224, %v2363
        %v2365 = vsel %vm1694, %v2228, %v2364
        %v2366 = vsel %vm1696, %v2232, %v2365
        %v2367 = vsel %vm1698, %v2236, %v2366
        %v2368 = vsel %vm1686, %v2244, %v2240
        %v2369 = vsel %vm1688, %v2248, %v2368
        %v2370 = vsel %vm1690, %v2252, %v2369
        %v2371 = vsel %vm1692, %v2256, %v2370
        %v2372 = vsel %vm1694, %v2260, %v2371
        %v2373 = vsel %vm1696, %v2264, %v2372
        %v2374 = vsel %vm1698, %v2268, %v2373
        %v2375 = vsel %vm1686, %v2276, %v2272
        %v2376 = vsel %vm1688, %v2280, %v2375
        %v2377 = vsel %vm1690, %v2284, %v2376
        %v2378 = vsel %vm1692, %v2288, %v2377
        %v2379 = vsel %vm1694, %v2292, %v2378
        %v2380 = vsel %vm1696, %v2296, %v2379
        %v2381 = vsel %vm1698, %v2300, %v2380
        %v2382 = vsel %vm1686, %v2308, %v2304
        %v2383 = vsel %vm1688, %v2312, %v2382
        %v2384 = vsel %vm1690, %v2316, %v2383
        %v2385 = vsel %vm1692, %v2320, %v2384
        %v2386 = vsel %vm1694, %v2324, %v2385
        %v2387 = vsel %vm1696, %v2328, %v2386
        %v2388 = vsel %vm1698, %v2332, %v2387
        %v2397 = vlaneseq
        %v2398 = vshrl.u32 %v2397, 7
        %v2399 = vsub.s32 1, %v2398
        %v2400 = vrot.slane %v927, %v2399
        %v2401 = vlaneseq
        %v2402 = vshrl.u32 %v2401, 7
        %v2403 = vsub.s32 1, %v2402
        %v2404 = vrot.slane %v935, %v2403
        %v2405 = vlaneseq
        %v2406 = vshrl.u32 %v2405, 7
        %v2407 = vsub.s32 1, %v2406
        %v2408 = vrot.slane %v934, %v2407
        %v2409 = vlaneseq
        %v2410 = vshrl.u32 %v2409, 7
        %v2411 = vsub.s32 1, %v2410
        %v2412 = vrot.slane %v936, %v2411
        %v2413 = vlaneseq
        %v2414 = vshrl.u32 %v2413, 7
        %v2415 = vsub.s32 1, %v2414
        %v2416 = vrot.slane %v944, %v2415
        %v2417 = vlaneseq
        %v2418 = vshrl.u32 %v2417, 7
        %v2419 = vsub.s32 1, %v2418
        %v2420 = vrot.slane %v952, %v2419
        %v2421 = vlaneseq
        %v2422 = vshrl.u32 %v2421, 7
        %v2423 = vsub.s32 1, %v2422
        %v2424 = vrot.slane %v951, %v2423
        %v2425 = vlaneseq
        %v2426 = vshrl.u32 %v2425, 7
        %v2427 = vsub.s32 1, %v2426
        %v2428 = vrot.slane %v953, %v2427
        %v2429 = vlaneseq
        %v2430 = vshrl.u32 %v2429, 7
        %v2431 = vsub.s32 1, %v2430
        %v2432 = vrot.slane %v995, %v2431
        %v2433 = vlaneseq
        %v2434 = vshrl.u32 %v2433, 7
        %v2435 = vsub.s32 1, %v2434
        %v2436 = vrot.slane %v1003, %v2435
        %v2437 = vlaneseq
        %v2438 = vshrl.u32 %v2437, 7
        %v2439 = vsub.s32 1, %v2438
        %v2440 = vrot.slane %v1002, %v2439
        %v2441 = vlaneseq
        %v2442 = vshrl.u32 %v2441, 7
        %v2443 = vsub.s32 1, %v2442
        %v2444 = vrot.slane %v1004, %v2443
        %v2445 = vlaneseq
        %v2446 = vshrl.u32 %v2445, 7
        %v2447 = vsub.s32 1, %v2446
        %v2448 = vrot.slane %v1012, %v2447
        %v2449 = vlaneseq
        %v2450 = vshrl.u32 %v2449, 7
        %v2451 = vsub.s32 1, %v2450
        %v2452 = vrot.slane %v1020, %v2451
        %v2453 = vlaneseq
        %v2454 = vshrl.u32 %v2453, 7
        %v2455 = vsub.s32 1, %v2454
        %v2456 = vrot.slane %v1019, %v2455
        %v2457 = vlaneseq
        %v2458 = vshrl.u32 %v2457, 7
        %v2459 = vsub.s32 1, %v2458
        %v2460 = vrot.slane %v1021, %v2459
        %v2461 = vlaneseq
        %v2462 = vshrl.u32 %v2461, 7
        %v2463 = vsub.s32 1, %v2462
        %v2464 = vrot.slane %v1063, %v2463
        %v2465 = vlaneseq
        %v2466 = vshrl.u32 %v2465, 7
        %v2467 = vsub.s32 1, %v2466
        %v2468 = vrot.slane %v1071, %v2467
        %v2469 = vlaneseq
        %v2470 = vshrl.u32 %v2469, 7
        %v2471 = vsub.s32 1, %v2470
        %v2472 = vrot.slane %v1070, %v2471
        %v2473 = vlaneseq
        %v2474 = vshrl.u32 %v2473, 7
        %v2475 = vsub.s32 1, %v2474
        %v2476 = vrot.slane %v1072, %v2475
        %v2477 = vlaneseq
        %v2478 = vshrl.u32 %v2477, 7
        %v2479 = vsub.s32 1, %v2478
        %v2480 = vrot.slane %v1080, %v2479
        %v2481 = vlaneseq
        %v2482 = vshrl.u32 %v2481, 7
        %v2483 = vsub.s32 1, %v2482
        %v2484 = vrot.slane %v1088, %v2483
        %v2485 = vlaneseq
        %v2486 = vshrl.u32 %v2485, 7
        %v2487 = vsub.s32 1, %v2486
        %v2488 = vrot.slane %v1087, %v2487
        %v2489 = vlaneseq
        %v2490 = vshrl.u32 %v2489, 7
        %v2491 = vsub.s32 1, %v2490
        %v2492 = vrot.slane %v1089, %v2491
        %v2493 = vlaneseq
        %v2494 = vshrl.u32 %v2493, 7
        %v2495 = vsub.s32 1, %v2494
        %v2496 = vrot.slane %v1131, %v2495
        %v2497 = vlaneseq
        %v2498 = vshrl.u32 %v2497, 7
        %v2499 = vsub.s32 1, %v2498
        %v2500 = vrot.slane %v1139, %v2499
        %v2501 = vlaneseq
        %v2502 = vshrl.u32 %v2501, 7
        %v2503 = vsub.s32 1, %v2502
        %v2504 = vrot.slane %v1138, %v2503
        %v2505 = vlaneseq
        %v2506 = vshrl.u32 %v2505, 7
        %v2507 = vsub.s32 1, %v2506
        %v2508 = vrot.slane %v1140, %v2507
        %v2509 = vlaneseq
        %v2510 = vshrl.u32 %v2509, 7
        %v2511 = vsub.s32 1, %v2510
        %v2512 = vrot.slane %v1148, %v2511
        %v2513 = vlaneseq
        %v2514 = vshrl.u32 %v2513, 7
        %v2515 = vsub.s32 1, %v2514
        %v2516 = vrot.slane %v1156, %v2515
        %v2517 = vlaneseq
        %v2518 = vshrl.u32 %v2517, 7
        %v2519 = vsub.s32 1, %v2518
        %v2520 = vrot.slane %v1155, %v2519
        %v2521 = vlaneseq
        %v2522 = vshrl.u32 %v2521, 7
        %v2523 = vsub.s32 1, %v2522
        %v2524 = vrot.slane %v1157, %v2523
        %v2525 = vlaneseq
        %v2526 = vshrl.u32 %v2525, 7
        %v2527 = vsub.s32 1, %v2526
        %v2528 = vrot.slane %v1199, %v2527
        %v2529 = vlaneseq
        %v2530 = vshrl.u32 %v2529, 7
        %v2531 = vsub.s32 1, %v2530
        %v2532 = vrot.slane %v1207, %v2531
        %v2533 = vlaneseq
        %v2534 = vshrl.u32 %v2533, 7
        %v2535 = vsub.s32 1, %v2534
        %v2536 = vrot.slane %v1206, %v2535
        %v2537 = vlaneseq
        %v2538 = vshrl.u32 %v2537, 7
        %v2539 = vsub.s32 1, %v2538
        %v2540 = vrot.slane %v1208, %v2539
        %v2541 = vlaneseq
        %v2542 = vshrl.u32 %v2541, 7
        %v2543 = vsub.s32 1, %v2542
        %v2544 = vrot.slane %v1216, %v2543
        %v2545 = vlaneseq
        %v2546 = vshrl.u32 %v2545, 7
        %v2547 = vsub.s32 1, %v2546
        %v2548 = vrot.slane %v1224, %v2547
        %v2549 = vlaneseq
        %v2550 = vshrl.u32 %v2549, 7
        %v2551 = vsub.s32 1, %v2550
        %v2552 = vrot.slane %v1223, %v2551
        %v2553 = vlaneseq
        %v2554 = vshrl.u32 %v2553, 7
        %v2555 = vsub.s32 1, %v2554
        %v2556 = vrot.slane %v1225, %v2555
        %v2557 = vlaneseq
        %v2558 = vshrl.u32 %v2557, 7
        %v2559 = vsub.s32 1, %v2558
        %v2560 = vrot.slane %v1267, %v2559
        %v2561 = vlaneseq
        %v2562 = vshrl.u32 %v2561, 7
        %v2563 = vsub.s32 1, %v2562
        %v2564 = vrot.slane %v1275, %v2563
        %v2565 = vlaneseq
        %v2566 = vshrl.u32 %v2565, 7
        %v2567 = vsub.s32 1, %v2566
        %v2568 = vrot.slane %v1274, %v2567
        %v2569 = vlaneseq
        %v2570 = vshrl.u32 %v2569, 7
        %v2571 = vsub.s32 1, %v2570
        %v2572 = vrot.slane %v1276, %v2571
        %v2573 = vlaneseq
        %v2574 = vshrl.u32 %v2573, 7
        %v2575 = vsub.s32 1, %v2574
        %v2576 = vrot.slane %v1284, %v2575
        %v2577 = vlaneseq
        %v2578 = vshrl.u32 %v2577, 7
        %v2579 = vsub.s32 1, %v2578
        %v2580 = vrot.slane %v1292, %v2579
        %v2581 = vlaneseq
        %v2582 = vshrl.u32 %v2581, 7
        %v2583 = vsub.s32 1, %v2582
        %v2584 = vrot.slane %v1291, %v2583
        %v2585 = vlaneseq
        %v2586 = vshrl.u32 %v2585, 7
        %v2587 = vsub.s32 1, %v2586
        %v2588 = vrot.slane %v1293, %v2587
        %v2589 = vlaneseq
        %v2590 = vshrl.u32 %v2589, 7
        %v2591 = vsub.s32 1, %v2590
        %v2592 = vrot.slane %v1335, %v2591
        %v2593 = vlaneseq
        %v2594 = vshrl.u32 %v2593, 7
        %v2595 = vsub.s32 1, %v2594
        %v2596 = vrot.slane %v1343, %v2595
        %v2597 = vlaneseq
        %v2598 = vshrl.u32 %v2597, 7
        %v2599 = vsub.s32 1, %v2598
        %v2600 = vrot.slane %v1342, %v2599
        %v2601 = vlaneseq
        %v2602 = vshrl.u32 %v2601, 7
        %v2603 = vsub.s32 1, %v2602
        %v2604 = vrot.slane %v1344, %v2603
        %v2605 = vlaneseq
        %v2606 = vshrl.u32 %v2605, 7
        %v2607 = vsub.s32 1, %v2606
        %v2608 = vrot.slane %v1352, %v2607
        %v2609 = vlaneseq
        %v2610 = vshrl.u32 %v2609, 7
        %v2611 = vsub.s32 1, %v2610
        %v2612 = vrot.slane %v1360, %v2611
        %v2613 = vlaneseq
        %v2614 = vshrl.u32 %v2613, 7
        %v2615 = vsub.s32 1, %v2614
        %v2616 = vrot.slane %v1359, %v2615
        %v2617 = vlaneseq
        %v2618 = vshrl.u32 %v2617, 7
        %v2619 = vsub.s32 1, %v2618
        %v2620 = vrot.slane %v1361, %v2619
        %v2621 = vlaneseq
        %v2622 = vshrl.u32 %v2621, 7
        %v2623 = vsub.s32 1, %v2622
        %v2624 = vrot.slane %v1403, %v2623
        %v2625 = vlaneseq
        %v2626 = vshrl.u32 %v2625, 7
        %v2627 = vsub.s32 1, %v2626
        %v2628 = vrot.slane %v1411, %v2627
        %v2629 = vlaneseq
        %v2630 = vshrl.u32 %v2629, 7
        %v2631 = vsub.s32 1, %v2630
        %v2632 = vrot.slane %v1410, %v2631
        %v2633 = vlaneseq
        %v2634 = vshrl.u32 %v2633, 7
        %v2635 = vsub.s32 1, %v2634
        %v2636 = vrot.slane %v1412, %v2635
        %v2637 = vlaneseq
        %v2638 = vshrl.u32 %v2637, 7
        %v2639 = vsub.s32 1, %v2638
        %v2640 = vrot.slane %v1420, %v2639
        %v2641 = vlaneseq
        %v2642 = vshrl.u32 %v2641, 7
        %v2643 = vsub.s32 1, %v2642
        %v2644 = vrot.slane %v1428, %v2643
        %v2645 = vlaneseq
        %v2646 = vshrl.u32 %v2645, 7
        %v2647 = vsub.s32 1, %v2646
        %v2648 = vrot.slane %v1427, %v2647
        %v2649 = vlaneseq
        %v2650 = vshrl.u32 %v2649, 7
        %v2651 = vsub.s32 1, %v2650
        %v2652 = vrot.slane %v1429, %v2651
        %v2653 = vsel %vm1686, %v2404, %v2400
        %v2654 = vsel %vm1688, %v2408, %v2653
        %v2655 = vsel %vm1690, %v2412, %v2654
        %v2656 = vsel %vm1692, %v2416, %v2655
        %v2657 = vsel %vm1694, %v2420, %v2656
        %v2658 = vsel %vm1696, %v2424, %v2657
        %v2659 = vsel %vm1698, %v2428, %v2658
        %v2660 = vsel %vm1686, %v2436, %v2432
        %v2661 = vsel %vm1688, %v2440, %v2660
        %v2662 = vsel %vm1690, %v2444, %v2661
        %v2663 = vsel %vm1692, %v2448, %v2662
        %v2664 = vsel %vm1694, %v2452, %v2663
        %v2665 = vsel %vm1696, %v2456, %v2664
        %v2666 = vsel %vm1698, %v2460, %v2665
        %v2667 = vsel %vm1686, %v2468, %v2464
        %v2668 = vsel %vm1688, %v2472, %v2667
        %v2669 = vsel %vm1690, %v2476, %v2668
        %v2670 = vsel %vm1692, %v2480, %v2669
        %v2671 = vsel %vm1694, %v2484, %v2670
        %v2672 = vsel %vm1696, %v2488, %v2671
        %v2673 = vsel %vm1698, %v2492, %v2672
        %v2674 = vsel %vm1686, %v2500, %v2496
        %v2675 = vsel %vm1688, %v2504, %v2674
        %v2676 = vsel %vm1690, %v2508, %v2675
        %v2677 = vsel %vm1692, %v2512, %v2676
        %v2678 = vsel %vm1694, %v2516, %v2677
        %v2679 = vsel %vm1696, %v2520, %v2678
        %v2680 = vsel %vm1698, %v2524, %v2679
        %v2681 = vsel %vm1686, %v2532, %v2528
        %v2682 = vsel %vm1688, %v2536, %v2681
        %v2683 = vsel %vm1690, %v2540, %v2682
        %v2684 = vsel %vm1692, %v2544, %v2683
        %v2685 = vsel %vm1694, %v2548, %v2684
        %v2686 = vsel %vm1696, %v2552, %v2685
        %v2687 = vsel %vm1698, %v2556, %v2686
        %v2688 = vsel %vm1686, %v2564, %v2560
        %v2689 = vsel %vm1688, %v2568, %v2688
        %v2690 = vsel %vm1690, %v2572, %v2689
        %v2691 = vsel %vm1692, %v2576, %v2690
        %v2692 = vsel %vm1694, %v2580, %v2691
        %v2693 = vsel %vm1696, %v2584, %v2692
        %v2694 = vsel %vm1698, %v2588, %v2693
        %v2695 = vsel %vm1686, %v2596, %v2592
        %v2696 = vsel %vm1688, %v2600, %v2695
        %v2697 = vsel %vm1690, %v2604, %v2696
        %v2698 = vsel %vm1692, %v2608, %v2697
        %v2699 = vsel %vm1694, %v2612, %v2698
        %v2700 = vsel %vm1696, %v2616, %v2699
        %v2701 = vsel %vm1698, %v2620, %v2700
        %v2702 = vsel %vm1686, %v2628, %v2624
        %v2703 = vsel %vm1688, %v2632, %v2702
        %v2704 = vsel %vm1690, %v2636, %v2703
        %v2705 = vsel %vm1692, %v2640, %v2704
        %v2706 = vsel %vm1694, %v2644, %v2705
        %v2707 = vsel %vm1696, %v2648, %v2706
        %v2708 = vsel %vm1698, %v2652, %v2707
        %v2717 = vpack.c.bf16 %v1706, %v1699
        %v2718 = vpack.c.bf16 %v2026, %v2019
        %v2719 = vpack.c.bf16 %v2346, %v2339
        %v2720 = vpack.c.bf16 %v2666, %v2659
        %v2721 = vpack.c.bf16 %v1720, %v1713
        %v2722 = vpack.c.bf16 %v2040, %v2033
        %v2723 = vpack.c.bf16 %v2360, %v2353
        %v2724 = vpack.c.bf16 %v2680, %v2673
        %v2725 = vpack.c.bf16 %v1734, %v1727
        %v2726 = vpack.c.bf16 %v2054, %v2047
        %v2727 = vpack.c.bf16 %v2374, %v2367
        %v2728 = vpack.c.bf16 %v2694, %v2687
        %v2729 = vpack.c.bf16 %v1748, %v1741
        %v2730 = vpack.c.bf16 %v2068, %v2061
        %v2731 = vpack.c.bf16 %v2388, %v2381
        %v2732 = vpack.c.bf16 %v2708, %v2701
        %v2733 = vld [vmem:[#allocation7] sm:$0xf]
        %v2734 = vld [vmem:[#allocation7 + $0x4] sm:$0xf]
        %v2735 = vld [vmem:[#allocation7 + $0x8] sm:$0xf]
        %v2736 = vld [vmem:[#allocation7 + $0xc] sm:$0xf]
        %v2737 = vld [vmem:[#allocation7 + $0x10] sm:$0xf]
        %v2738 = vld [vmem:[#allocation7 + $0x14] sm:$0xf]
        %v2739 = vld [vmem:[#allocation7 + $0x18] sm:$0xf]
        %v2740 = vld [vmem:[#allocation7 + $0x1c] sm:$0xf]
        %v2741 = vld [vmem:[#allocation7 + $0x20] sm:$0xf]
        %v2742 = vld [vmem:[#allocation7 + $0x24] sm:$0xf]
        %v2743 = vld [vmem:[#allocation7 + $0x28] sm:$0xf]
        %v2744 = vld [vmem:[#allocation7 + $0x2c] sm:$0xf]
        %v2745 = vld [vmem:[#allocation7 + $0x30] sm:$0xf]
        %v2746 = vld [vmem:[#allocation7 + $0x34] sm:$0xf]
        %v2747 = vld [vmem:[#allocation7 + $0x38] sm:$0xf]
        %v2748 = vld [vmem:[#allocation7 + $0x3c] sm:$0xf]
        %v2749 = vld [vmem:[#allocation7 + $0x40] sm:$0xf]
        %v2750 = vld [vmem:[#allocation7 + $0x44] sm:$0xf]
        %v2751 = vld [vmem:[#allocation7 + $0x48] sm:$0xf]
        %v2752 = vld [vmem:[#allocation7 + $0x4c] sm:$0xf]
        %v2753 = vld [vmem:[#allocation7 + $0x50] sm:$0xf]
        %v2754 = vld [vmem:[#allocation7 + $0x54] sm:$0xf]
        %v2755 = vld [vmem:[#allocation7 + $0x58] sm:$0xf]
        %v2756 = vld [vmem:[#allocation7 + $0x5c] sm:$0xf]
        %v2757 = vld [vmem:[#allocation7 + $0x60] sm:$0xf]
        %v2758 = vld [vmem:[#allocation7 + $0x64] sm:$0xf]
        %v2759 = vld [vmem:[#allocation7 + $0x68] sm:$0xf]
        %v2760 = vld [vmem:[#allocation7 + $0x6c] sm:$0xf]
        %v2761 = vld [vmem:[#allocation7 + $0x70] sm:$0xf]
        %v2762 = vld [vmem:[#allocation7 + $0x74] sm:$0xf]
        %v2763 = vld [vmem:[#allocation7 + $0x78] sm:$0xf]
        %v2764 = vld [vmem:[#allocation7 + $0x7c] sm:$0xf]
        %v2765 = vld [vmem:[#allocation7 + $0x80] sm:$0xf]
        %v2766 = vld [vmem:[#allocation7 + $0x84] sm:$0xf]
        %v2767 = vld [vmem:[#allocation7 + $0x88] sm:$0xf]
        %v2768 = vld [vmem:[#allocation7 + $0x8c] sm:$0xf]
        %v2769 = vld [vmem:[#allocation7 + $0x90] sm:$0xf]
        %v2770 = vld [vmem:[#allocation7 + $0x94] sm:$0xf]
        %v2771 = vld [vmem:[#allocation7 + $0x98] sm:$0xf]
        %v2772 = vld [vmem:[#allocation7 + $0x9c] sm:$0xf]
        %v2773 = vld [vmem:[#allocation7 + $0xa0] sm:$0xf]
        %v2774 = vld [vmem:[#allocation7 + $0xa4] sm:$0xf]
        %v2775 = vld [vmem:[#allocation7 + $0xa8] sm:$0xf]
        %v2776 = vld [vmem:[#allocation7 + $0xac] sm:$0xf]
        %v2777 = vld [vmem:[#allocation7 + $0xb0] sm:$0xf]
        %v2778 = vld [vmem:[#allocation7 + $0xb4] sm:$0xf]
        %v2779 = vld [vmem:[#allocation7 + $0xb8] sm:$0xf]
        %v2780 = vld [vmem:[#allocation7 + $0xbc] sm:$0xf]
        %v2781 = vld [vmem:[#allocation7 + $0xc0] sm:$0xf]
        %v2782 = vld [vmem:[#allocation7 + $0xc4] sm:$0xf]
        %v2783 = vld [vmem:[#allocation7 + $0xc8] sm:$0xf]
        %v2784 = vld [vmem:[#allocation7 + $0xcc] sm:$0xf]
        %v2785 = vld [vmem:[#allocation7 + $0xd0] sm:$0xf]
        %v2786 = vld [vmem:[#allocation7 + $0xd4] sm:$0xf]
        %v2787 = vld [vmem:[#allocation7 + $0xd8] sm:$0xf]
        %v2788 = vld [vmem:[#allocation7 + $0xdc] sm:$0xf]
        %v2789 = vld [vmem:[#allocation7 + $0xe0] sm:$0xf]
        %v2790 = vld [vmem:[#allocation7 + $0xe4] sm:$0xf]
        %v2791 = vld [vmem:[#allocation7 + $0xe8] sm:$0xf]
        %v2792 = vld [vmem:[#allocation7 + $0xec] sm:$0xf]
        %v2793 = vld [vmem:[#allocation7 + $0xf0] sm:$0xf]
        %v2794 = vld [vmem:[#allocation7 + $0xf4] sm:$0xf]
        %v2795 = vld [vmem:[#allocation7 + $0xf8] sm:$0xf]
        %v2796 = vld [vmem:[#allocation7 + $0xfc] sm:$0xf]
        %v2797 = vlaneseq
        %v2798 = vshrl.u32 %v2797, 7
        %v2799 = vsub.s32 1, %v2798
        %v2800 = vrot.slane %v300, %v2799
        %v2865 = vunpack.c.l.b16 %v2733
        %v2866 = vunpack.c.l.b16 %v2734
        %v2867 = vunpack.c.l.b16 %v2735
        %v2868 = vunpack.c.l.b16 %v2736
        %v2869 = vunpack.c.l.b16 %v2737
        %v2870 = vunpack.c.l.b16 %v2738
        %v2871 = vunpack.c.l.b16 %v2739
        %v2872 = vunpack.c.l.b16 %v2740
        %v2873 = vunpack.c.l.b16 %v2741
        %v2874 = vunpack.c.l.b16 %v2742
        %v2875 = vunpack.c.l.b16 %v2743
        %v2876 = vunpack.c.l.b16 %v2744
        %v2877 = vunpack.c.l.b16 %v2745
        %v2878 = vunpack.c.l.b16 %v2746
        %v2879 = vunpack.c.l.b16 %v2747
        %v2880 = vunpack.c.l.b16 %v2748
        %v2881 = vunpack.c.l.b16 %v2749
        %v2882 = vunpack.c.l.b16 %v2750
        %v2883 = vunpack.c.l.b16 %v2751
        %v2884 = vunpack.c.l.b16 %v2752
        %v2885 = vunpack.c.l.b16 %v2753
        %v2886 = vunpack.c.l.b16 %v2754
        %v2887 = vunpack.c.l.b16 %v2755
        %v2888 = vunpack.c.l.b16 %v2756
        %v2889 = vunpack.c.l.b16 %v2757
        %v2890 = vunpack.c.l.b16 %v2758
        %v2891 = vunpack.c.l.b16 %v2759
        %v2892 = vunpack.c.l.b16 %v2760
        %v2893 = vunpack.c.l.b16 %v2761
        %v2894 = vunpack.c.l.b16 %v2762
        %v2895 = vunpack.c.l.b16 %v2763
        %v2896 = vunpack.c.l.b16 %v2764
        %v2897 = vunpack.c.l.b16 %v2765
        %v2898 = vunpack.c.l.b16 %v2766
        %v2899 = vunpack.c.l.b16 %v2767
        %v2900 = vunpack.c.l.b16 %v2768
        %v2901 = vunpack.c.l.b16 %v2769
        %v2902 = vunpack.c.l.b16 %v2770
        %v2903 = vunpack.c.l.b16 %v2771
        %v2904 = vunpack.c.l.b16 %v2772
        %v2905 = vunpack.c.l.b16 %v2773
        %v2906 = vunpack.c.l.b16 %v2774
        %v2907 = vunpack.c.l.b16 %v2775
        %v2908 = vunpack.c.l.b16 %v2776
        %v2909 = vunpack.c.l.b16 %v2777
        %v2910 = vunpack.c.l.b16 %v2778
        %v2911 = vunpack.c.l.b16 %v2779
        %v2912 = vunpack.c.l.b16 %v2780
        %v2913 = vunpack.c.l.b16 %v2781
        %v2914 = vunpack.c.l.b16 %v2782
        %v2915 = vunpack.c.l.b16 %v2783
        %v2916 = vunpack.c.l.b16 %v2784
        %v2917 = vunpack.c.l.b16 %v2785
        %v2918 = vunpack.c.l.b16 %v2786
        %v2919 = vunpack.c.l.b16 %v2787
        %v2920 = vunpack.c.l.b16 %v2788
        %v2921 = vunpack.c.l.b16 %v2789
        %v2922 = vunpack.c.l.b16 %v2790
        %v2923 = vunpack.c.l.b16 %v2791
        %v2924 = vunpack.c.l.b16 %v2792
        %v2925 = vunpack.c.l.b16 %v2793
        %v2926 = vunpack.c.l.b16 %v2794
        %v2927 = vunpack.c.l.b16 %v2795
        %v2928 = vunpack.c.l.b16 %v2796
        %v2929 = vpack.c.b16 %v2866, %v2865
        %v2930 = vpack.c.b16 %v2868, %v2867
        %v2931 = vpack.c.b16 %v2870, %v2869
        %v2932 = vpack.c.b16 %v2872, %v2871
        %v2933 = vpack.c.b16 %v2874, %v2873
        %v2934 = vpack.c.b16 %v2876, %v2875
        %v2935 = vpack.c.b16 %v2878, %v2877
        %v2936 = vpack.c.b16 %v2880, %v2879
        %v2937 = vpack.c.b16 %v2882, %v2881
        %v2938 = vpack.c.b16 %v2884, %v2883
        %v2939 = vpack.c.b16 %v2886, %v2885
        %v2940 = vpack.c.b16 %v2888, %v2887
        %v2941 = vpack.c.b16 %v2890, %v2889
        %v2942 = vpack.c.b16 %v2892, %v2891
        %v2943 = vpack.c.b16 %v2894, %v2893
        %v2944 = vpack.c.b16 %v2896, %v2895
        %v2945 = vpack.c.b16 %v2898, %v2897
        %v2946 = vpack.c.b16 %v2900, %v2899
        %v2947 = vpack.c.b16 %v2902, %v2901
        %v2948 = vpack.c.b16 %v2904, %v2903
        %v2949 = vpack.c.b16 %v2906, %v2905
        %v2950 = vpack.c.b16 %v2908, %v2907
        %v2951 = vpack.c.b16 %v2910, %v2909
        %v2952 = vpack.c.b16 %v2912, %v2911
        %v2953 = vpack.c.b16 %v2914, %v2913
        %v2954 = vpack.c.b16 %v2916, %v2915
        %v2955 = vpack.c.b16 %v2918, %v2917
        %v2956 = vpack.c.b16 %v2920, %v2919
        %v2957 = vpack.c.b16 %v2922, %v2921
        %v2958 = vpack.c.b16 %v2924, %v2923
        %v2959 = vpack.c.b16 %v2926, %v2925
        %v2960 = vpack.c.b16 %v2928, %v2927
        %2993 = vmatprep.subr.bf16.mxu0 0
        %2994 = vmatpush1.bf16.msra.mxu0 %v2929
        %2995 = vmatprep.subr.bf16.mxu0 0
        %2996 = vmatpush1.bf16.msra.mxu0 %v2930
        %2997 = vmatprep.subr.bf16.mxu0 0
        %2998 = vmatpush1.bf16.msra.mxu0 %v2931
        %2999 = vmatprep.subr.bf16.mxu0 0
        %3000 = vmatpush1.bf16.msra.mxu0 %v2932
        %3001 = vmatprep.subr.bf16.mxu0 0
        %3002 = vmatpush1.bf16.msra.mxu0 %v2933
        %3003 = vmatprep.subr.bf16.mxu0 0
        %3004 = vmatpush1.bf16.msra.mxu0 %v2934
        %3005 = vmatprep.subr.bf16.mxu0 0
        %3006 = vmatpush1.bf16.msra.mxu0 %v2935
        %3007 = vmatprep.subr.bf16.mxu0 0
        %3008 = vmatpush1.bf16.msra.mxu0 %v2936
        %3009 = vmatprep.subr.bf16.mxu0 0
        %3010 = vmatpush1.bf16.msra.mxu0 %v2937
        %3011 = vmatprep.subr.bf16.mxu0 0
        %3012 = vmatpush1.bf16.msra.mxu0 %v2938
        %3013 = vmatprep.subr.bf16.mxu0 0
        %3014 = vmatpush1.bf16.msra.mxu0 %v2939
        %3015 = vmatprep.subr.bf16.mxu0 0
        %3016 = vmatpush1.bf16.msra.mxu0 %v2940
        %3017 = vmatprep.subr.bf16.mxu0 0
        %3018 = vmatpush1.bf16.msra.mxu0 %v2941
        %3019 = vmatprep.subr.bf16.mxu0 0
        %3020 = vmatpush1.bf16.msra.mxu0 %v2942
        %3021 = vmatprep.subr.bf16.mxu0 0
        %3022 = vmatpush1.bf16.msra.mxu0 %v2943
        %3023 = vmatprep.subr.bf16.mxu0 0
        %3024 = vmatpush1.bf16.msra.mxu0 %v2944
        %3025 = vmatprep.mubr.bf16.mxu0 %v2718
        %3026 = vmatmul.mubr.bf16.gmra.mrb[0].mxu0 %v2717
        %v3027 = vpop.f32.mrb[0].mxu0
        %v3028 = vadd.f32 %v2800, %v3027
        %v3029 = vpop.f32.mrb[0].mxu0
        %v3030 = vpop.f32.mrb[0].mxu0
        %v3031 = vadd.f32 %v2800, %v3030
        %v3032 = vpop.f32.mrb[0].mxu0
        %3033 = vmatprep.mubr.bf16.mxu0 %v2722
        %3034 = vmatmul.mubr.bf16.gmra.mrb[0].mxu0 %v2721
        %v3035 = vpop.f32.mrb[0].mxu0
        %v3036 = vadd.f32 %v2800, %v3035
        %v3037 = vpop.f32.mrb[0].mxu0
        %v3038 = vpop.f32.mrb[0].mxu0
        %v3039 = vadd.f32 %v2800, %v3038
        %v3040 = vpop.f32.mrb[0].mxu0
        %3041 = vmatprep.mubr.bf16.mxu0 %v2726
        %3042 = vmatmul.mubr.bf16.gmra.mrb[0].mxu0 %v2725
        %v3043 = vpop.f32.mrb[0].mxu0
        %v3044 = vadd.f32 %v2800, %v3043
        %v3045 = vpop.f32.mrb[0].mxu0
        %v3046 = vpop.f32.mrb[0].mxu0
        %v3047 = vadd.f32 %v2800, %v3046
        %v3048 = vpop.f32.mrb[0].mxu0
        %3049 = vmatprep.mubr.bf16.mxu0 %v2730
        %3050 = vmatmul.mubr.bf16.gmra.mrb[0].mxu0 %v2729
        %v3051 = vpop.f32.mrb[0].mxu0
        %v3052 = vadd.f32 %v2800, %v3051
        %v3053 = vpop.f32.mrb[0].mxu0
        %v3054 = vpop.f32.mrb[0].mxu0
        %v3055 = vadd.f32 %v2800, %v3054
        %v3056 = vpop.f32.mrb[0].mxu0
        %3057 = vdwg.mxu0
        %3058 = vmatprep.subr.bf16.mxu0 0
        %3059 = vmatpush1.bf16.msra.mxu0 %v2945
        %3060 = vmatprep.subr.bf16.mxu0 0
        %3061 = vmatpush1.bf16.msra.mxu0 %v2946
        %3062 = vmatprep.subr.bf16.mxu0 0
        %3063 = vmatpush1.bf16.msra.mxu0 %v2947
        %3064 = vmatprep.subr.bf16.mxu0 0
        %3065 = vmatpush1.bf16.msra.mxu0 %v2948
        %3066 = vmatprep.subr.bf16.mxu0 0
        %3067 = vmatpush1.bf16.msra.mxu0 %v2949
        %3068 = vmatprep.subr.bf16.mxu0 0
        %3069 = vmatpush1.bf16.msra.mxu0 %v2950
        %3070 = vmatprep.subr.bf16.mxu0 0
        %3071 = vmatpush1.bf16.msra.mxu0 %v2951
        %3072 = vmatprep.subr.bf16.mxu0 0
        %3073 = vmatpush1.bf16.msra.mxu0 %v2952
        %3074 = vmatprep.subr.bf16.mxu0 0
        %3075 = vmatpush1.bf16.msra.mxu0 %v2953
        %3076 = vmatprep.subr.bf16.mxu0 0
        %3077 = vmatpush1.bf16.msra.mxu0 %v2954
        %3078 = vmatprep.subr.bf16.mxu0 0
        %3079 = vmatpush1.bf16.msra.mxu0 %v2955
        %3080 = vmatprep.subr.bf16.mxu0 0
        %3081 = vmatpush1.bf16.msra.mxu0 %v2956
        %3082 = vmatprep.subr.bf16.mxu0 0
        %3083 = vmatpush1.bf16.msra.mxu0 %v2957
        %3084 = vmatprep.subr.bf16.mxu0 0
        %3085 = vmatpush1.bf16.msra.mxu0 %v2958
        %3086 = vmatprep.subr.bf16.mxu0 0
        %3087 = vmatpush1.bf16.msra.mxu0 %v2959
        %3088 = vmatprep.subr.bf16.mxu0 0
        %3089 = vmatpush1.bf16.msra.mxu0 %v2960
        %3090 = vmatprep.mubr.bf16.mxu0 %v2720
        %3091 = vmatmul.mubr.bf16.gmra.mrb[0].mxu0 %v2719
        %v3092 = vpop.f32.mrb[0].mxu0
        %v3093 = vadd.f32 %v3028, %v3092
        %v3094 = vpop.f32.mrb[0].mxu0
        %v3095 = vpop.f32.mrb[0].mxu0
        %v3096 = vadd.f32 %v3031, %v3095
        %v3097 = vpop.f32.mrb[0].mxu0
        %3098 = vmatprep.mubr.bf16.mxu0 %v2724
        %3099 = vmatmul.mubr.bf16.gmra.mrb[0].mxu0 %v2723
        %v3100 = vpop.f32.mrb[0].mxu0
        %v3101 = vadd.f32 %v3036, %v3100
        %v3102 = vpop.f32.mrb[0].mxu0
        %v3103 = vpop.f32.mrb[0].mxu0
        %v3104 = vadd.f32 %v3039, %v3103
        %v3105 = vpop.f32.mrb[0].mxu0
        %3106 = vmatprep.mubr.bf16.mxu0 %v2728
        %3107 = vmatmul.mubr.bf16.gmra.mrb[0].mxu0 %v2727
        %v3108 = vpop.f32.mrb[0].mxu0
        %v3109 = vadd.f32 %v3044, %v3108
        %v3110 = vpop.f32.mrb[0].mxu0
        %v3111 = vpop.f32.mrb[0].mxu0
        %v3112 = vadd.f32 %v3047, %v3111
        %v3113 = vpop.f32.mrb[0].mxu0
        %3114 = vmatprep.mubr.bf16.mxu0 %v2732
        %3115 = vmatmul.mubr.bf16.gmra.mrb[0].mxu0 %v2731
        %v3116 = vpop.f32.mrb[0].mxu0
        %v3117 = vadd.f32 %v3052, %v3116
        %v3118 = vpop.f32.mrb[0].mxu0
        %v3119 = vpop.f32.mrb[0].mxu0
        %v3120 = vadd.f32 %v3055, %v3119
        %v3121 = vpop.f32.mrb[0].mxu0
        %3122 = vdwg.mxu0
        %v3123 = vmax.f32 %v3093, 0.0
        %v3124 = vmax.f32 %v3096, 0.0
        %v3125 = vmax.f32 %v3101, 0.0
        %v3126 = vmax.f32 %v3104, 0.0
        %v3127 = vmax.f32 %v3109, 0.0
        %v3128 = vmax.f32 %v3112, 0.0
        %v3129 = vmax.f32 %v3117, 0.0
        %v3130 = vmax.f32 %v3120, 0.0
        %v3139 = vcombine.high %v3123, %v3123
        %v3141 = vunpack.c.l.s4 1983009808
        %v3142 = vunpack.c.0.s8 %v3141
        %v3143 = vlaneseq
        %v3144 = vshrl.u32 %v3143, 7
        %v3145 = vsub.s32 %v3142, %v3144
        %v3146 = vrot.slane %v3123, %v3145
        %v3148 = vunpack.c.l.s4 1983009808
        %v3149 = vunpack.c.0.s8 %v3148
        %v3150 = vlaneseq
        %v3151 = vshrl.u32 %v3150, 7
        %v3152 = vsub.s32 %v3149, %v3151
        %v3153 = vrot.slane %v3139, %v3152
        %v3154 = vcombine.high %v3146, %v3146
        %v3155 = vcombine.high %v3153, %v3153
        %v3156 = vcombine.high %v3124, %v3124
        %v3158 = vunpack.c.l.s4 1983009808
        %v3159 = vunpack.c.0.s8 %v3158
        %v3160 = vlaneseq
        %v3161 = vshrl.u32 %v3160, 7
        %v3162 = vsub.s32 %v3159, %v3161
        %v3163 = vrot.slane %v3124, %v3162
        %v3165 = vunpack.c.l.s4 1983009808
        %v3166 = vunpack.c.0.s8 %v3165
        %v3167 = vlaneseq
        %v3168 = vshrl.u32 %v3167, 7
        %v3169 = vsub.s32 %v3166, %v3168
        %v3170 = vrot.slane %v3156, %v3169
        %v3171 = vcombine.high %v3163, %v3163
        %v3172 = vcombine.high %v3170, %v3170
        %v3173 = vcombine.high %v3125, %v3125
        %v3175 = vunpack.c.l.s4 1983009808
        %v3176 = vunpack.c.0.s8 %v3175
        %v3177 = vlaneseq
        %v3178 = vshrl.u32 %v3177, 7
        %v3179 = vsub.s32 %v3176, %v3178
        %v3180 = vrot.slane %v3125, %v3179
        %v3182 = vunpack.c.l.s4 1983009808
        %v3183 = vunpack.c.0.s8 %v3182
        %v3184 = vlaneseq
        %v3185 = vshrl.u32 %v3184, 7
        %v3186 = vsub.s32 %v3183, %v3185
        %v3187 = vrot.slane %v3173, %v3186
        %v3188 = vcombine.high %v3180, %v3180
        %v3189 = vcombine.high %v3187, %v3187
        %v3190 = vcombine.high %v3126, %v3126
        %v3192 = vunpack.c.l.s4 1983009808
        %v3193 = vunpack.c.0.s8 %v3192
        %v3194 = vlaneseq
        %v3195 = vshrl.u32 %v3194, 7
        %v3196 = vsub.s32 %v3193, %v3195
        %v3197 = vrot.slane %v3126, %v3196
        %v3199 = vunpack.c.l.s4 1983009808
        %v3200 = vunpack.c.0.s8 %v3199
        %v3201 = vlaneseq
        %v3202 = vshrl.u32 %v3201, 7
        %v3203 = vsub.s32 %v3200, %v3202
        %v3204 = vrot.slane %v3190, %v3203
        %v3205 = vcombine.high %v3197, %v3197
        %v3206 = vcombine.high %v3204, %v3204
        %v3207 = vcombine.high %v3127, %v3127
        %v3209 = vunpack.c.l.s4 1983009808
        %v3210 = vunpack.c.0.s8 %v3209
        %v3211 = vlaneseq
        %v3212 = vshrl.u32 %v3211, 7
        %v3213 = vsub.s32 %v3210, %v3212
        %v3214 = vrot.slane %v3127, %v3213
        %v3216 = vunpack.c.l.s4 1983009808
        %v3217 = vunpack.c.0.s8 %v3216
        %v3218 = vlaneseq
        %v3219 = vshrl.u32 %v3218, 7
        %v3220 = vsub.s32 %v3217, %v3219
        %v3221 = vrot.slane %v3207, %v3220
        %v3222 = vcombine.high %v3214, %v3214
        %v3223 = vcombine.high %v3221, %v3221
        %v3224 = vcombine.high %v3128, %v3128
        %v3226 = vunpack.c.l.s4 1983009808
        %v3227 = vunpack.c.0.s8 %v3226
        %v3228 = vlaneseq
        %v3229 = vshrl.u32 %v3228, 7
        %v3230 = vsub.s32 %v3227, %v3229
        %v3231 = vrot.slane %v3128, %v3230
        %v3233 = vunpack.c.l.s4 1983009808
        %v3234 = vunpack.c.0.s8 %v3233
        %v3235 = vlaneseq
        %v3236 = vshrl.u32 %v3235, 7
        %v3237 = vsub.s32 %v3234, %v3236
        %v3238 = vrot.slane %v3224, %v3237
        %v3239 = vcombine.high %v3231, %v3231
        %v3240 = vcombine.high %v3238, %v3238
        %v3241 = vcombine.high %v3129, %v3129
        %v3243 = vunpack.c.l.s4 1983009808
        %v3244 = vunpack.c.0.s8 %v3243
        %v3245 = vlaneseq
        %v3246 = vshrl.u32 %v3245, 7
        %v3247 = vsub.s32 %v3244, %v3246
        %v3248 = vrot.slane %v3129, %v3247
        %v3250 = vunpack.c.l.s4 1983009808
        %v3251 = vunpack.c.0.s8 %v3250
        %v3252 = vlaneseq
        %v3253 = vshrl.u32 %v3252, 7
        %v3254 = vsub.s32 %v3251, %v3253
        %v3255 = vrot.slane %v3241, %v3254
        %v3256 = vcombine.high %v3248, %v3248
        %v3257 = vcombine.high %v3255, %v3255
        %v3258 = vcombine.high %v3130, %v3130
        %v3260 = vunpack.c.l.s4 1983009808
        %v3261 = vunpack.c.0.s8 %v3260
        %v3262 = vlaneseq
        %v3263 = vshrl.u32 %v3262, 7
        %v3264 = vsub.s32 %v3261, %v3263
        %v3265 = vrot.slane %v3130, %v3264
        %v3267 = vunpack.c.l.s4 1983009808
        %v3268 = vunpack.c.0.s8 %v3267
        %v3269 = vlaneseq
        %v3270 = vshrl.u32 %v3269, 7
        %v3271 = vsub.s32 %v3268, %v3270
        %v3272 = vrot.slane %v3258, %v3271
        %v3273 = vcombine.high %v3265, %v3265
        %v3274 = vcombine.high %v3272, %v3272
        %v3275 = vlaneseq
        %v3276 = vshrl.u32 %v3275, 7
        %v3277 = vsub.s32 0, %v3276
        %v3278 = vrot.slane %v3146, %v3277
        %v3279 = vlaneseq
        %v3280 = vshrl.u32 %v3279, 7
        %v3281 = vsub.s32 0, %v3280
        %v3282 = vrot.slane %v3154, %v3281
        %v3283 = vlaneseq
        %v3284 = vshrl.u32 %v3283, 7
        %v3285 = vsub.s32 0, %v3284
        %v3286 = vrot.slane %v3153, %v3285
        %v3287 = vlaneseq
        %v3288 = vshrl.u32 %v3287, 7
        %v3289 = vsub.s32 0, %v3288
        %v3290 = vrot.slane %v3155, %v3289
        %v3291 = vlaneseq
        %v3292 = vshrl.u32 %v3291, 7
        %v3293 = vsub.s32 0, %v3292
        %v3294 = vrot.slane %v3180, %v3293
        %v3295 = vlaneseq
        %v3296 = vshrl.u32 %v3295, 7
        %v3297 = vsub.s32 0, %v3296
        %v3298 = vrot.slane %v3188, %v3297
        %v3299 = vlaneseq
        %v3300 = vshrl.u32 %v3299, 7
        %v3301 = vsub.s32 0, %v3300
        %v3302 = vrot.slane %v3187, %v3301
        %v3303 = vlaneseq
        %v3304 = vshrl.u32 %v3303, 7
        %v3305 = vsub.s32 0, %v3304
        %v3306 = vrot.slane %v3189, %v3305
        %v3307 = vlaneseq
        %v3308 = vshrl.u32 %v3307, 7
        %v3309 = vsub.s32 0, %v3308
        %v3310 = vrot.slane %v3214, %v3309
        %v3311 = vlaneseq
        %v3312 = vshrl.u32 %v3311, 7
        %v3313 = vsub.s32 0, %v3312
        %v3314 = vrot.slane %v3222, %v3313
        %v3315 = vlaneseq
        %v3316 = vshrl.u32 %v3315, 7
        %v3317 = vsub.s32 0, %v3316
        %v3318 = vrot.slane %v3221, %v3317
        %v3319 = vlaneseq
        %v3320 = vshrl.u32 %v3319, 7
        %v3321 = vsub.s32 0, %v3320
        %v3322 = vrot.slane %v3223, %v3321
        %v3323 = vlaneseq
        %v3324 = vshrl.u32 %v3323, 7
        %v3325 = vsub.s32 0, %v3324
        %v3326 = vrot.slane %v3248, %v3325
        %v3327 = vlaneseq
        %v3328 = vshrl.u32 %v3327, 7
        %v3329 = vsub.s32 0, %v3328
        %v3330 = vrot.slane %v3256, %v3329
        %v3331 = vlaneseq
        %v3332 = vshrl.u32 %v3331, 7
        %v3333 = vsub.s32 0, %v3332
        %v3334 = vrot.slane %v3255, %v3333
        %v3335 = vlaneseq
        %v3336 = vshrl.u32 %v3335, 7
        %v3337 = vsub.s32 0, %v3336
        %v3338 = vrot.slane %v3257, %v3337
        %v3339 = vsel %vm1686, %v3282, %v3278
        %v3340 = vsel %vm1688, %v3286, %v3339
        %v3341 = vsel %vm1690, %v3290, %v3340
        %v3342 = vsel %vm1686, %v3298, %v3294
        %v3343 = vsel %vm1688, %v3302, %v3342
        %v3344 = vsel %vm1690, %v3306, %v3343
        %v3345 = vsel %vm1686, %v3314, %v3310
        %v3346 = vsel %vm1688, %v3318, %v3345
        %v3347 = vsel %vm1690, %v3322, %v3346
        %v3348 = vsel %vm1686, %v3330, %v3326
        %v3349 = vsel %vm1688, %v3334, %v3348
        %v3350 = vsel %vm1690, %v3338, %v3349
        %v3351 = vlaneseq
        %v3352 = vshrl.u32 %v3351, 7
        %v3353 = vsub.s32 1, %v3352
        %v3354 = vrot.slane %v3146, %v3353
        %v3355 = vlaneseq
        %v3356 = vshrl.u32 %v3355, 7
        %v3357 = vsub.s32 1, %v3356
        %v3358 = vrot.slane %v3154, %v3357
        %v3359 = vlaneseq
        %v3360 = vshrl.u32 %v3359, 7
        %v3361 = vsub.s32 1, %v3360
        %v3362 = vrot.slane %v3153, %v3361
        %v3363 = vlaneseq
        %v3364 = vshrl.u32 %v3363, 7
        %v3365 = vsub.s32 1, %v3364
        %v3366 = vrot.slane %v3155, %v3365
        %v3367 = vlaneseq
        %v3368 = vshrl.u32 %v3367, 7
        %v3369 = vsub.s32 1, %v3368
        %v3370 = vrot.slane %v3180, %v3369
        %v3371 = vlaneseq
        %v3372 = vshrl.u32 %v3371, 7
        %v3373 = vsub.s32 1, %v3372
        %v3374 = vrot.slane %v3188, %v3373
        %v3375 = vlaneseq
        %v3376 = vshrl.u32 %v3375, 7
        %v3377 = vsub.s32 1, %v3376
        %v3378 = vrot.slane %v3187, %v3377
        %v3379 = vlaneseq
        %v3380 = vshrl.u32 %v3379, 7
        %v3381 = vsub.s32 1, %v3380
        %v3382 = vrot.slane %v3189, %v3381
        %v3383 = vlaneseq
        %v3384 = vshrl.u32 %v3383, 7
        %v3385 = vsub.s32 1, %v3384
        %v3386 = vrot.slane %v3214, %v3385
        %v3387 = vlaneseq
        %v3388 = vshrl.u32 %v3387, 7
        %v3389 = vsub.s32 1, %v3388
        %v3390 = vrot.slane %v3222, %v3389
        %v3391 = vlaneseq
        %v3392 = vshrl.u32 %v3391, 7
        %v3393 = vsub.s32 1, %v3392
        %v3394 = vrot.slane %v3221, %v3393
        %v3395 = vlaneseq
        %v3396 = vshrl.u32 %v3395, 7
        %v3397 = vsub.s32 1, %v3396
        %v3398 = vrot.slane %v3223, %v3397
        %v3399 = vlaneseq
        %v3400 = vshrl.u32 %v3399, 7
        %v3401 = vsub.s32 1, %v3400
        %v3402 = vrot.slane %v3248, %v3401
        %v3403 = vlaneseq
        %v3404 = vshrl.u32 %v3403, 7
        %v3405 = vsub.s32 1, %v3404
        %v3406 = vrot.slane %v3256, %v3405
        %v3407 = vlaneseq
        %v3408 = vshrl.u32 %v3407, 7
        %v3409 = vsub.s32 1, %v3408
        %v3410 = vrot.slane %v3255, %v3409
        %v3411 = vlaneseq
        %v3412 = vshrl.u32 %v3411, 7
        %v3413 = vsub.s32 1, %v3412
        %v3414 = vrot.slane %v3257, %v3413
        %v3415 = vsel %vm1686, %v3358, %v3354
        %v3416 = vsel %vm1688, %v3362, %v3415
        %v3417 = vsel %vm1690, %v3366, %v3416
        %v3418 = vsel %vm1686, %v3374, %v3370
        %v3419 = vsel %vm1688, %v3378, %v3418
        %v3420 = vsel %vm1690, %v3382, %v3419
        %v3421 = vsel %vm1686, %v3390, %v3386
        %v3422 = vsel %vm1688, %v3394, %v3421
        %v3423 = vsel %vm1690, %v3398, %v3422
        %v3424 = vsel %vm1686, %v3406, %v3402
        %v3425 = vsel %vm1688, %v3410, %v3424
        %v3426 = vsel %vm1690, %v3414, %v3425
        %v3427 = vlaneseq
        %v3428 = vshrl.u32 %v3427, 7
        %v3429 = vsub.s32 0, %v3428
        %v3430 = vrot.slane %v3163, %v3429
        %v3431 = vlaneseq
        %v3432 = vshrl.u32 %v3431, 7
        %v3433 = vsub.s32 0, %v3432
        %v3434 = vrot.slane %v3171, %v3433
        %v3435 = vlaneseq
        %v3436 = vshrl.u32 %v3435, 7
        %v3437 = vsub.s32 0, %v3436
        %v3438 = vrot.slane %v3170, %v3437
        %v3439 = vlaneseq
        %v3440 = vshrl.u32 %v3439, 7
        %v3441 = vsub.s32 0, %v3440
        %v3442 = vrot.slane %v3172, %v3441
        %v3443 = vlaneseq
        %v3444 = vshrl.u32 %v3443, 7
        %v3445 = vsub.s32 0, %v3444
        %v3446 = vrot.slane %v3197, %v3445
        %v3447 = vlaneseq
        %v3448 = vshrl.u32 %v3447, 7
        %v3449 = vsub.s32 0, %v3448
        %v3450 = vrot.slane %v3205, %v3449
        %v3451 = vlaneseq
        %v3452 = vshrl.u32 %v3451, 7
        %v3453 = vsub.s32 0, %v3452
        %v3454 = vrot.slane %v3204, %v3453
        %v3455 = vlaneseq
        %v3456 = vshrl.u32 %v3455, 7
        %v3457 = vsub.s32 0, %v3456
        %v3458 = vrot.slane %v3206, %v3457
        %v3459 = vlaneseq
        %v3460 = vshrl.u32 %v3459, 7
        %v3461 = vsub.s32 0, %v3460
        %v3462 = vrot.slane %v3231, %v3461
        %v3463 = vlaneseq
        %v3464 = vshrl.u32 %v3463, 7
        %v3465 = vsub.s32 0, %v3464
        %v3466 = vrot.slane %v3239, %v3465
        %v3467 = vlaneseq
        %v3468 = vshrl.u32 %v3467, 7
        %v3469 = vsub.s32 0, %v3468
        %v3470 = vrot.slane %v3238, %v3469
        %v3471 = vlaneseq
        %v3472 = vshrl.u32 %v3471, 7
        %v3473 = vsub.s32 0, %v3472
        %v3474 = vrot.slane %v3240, %v3473
        %v3475 = vlaneseq
        %v3476 = vshrl.u32 %v3475, 7
        %v3477 = vsub.s32 0, %v3476
        %v3478 = vrot.slane %v3265, %v3477
        %v3479 = vlaneseq
        %v3480 = vshrl.u32 %v3479, 7
        %v3481 = vsub.s32 0, %v3480
        %v3482 = vrot.slane %v3273, %v3481
        %v3483 = vlaneseq
        %v3484 = vshrl.u32 %v3483, 7
        %v3485 = vsub.s32 0, %v3484
        %v3486 = vrot.slane %v3272, %v3485
        %v3487 = vlaneseq
        %v3488 = vshrl.u32 %v3487, 7
        %v3489 = vsub.s32 0, %v3488
        %v3490 = vrot.slane %v3274, %v3489
        %v3491 = vsel %vm1686, %v3434, %v3430
        %v3492 = vsel %vm1688, %v3438, %v3491
        %v3493 = vsel %vm1690, %v3442, %v3492
        %v3494 = vsel %vm1686, %v3450, %v3446
        %v3495 = vsel %vm1688, %v3454, %v3494
        %v3496 = vsel %vm1690, %v3458, %v3495
        %v3497 = vsel %vm1686, %v3466, %v3462
        %v3498 = vsel %vm1688, %v3470, %v3497
        %v3499 = vsel %vm1690, %v3474, %v3498
        %v3500 = vsel %vm1686, %v3482, %v3478
        %v3501 = vsel %vm1688, %v3486, %v3500
        %v3502 = vsel %vm1690, %v3490, %v3501
        %v3503 = vlaneseq
        %v3504 = vshrl.u32 %v3503, 7
        %v3505 = vsub.s32 1, %v3504
        %v3506 = vrot.slane %v3163, %v3505
        %v3507 = vlaneseq
        %v3508 = vshrl.u32 %v3507, 7
        %v3509 = vsub.s32 1, %v3508
        %v3510 = vrot.slane %v3171, %v3509
        %v3511 = vlaneseq
        %v3512 = vshrl.u32 %v3511, 7
        %v3513 = vsub.s32 1, %v3512
        %v3514 = vrot.slane %v3170, %v3513
        %v3515 = vlaneseq
        %v3516 = vshrl.u32 %v3515, 7
        %v3517 = vsub.s32 1, %v3516
        %v3518 = vrot.slane %v3172, %v3517
        %v3519 = vlaneseq
        %v3520 = vshrl.u32 %v3519, 7
        %v3521 = vsub.s32 1, %v3520
        %v3522 = vrot.slane %v3197, %v3521
        %v3523 = vlaneseq
        %v3524 = vshrl.u32 %v3523, 7
        %v3525 = vsub.s32 1, %v3524
        %v3526 = vrot.slane %v3205, %v3525
        %v3527 = vlaneseq
        %v3528 = vshrl.u32 %v3527, 7
        %v3529 = vsub.s32 1, %v3528
        %v3530 = vrot.slane %v3204, %v3529
        %v3531 = vlaneseq
        %v3532 = vshrl.u32 %v3531, 7
        %v3533 = vsub.s32 1, %v3532
        %v3534 = vrot.slane %v3206, %v3533
        %v3535 = vlaneseq
        %v3536 = vshrl.u32 %v3535, 7
        %v3537 = vsub.s32 1, %v3536
        %v3538 = vrot.slane %v3231, %v3537
        %v3539 = vlaneseq
        %v3540 = vshrl.u32 %v3539, 7
        %v3541 = vsub.s32 1, %v3540
        %v3542 = vrot.slane %v3239, %v3541
        %v3543 = vlaneseq
        %v3544 = vshrl.u32 %v3543, 7
        %v3545 = vsub.s32 1, %v3544
        %v3546 = vrot.slane %v3238, %v3545
        %v3547 = vlaneseq
        %v3548 = vshrl.u32 %v3547, 7
        %v3549 = vsub.s32 1, %v3548
        %v3550 = vrot.slane %v3240, %v3549
        %v3551 = vlaneseq
        %v3552 = vshrl.u32 %v3551, 7
        %v3553 = vsub.s32 1, %v3552
        %v3554 = vrot.slane %v3265, %v3553
        %v3555 = vlaneseq
        %v3556 = vshrl.u32 %v3555, 7
        %v3557 = vsub.s32 1, %v3556
        %v3558 = vrot.slane %v3273, %v3557
        %v3559 = vlaneseq
        %v3560 = vshrl.u32 %v3559, 7
        %v3561 = vsub.s32 1, %v3560
        %v3562 = vrot.slane %v3272, %v3561
        %v3563 = vlaneseq
        %v3564 = vshrl.u32 %v3563, 7
        %v3565 = vsub.s32 1, %v3564
        %v3566 = vrot.slane %v3274, %v3565
        %v3567 = vsel %vm1686, %v3510, %v3506
        %v3568 = vsel %vm1688, %v3514, %v3567
        %v3569 = vsel %vm1690, %v3518, %v3568
        %v3570 = vsel %vm1686, %v3526, %v3522
        %v3571 = vsel %vm1688, %v3530, %v3570
        %v3572 = vsel %vm1690, %v3534, %v3571
        %v3573 = vsel %vm1686, %v3542, %v3538
        %v3574 = vsel %vm1688, %v3546, %v3573
        %v3575 = vsel %vm1690, %v3550, %v3574
        %v3576 = vsel %vm1686, %v3558, %v3554
        %v3577 = vsel %vm1688, %v3562, %v3576
        %v3578 = vsel %vm1690, %v3566, %v3577
        %v3579 = vcombine.low %v3341, %v3417
        %v3580 = vcombine.low %v3493, %v3569
        %v3581 = vcombine.low %v3344, %v3420
        %v3582 = vcombine.low %v3496, %v3572
        %v3583 = vcombine.low %v3347, %v3423
        %v3584 = vcombine.low %v3499, %v3575
        %v3585 = vcombine.low %v3350, %v3426
        %v3586 = vcombine.low %v3502, %v3578
        %v3587 = vcombine.low %v3579, %v3581
        %v3588 = vcombine.high %v3579, %v3581
        %v3589 = vcombine.low %v3580, %v3582
        %v3590 = vcombine.high %v3580, %v3582
        %v3591 = vcombine.low %v3583, %v3585
        %v3592 = vcombine.high %v3583, %v3585
        %v3593 = vcombine.low %v3584, %v3586
        %v3594 = vcombine.high %v3584, %v3586
        %v3603 = vpack.c.bf16 %v3591, %v3587
        %v3604 = vpack.c.bf16 %v3592, %v3588
        %v3605 = vpack.c.bf16 %v3593, %v3589
        %v3606 = vpack.c.bf16 %v3594, %v3590
        %s3607 = scalar_lea.vmem [#allocation7], 256
        %v3608 = vld [vmem:[%s3607] sm:$0xf]
        %v3609 = vld [vmem:[%s3607 + $0x4] sm:$0xf]
        %v3610 = vld [vmem:[%s3607 + $0x8] sm:$0xf]
        %v3611 = vld [vmem:[%s3607 + $0xc] sm:$0xf]
        %v3612 = vld [vmem:[%s3607 + $0x10] sm:$0xf]
        %v3613 = vld [vmem:[%s3607 + $0x14] sm:$0xf]
        %v3614 = vld [vmem:[%s3607 + $0x18] sm:$0xf]
        %v3615 = vld [vmem:[%s3607 + $0x1c] sm:$0xf]
        %v3616 = vld [vmem:[%s3607 + $0x20] sm:$0xf]
        %v3617 = vld [vmem:[%s3607 + $0x24] sm:$0xf]
        %v3618 = vld [vmem:[%s3607 + $0x28] sm:$0xf]
        %v3619 = vld [vmem:[%s3607 + $0x2c] sm:$0xf]
        %v3620 = vld [vmem:[%s3607 + $0x30] sm:$0xf]
        %v3621 = vld [vmem:[%s3607 + $0x34] sm:$0xf]
        %v3622 = vld [vmem:[%s3607 + $0x38] sm:$0xf]
        %v3623 = vld [vmem:[%s3607 + $0x3c] sm:$0xf]
        %v3624 = vld [vmem:[%s3607 + $0x40] sm:$0xf]
        %v3625 = vld [vmem:[%s3607 + $0x44] sm:$0xf]
        %v3626 = vld [vmem:[%s3607 + $0x48] sm:$0xf]
        %v3627 = vld [vmem:[%s3607 + $0x4c] sm:$0xf]
        %v3628 = vld [vmem:[%s3607 + $0x50] sm:$0xf]
        %v3629 = vld [vmem:[%s3607 + $0x54] sm:$0xf]
        %v3630 = vld [vmem:[%s3607 + $0x58] sm:$0xf]
        %v3631 = vld [vmem:[%s3607 + $0x5c] sm:$0xf]
        %v3632 = vld [vmem:[%s3607 + $0x60] sm:$0xf]
        %v3633 = vld [vmem:[%s3607 + $0x64] sm:$0xf]
        %v3634 = vld [vmem:[%s3607 + $0x68] sm:$0xf]
        %v3635 = vld [vmem:[%s3607 + $0x6c] sm:$0xf]
        %v3636 = vld [vmem:[%s3607 + $0x70] sm:$0xf]
        %v3637 = vld [vmem:[%s3607 + $0x74] sm:$0xf]
        %v3638 = vld [vmem:[%s3607 + $0x78] sm:$0xf]
        %v3639 = vld [vmem:[%s3607 + $0x7c] sm:$0xf]
        %v3640 = vld [vmem:[%s3607 + $0x80] sm:$0xf]
        %v3641 = vld [vmem:[%s3607 + $0x84] sm:$0xf]
        %v3642 = vld [vmem:[%s3607 + $0x88] sm:$0xf]
        %v3643 = vld [vmem:[%s3607 + $0x8c] sm:$0xf]
        %v3644 = vld [vmem:[%s3607 + $0x90] sm:$0xf]
        %v3645 = vld [vmem:[%s3607 + $0x94] sm:$0xf]
        %v3646 = vld [vmem:[%s3607 + $0x98] sm:$0xf]
        %v3647 = vld [vmem:[%s3607 + $0x9c] sm:$0xf]
        %v3648 = vld [vmem:[%s3607 + $0xa0] sm:$0xf]
        %v3649 = vld [vmem:[%s3607 + $0xa4] sm:$0xf]
        %v3650 = vld [vmem:[%s3607 + $0xa8] sm:$0xf]
        %v3651 = vld [vmem:[%s3607 + $0xac] sm:$0xf]
        %v3652 = vld [vmem:[%s3607 + $0xb0] sm:$0xf]
        %v3653 = vld [vmem:[%s3607 + $0xb4] sm:$0xf]
        %v3654 = vld [vmem:[%s3607 + $0xb8] sm:$0xf]
        %v3655 = vld [vmem:[%s3607 + $0xbc] sm:$0xf]
        %v3656 = vld [vmem:[%s3607 + $0xc0] sm:$0xf]
        %v3657 = vld [vmem:[%s3607 + $0xc4] sm:$0xf]
        %v3658 = vld [vmem:[%s3607 + $0xc8] sm:$0xf]
        %v3659 = vld [vmem:[%s3607 + $0xcc] sm:$0xf]
        %v3660 = vld [vmem:[%s3607 + $0xd0] sm:$0xf]
        %v3661 = vld [vmem:[%s3607 + $0xd4] sm:$0xf]
        %v3662 = vld [vmem:[%s3607 + $0xd8] sm:$0xf]
        %v3663 = vld [vmem:[%s3607 + $0xdc] sm:$0xf]
        %v3664 = vld [vmem:[%s3607 + $0xe0] sm:$0xf]
        %v3665 = vld [vmem:[%s3607 + $0xe4] sm:$0xf]
        %v3666 = vld [vmem:[%s3607 + $0xe8] sm:$0xf]
        %v3667 = vld [vmem:[%s3607 + $0xec] sm:$0xf]
        %v3668 = vld [vmem:[%s3607 + $0xf0] sm:$0xf]
        %v3669 = vld [vmem:[%s3607 + $0xf4] sm:$0xf]
        %v3670 = vld [vmem:[%s3607 + $0xf8] sm:$0xf]
        %v3671 = vld [vmem:[%s3607 + $0xfc] sm:$0xf]
        %v3672 = vlaneseq
        %v3673 = vshrl.u32 %v3672, 7
        %v3674 = vsub.s32 2, %v3673
        %v3675 = vrot.slane %v300, %v3674
        %v3740 = vunpack.c.l.b16 %v3608
        %v3741 = vunpack.c.l.b16 %v3609
        %v3742 = vunpack.c.l.b16 %v3610
        %v3743 = vunpack.c.l.b16 %v3611
        %v3744 = vunpack.c.l.b16 %v3612
        %v3745 = vunpack.c.l.b16 %v3613
        %v3746 = vunpack.c.l.b16 %v3614
        %v3747 = vunpack.c.l.b16 %v3615
        %v3748 = vunpack.c.l.b16 %v3616
        %v3749 = vunpack.c.l.b16 %v3617
        %v3750 = vunpack.c.l.b16 %v3618
        %v3751 = vunpack.c.l.b16 %v3619
        %v3752 = vunpack.c.l.b16 %v3620
        %v3753 = vunpack.c.l.b16 %v3621
        %v3754 = vunpack.c.l.b16 %v3622
        %v3755 = vunpack.c.l.b16 %v3623
        %v3756 = vunpack.c.l.b16 %v3624
        %v3757 = vunpack.c.l.b16 %v3625
        %v3758 = vunpack.c.l.b16 %v3626
        %v3759 = vunpack.c.l.b16 %v3627
        %v3760 = vunpack.c.l.b16 %v3628
        %v3761 = vunpack.c.l.b16 %v3629
        %v3762 = vunpack.c.l.b16 %v3630
        %v3763 = vunpack.c.l.b16 %v3631
        %v3764 = vunpack.c.l.b16 %v3632
        %v3765 = vunpack.c.l.b16 %v3633
        %v3766 = vunpack.c.l.b16 %v3634
        %v3767 = vunpack.c.l.b16 %v3635
        %v3768 = vunpack.c.l.b16 %v3636
        %v3769 = vunpack.c.l.b16 %v3637
        %v3770 = vunpack.c.l.b16 %v3638
        %v3771 = vunpack.c.l.b16 %v3639
        %v3772 = vunpack.c.l.b16 %v3640
        %v3773 = vunpack.c.l.b16 %v3641
        %v3774 = vunpack.c.l.b16 %v3642
        %v3775 = vunpack.c.l.b16 %v3643
        %v3776 = vunpack.c.l.b16 %v3644
        %v3777 = vunpack.c.l.b16 %v3645
        %v3778 = vunpack.c.l.b16 %v3646
        %v3779 = vunpack.c.l.b16 %v3647
        %v3780 = vunpack.c.l.b16 %v3648
        %v3781 = vunpack.c.l.b16 %v3649
        %v3782 = vunpack.c.l.b16 %v3650
        %v3783 = vunpack.c.l.b16 %v3651
        %v3784 = vunpack.c.l.b16 %v3652
        %v3785 = vunpack.c.l.b16 %v3653
        %v3786 = vunpack.c.l.b16 %v3654
        %v3787 = vunpack.c.l.b16 %v3655
        %v3788 = vunpack.c.l.b16 %v3656
        %v3789 = vunpack.c.l.b16 %v3657
        %v3790 = vunpack.c.l.b16 %v3658
        %v3791 = vunpack.c.l.b16 %v3659
        %v3792 = vunpack.c.l.b16 %v3660
        %v3793 = vunpack.c.l.b16 %v3661
        %v3794 = vunpack.c.l.b16 %v3662
        %v3795 = vunpack.c.l.b16 %v3663
        %v3796 = vunpack.c.l.b16 %v3664
        %v3797 = vunpack.c.l.b16 %v3665
        %v3798 = vunpack.c.l.b16 %v3666
        %v3799 = vunpack.c.l.b16 %v3667
        %v3800 = vunpack.c.l.b16 %v3668
        %v3801 = vunpack.c.l.b16 %v3669
        %v3802 = vunpack.c.l.b16 %v3670
        %v3803 = vunpack.c.l.b16 %v3671
        %v3804 = vpack.c.b16 %v3741, %v3740
        %v3805 = vpack.c.b16 %v3743, %v3742
        %v3806 = vpack.c.b16 %v3745, %v3744
        %v3807 = vpack.c.b16 %v3747, %v3746
        %v3808 = vpack.c.b16 %v3749, %v3748
        %v3809 = vpack.c.b16 %v3751, %v3750
        %v3810 = vpack.c.b16 %v3753, %v3752
        %v3811 = vpack.c.b16 %v3755, %v3754
        %v3812 = vpack.c.b16 %v3757, %v3756
        %v3813 = vpack.c.b16 %v3759, %v3758
        %v3814 = vpack.c.b16 %v3761, %v3760
        %v3815 = vpack.c.b16 %v3763, %v3762
        %v3816 = vpack.c.b16 %v3765, %v3764
        %v3817 = vpack.c.b16 %v3767, %v3766
        %v3818 = vpack.c.b16 %v3769, %v3768
        %v3819 = vpack.c.b16 %v3771, %v3770
        %v3820 = vpack.c.b16 %v3773, %v3772
        %v3821 = vpack.c.b16 %v3775, %v3774
        %v3822 = vpack.c.b16 %v3777, %v3776
        %v3823 = vpack.c.b16 %v3779, %v3778
        %v3824 = vpack.c.b16 %v3781, %v3780
        %v3825 = vpack.c.b16 %v3783, %v3782
        %v3826 = vpack.c.b16 %v3785, %v3784
        %v3827 = vpack.c.b16 %v3787, %v3786
        %v3828 = vpack.c.b16 %v3789, %v3788
        %v3829 = vpack.c.b16 %v3791, %v3790
        %v3830 = vpack.c.b16 %v3793, %v3792
        %v3831 = vpack.c.b16 %v3795, %v3794
        %v3832 = vpack.c.b16 %v3797, %v3796
        %v3833 = vpack.c.b16 %v3799, %v3798
        %v3834 = vpack.c.b16 %v3801, %v3800
        %v3835 = vpack.c.b16 %v3803, %v3802
        %3868 = vmatprep.subr.bf16.mxu0 0
        %3869 = vmatpush1.bf16.msra.mxu0 %v3804
        %3870 = vmatprep.subr.bf16.mxu0 0
        %3871 = vmatpush1.bf16.msra.mxu0 %v3805
        %3872 = vmatprep.subr.bf16.mxu0 0
        %3873 = vmatpush1.bf16.msra.mxu0 %v3806
        %3874 = vmatprep.subr.bf16.mxu0 0
        %3875 = vmatpush1.bf16.msra.mxu0 %v3807
        %3876 = vmatprep.subr.bf16.mxu0 0
        %3877 = vmatpush1.bf16.msra.mxu0 %v3808
        %3878 = vmatprep.subr.bf16.mxu0 0
        %3879 = vmatpush1.bf16.msra.mxu0 %v3809
        %3880 = vmatprep.subr.bf16.mxu0 0
        %3881 = vmatpush1.bf16.msra.mxu0 %v3810
        %3882 = vmatprep.subr.bf16.mxu0 0
        %3883 = vmatpush1.bf16.msra.mxu0 %v3811
        %3884 = vmatprep.subr.bf16.mxu0 0
        %3885 = vmatpush1.bf16.msra.mxu0 %v3812
        %3886 = vmatprep.subr.bf16.mxu0 0
        %3887 = vmatpush1.bf16.msra.mxu0 %v3813
        %3888 = vmatprep.subr.bf16.mxu0 0
        %3889 = vmatpush1.bf16.msra.mxu0 %v3814
        %3890 = vmatprep.subr.bf16.mxu0 0
        %3891 = vmatpush1.bf16.msra.mxu0 %v3815
        %3892 = vmatprep.subr.bf16.mxu0 0
        %3893 = vmatpush1.bf16.msra.mxu0 %v3816
        %3894 = vmatprep.subr.bf16.mxu0 0
        %3895 = vmatpush1.bf16.msra.mxu0 %v3817
        %3896 = vmatprep.subr.bf16.mxu0 0
        %3897 = vmatpush1.bf16.msra.mxu0 %v3818
        %3898 = vmatprep.subr.bf16.mxu0 0
        %3899 = vmatpush1.bf16.msra.mxu0 %v3819
        %3900 = vmatprep.mubr.bf16.mxu0 %v3604
        %3901 = vmatmul.mubr.bf16.gmra.mrb[0].mxu0 %v3603
        %v3902 = vpop.f32.mrb[0].mxu0
        %v3903 = vadd.f32 %v3675, %v3902
        %v3904 = vpop.f32.mrb[0].mxu0
        %v3905 = vpop.f32.mrb[0].mxu0
        %v3906 = vadd.f32 %v3675, %v3905
        %v3907 = vpop.f32.mrb[0].mxu0
        %3908 = vdwg.mxu0
        %3909 = vmatprep.subr.bf16.mxu0 0
        %3910 = vmatpush1.bf16.msra.mxu0 %v3820
        %3911 = vmatprep.subr.bf16.mxu0 0
        %3912 = vmatpush1.bf16.msra.mxu0 %v3821
        %3913 = vmatprep.subr.bf16.mxu0 0
        %3914 = vmatpush1.bf16.msra.mxu0 %v3822
        %3915 = vmatprep.subr.bf16.mxu0 0
        %3916 = vmatpush1.bf16.msra.mxu0 %v3823
        %3917 = vmatprep.subr.bf16.mxu0 0
        %3918 = vmatpush1.bf16.msra.mxu0 %v3824
        %3919 = vmatprep.subr.bf16.mxu0 0
        %3920 = vmatpush1.bf16.msra.mxu0 %v3825
        %3921 = vmatprep.subr.bf16.mxu0 0
        %3922 = vmatpush1.bf16.msra.mxu0 %v3826
        %3923 = vmatprep.subr.bf16.mxu0 0
        %3924 = vmatpush1.bf16.msra.mxu0 %v3827
        %3925 = vmatprep.subr.bf16.mxu0 0
        %3926 = vmatpush1.bf16.msra.mxu0 %v3828
        %3927 = vmatprep.subr.bf16.mxu0 0
        %3928 = vmatpush1.bf16.msra.mxu0 %v3829
        %3929 = vmatprep.subr.bf16.mxu0 0
        %3930 = vmatpush1.bf16.msra.mxu0 %v3830
        %3931 = vmatprep.subr.bf16.mxu0 0
        %3932 = vmatpush1.bf16.msra.mxu0 %v3831
        %3933 = vmatprep.subr.bf16.mxu0 0
        %3934 = vmatpush1.bf16.msra.mxu0 %v3832
        %3935 = vmatprep.subr.bf16.mxu0 0
        %3936 = vmatpush1.bf16.msra.mxu0 %v3833
        %3937 = vmatprep.subr.bf16.mxu0 0
        %3938 = vmatpush1.bf16.msra.mxu0 %v3834
        %3939 = vmatprep.subr.bf16.mxu0 0
        %3940 = vmatpush1.bf16.msra.mxu0 %v3835
        %3941 = vmatprep.mubr.bf16.mxu0 %v3606
        %3942 = vmatmul.mubr.bf16.gmra.mrb[0].mxu0 %v3605
        %v3943 = vpop.f32.mrb[0].mxu0
        %v3944 = vadd.f32 %v3903, %v3943
        %v3945 = vpop.f32.mrb[0].mxu0
        %v3946 = vpop.f32.mrb[0].mxu0
        %v3947 = vadd.f32 %v3906, %v3946
        %v3948 = vpop.f32.mrb[0].mxu0
        %3949 = vdwg.mxu0
        %v3950 = vmax.f32 %v3944, 0.0
        %v3951 = vmax.f32 %v3947, 0.0
        %v3954 = vcombine.high %v3950, %v3950
        %v3956 = vunpack.c.l.s4 1983009808
        %v3957 = vunpack.c.0.s8 %v3956
        %v3958 = vlaneseq
        %v3959 = vshrl.u32 %v3958, 7
        %v3960 = vsub.s32 %v3957, %v3959
        %v3961 = vrot.slane %v3950, %v3960
        %v3963 = vunpack.c.l.s4 1983009808
        %v3964 = vunpack.c.0.s8 %v3963
        %v3965 = vlaneseq
        %v3966 = vshrl.u32 %v3965, 7
        %v3967 = vsub.s32 %v3964, %v3966
        %v3968 = vrot.slane %v3954, %v3967
        %v3969 = vcombine.high %v3961, %v3961
        %v3970 = vcombine.high %v3968, %v3968
        %v3971 = vcombine.high %v3951, %v3951
        %v3973 = vunpack.c.l.s4 1983009808
        %v3974 = vunpack.c.0.s8 %v3973
        %v3975 = vlaneseq
        %v3976 = vshrl.u32 %v3975, 7
        %v3977 = vsub.s32 %v3974, %v3976
        %v3978 = vrot.slane %v3951, %v3977
        %v3980 = vunpack.c.l.s4 1983009808
        %v3981 = vunpack.c.0.s8 %v3980
        %v3982 = vlaneseq
        %v3983 = vshrl.u32 %v3982, 7
        %v3984 = vsub.s32 %v3981, %v3983
        %v3985 = vrot.slane %v3971, %v3984
        %v3986 = vcombine.high %v3978, %v3978
        %v3987 = vcombine.high %v3985, %v3985
        %v3988 = vlaneseq
        %v3989 = vshrl.u32 %v3988, 7
        %v3990 = vsub.s32 0, %v3989
        %v3991 = vrot.slane %v3961, %v3990
        %v3992 = vlaneseq
        %v3993 = vshrl.u32 %v3992, 7
        %v3994 = vsub.s32 0, %v3993
        %v3995 = vrot.slane %v3969, %v3994
        %v3996 = vlaneseq
        %v3997 = vshrl.u32 %v3996, 7
        %v3998 = vsub.s32 0, %v3997
        %v3999 = vrot.slane %v3978, %v3998
        %v4000 = vlaneseq
        %v4001 = vshrl.u32 %v4000, 7
        %v4002 = vsub.s32 0, %v4001
        %v4003 = vrot.slane %v3986, %v4002
        %v4004 = vsel %vm1686, %v3995, %v3991
        %v4005 = vsel %vm1686, %v4003, %v3999
        %v4006 = vlaneseq
        %v4007 = vshrl.u32 %v4006, 7
        %v4008 = vsub.s32 1, %v4007
        %v4009 = vrot.slane %v3961, %v4008
        %v4010 = vlaneseq
        %v4011 = vshrl.u32 %v4010, 7
        %v4012 = vsub.s32 1, %v4011
        %v4013 = vrot.slane %v3969, %v4012
        %v4014 = vlaneseq
        %v4015 = vshrl.u32 %v4014, 7
        %v4016 = vsub.s32 1, %v4015
        %v4017 = vrot.slane %v3978, %v4016
        %v4018 = vlaneseq
        %v4019 = vshrl.u32 %v4018, 7
        %v4020 = vsub.s32 1, %v4019
        %v4021 = vrot.slane %v3986, %v4020
        %v4022 = vsel %vm1686, %v4013, %v4009
        %v4023 = vsel %vm1686, %v4021, %v4017
        %v4024 = vlaneseq
        %v4025 = vshrl.u32 %v4024, 7
        %v4026 = vsub.s32 0, %v4025
        %v4027 = vrot.slane %v3968, %v4026
        %v4028 = vlaneseq
        %v4029 = vshrl.u32 %v4028, 7
        %v4030 = vsub.s32 0, %v4029
        %v4031 = vrot.slane %v3970, %v4030
        %v4032 = vlaneseq
        %v4033 = vshrl.u32 %v4032, 7
        %v4034 = vsub.s32 0, %v4033
        %v4035 = vrot.slane %v3985, %v4034
        %v4036 = vlaneseq
        %v4037 = vshrl.u32 %v4036, 7
        %v4038 = vsub.s32 0, %v4037
        %v4039 = vrot.slane %v3987, %v4038
        %v4040 = vsel %vm1686, %v4031, %v4027
        %v4041 = vsel %vm1686, %v4039, %v4035
        %v4042 = vlaneseq
        %v4043 = vshrl.u32 %v4042, 7
        %v4044 = vsub.s32 1, %v4043
        %v4045 = vrot.slane %v3968, %v4044
        %v4046 = vlaneseq
        %v4047 = vshrl.u32 %v4046, 7
        %v4048 = vsub.s32 1, %v4047
        %v4049 = vrot.slane %v3970, %v4048
        %v4050 = vlaneseq
        %v4051 = vshrl.u32 %v4050, 7
        %v4052 = vsub.s32 1, %v4051
        %v4053 = vrot.slane %v3985, %v4052
        %v4054 = vlaneseq
        %v4055 = vshrl.u32 %v4054, 7
        %v4056 = vsub.s32 1, %v4055
        %v4057 = vrot.slane %v3987, %v4056
        %v4058 = vsel %vm1686, %v4049, %v4045
        %v4059 = vsel %vm1686, %v4057, %v4053
        %v4060 = vcombine.low %v4004, %v4022
        %v4061 = vcombine.low %v4040, %v4058
        %v4063 = vunpack.c.l.s4 1983009808
        %v4064 = vunpack.c.0.s8 %v4063
        %v4065 = vlaneseq
        %v4066 = vshrl.u32 %v4065, 7
        %v4067 = vsub.s32 %v4064, %v4066
        %v4068 = vrot.slane %v4060, %v4067
        %v4070 = vunpack.c.l.s4 1983009808
        %v4071 = vunpack.c.0.s8 %v4070
        %v4072 = vlaneseq
        %v4073 = vshrl.u32 %v4072, 7
        %v4074 = vsub.s32 %v4071, %v4073
        %v4075 = vrot.slane %v4061, %v4074
        %v4076 = vcombine.low %v4068, %v4075
        %v4077 = vcombine.low %v4005, %v4023
        %v4078 = vcombine.low %v4041, %v4059
        %v4080 = vunpack.c.l.s4 1983009808
        %v4081 = vunpack.c.0.s8 %v4080
        %v4082 = vlaneseq
        %v4083 = vshrl.u32 %v4082, 7
        %v4084 = vsub.s32 %v4081, %v4083
        %v4085 = vrot.slane %v4077, %v4084
        %v4087 = vunpack.c.l.s4 1983009808
        %v4088 = vunpack.c.0.s8 %v4087
        %v4089 = vlaneseq
        %v4090 = vshrl.u32 %v4089, 7
        %v4091 = vsub.s32 %v4088, %v4090
        %v4092 = vrot.slane %v4078, %v4091
        %v4093 = vcombine.low %v4085, %v4092
        %v4094 = vcombine.low %v4076, %v4093
        %v4095 = vcombine.high %v4076, %v4093
        %v4097 = vunpack.c.l.s4 1983009808
        %v4098 = vunpack.c.0.s8 %v4097
        %v4099 = vlaneseq
        %v4100 = vshrl.u32 %v4099, 7
        %v4101 = vsub.s32 %v4098, %v4100
        %v4102 = vrot.slane %v4094, %v4101
        %v4104 = vunpack.c.l.s4 1983009808
        %v4105 = vunpack.c.0.s8 %v4104
        %v4106 = vlaneseq
        %v4107 = vshrl.u32 %v4106, 7
        %v4108 = vsub.s32 %v4105, %v4107
        %v4109 = vrot.slane %v4095, %v4108
        %v4110 = vcombine.high %v4102, %v4102
        %v4111 = vcombine.high %v4109, %v4109
        %v4116 = vpack.c.bf16 %v4102, %v4102
        %v4117 = vpack.c.bf16 %v4110, %v4110
        %v4118 = vpack.c.bf16 %v4109, %v4109
        %v4119 = vpack.c.bf16 %v4111, %v4111
        %s4120 = scalar_lea.vmem [#allocation7], 512
        %v4121 = vld [vmem:[%s4120] sm:$0xf]
        %v4122 = vld [vmem:[%s4120 + $0x4] sm:$0xf]
        %v4123 = vld [vmem:[%s4120 + $0x8] sm:$0xf]
        %v4124 = vld [vmem:[%s4120 + $0xc] sm:$0xf]
        %v4125 = vld [vmem:[%s4120 + $0x10] sm:$0xf]
        %v4126 = vld [vmem:[%s4120 + $0x14] sm:$0xf]
        %v4127 = vld [vmem:[%s4120 + $0x18] sm:$0xf]
        %v4128 = vld [vmem:[%s4120 + $0x1c] sm:$0xf]
        %v4129 = vld [vmem:[%s4120 + $0x20] sm:$0xf]
        %v4130 = vld [vmem:[%s4120 + $0x24] sm:$0xf]
        %v4131 = vld [vmem:[%s4120 + $0x28] sm:$0xf]
        %v4132 = vld [vmem:[%s4120 + $0x2c] sm:$0xf]
        %v4133 = vld [vmem:[%s4120 + $0x30] sm:$0xf]
        %v4134 = vld [vmem:[%s4120 + $0x34] sm:$0xf]
        %v4135 = vld [vmem:[%s4120 + $0x38] sm:$0xf]
        %v4136 = vld [vmem:[%s4120 + $0x3c] sm:$0xf]
        %v4137 = vld [vmem:[%s4120 + $0x40] sm:$0xf]
        %v4138 = vld [vmem:[%s4120 + $0x44] sm:$0xf]
        %v4139 = vld [vmem:[%s4120 + $0x48] sm:$0xf]
        %v4140 = vld [vmem:[%s4120 + $0x4c] sm:$0xf]
        %v4141 = vld [vmem:[%s4120 + $0x50] sm:$0xf]
        %v4142 = vld [vmem:[%s4120 + $0x54] sm:$0xf]
        %v4143 = vld [vmem:[%s4120 + $0x58] sm:$0xf]
        %v4144 = vld [vmem:[%s4120 + $0x5c] sm:$0xf]
        %v4145 = vld [vmem:[%s4120 + $0x60] sm:$0xf]
        %v4146 = vld [vmem:[%s4120 + $0x64] sm:$0xf]
        %v4147 = vld [vmem:[%s4120 + $0x68] sm:$0xf]
        %v4148 = vld [vmem:[%s4120 + $0x6c] sm:$0xf]
        %v4149 = vld [vmem:[%s4120 + $0x70] sm:$0xf]
        %v4150 = vld [vmem:[%s4120 + $0x74] sm:$0xf]
        %v4151 = vld [vmem:[%s4120 + $0x78] sm:$0xf]
        %v4152 = vld [vmem:[%s4120 + $0x7c] sm:$0xf]
        %v4153 = vld [vmem:[%s4120 + $0x80] sm:$0xf]
        %v4154 = vld [vmem:[%s4120 + $0x84] sm:$0xf]
        %v4155 = vld [vmem:[%s4120 + $0x88] sm:$0xf]
        %v4156 = vld [vmem:[%s4120 + $0x8c] sm:$0xf]
        %v4157 = vld [vmem:[%s4120 + $0x90] sm:$0xf]
        %v4158 = vld [vmem:[%s4120 + $0x94] sm:$0xf]
        %v4159 = vld [vmem:[%s4120 + $0x98] sm:$0xf]
        %v4160 = vld [vmem:[%s4120 + $0x9c] sm:$0xf]
        %v4161 = vld [vmem:[%s4120 + $0xa0] sm:$0xf]
        %v4162 = vld [vmem:[%s4120 + $0xa4] sm:$0xf]
        %v4163 = vld [vmem:[%s4120 + $0xa8] sm:$0xf]
        %v4164 = vld [vmem:[%s4120 + $0xac] sm:$0xf]
        %v4165 = vld [vmem:[%s4120 + $0xb0] sm:$0xf]
        %v4166 = vld [vmem:[%s4120 + $0xb4] sm:$0xf]
        %v4167 = vld [vmem:[%s4120 + $0xb8] sm:$0xf]
        %v4168 = vld [vmem:[%s4120 + $0xbc] sm:$0xf]
        %v4169 = vld [vmem:[%s4120 + $0xc0] sm:$0xf]
        %v4170 = vld [vmem:[%s4120 + $0xc4] sm:$0xf]
        %v4171 = vld [vmem:[%s4120 + $0xc8] sm:$0xf]
        %v4172 = vld [vmem:[%s4120 + $0xcc] sm:$0xf]
        %v4173 = vld [vmem:[%s4120 + $0xd0] sm:$0xf]
        %v4174 = vld [vmem:[%s4120 + $0xd4] sm:$0xf]
        %v4175 = vld [vmem:[%s4120 + $0xd8] sm:$0xf]
        %v4176 = vld [vmem:[%s4120 + $0xdc] sm:$0xf]
        %v4177 = vld [vmem:[%s4120 + $0xe0] sm:$0xf]
        %v4178 = vld [vmem:[%s4120 + $0xe4] sm:$0xf]
        %v4179 = vld [vmem:[%s4120 + $0xe8] sm:$0xf]
        %v4180 = vld [vmem:[%s4120 + $0xec] sm:$0xf]
        %v4181 = vld [vmem:[%s4120 + $0xf0] sm:$0xf]
        %v4182 = vld [vmem:[%s4120 + $0xf4] sm:$0xf]
        %v4183 = vld [vmem:[%s4120 + $0xf8] sm:$0xf]
        %v4184 = vld [vmem:[%s4120 + $0xfc] sm:$0xf]
        %v4185 = vlaneseq
        %v4186 = vshrl.u32 %v4185, 7
        %v4187 = vsub.s32 3, %v4186
        %v4188 = vrot.slane %v300, %v4187
        %v4253 = vunpack.c.l.b16 %v4121
        %v4254 = vunpack.c.l.b16 %v4122
        %v4255 = vunpack.c.l.b16 %v4123
        %v4256 = vunpack.c.l.b16 %v4124
        %v4257 = vunpack.c.l.b16 %v4125
        %v4258 = vunpack.c.l.b16 %v4126
        %v4259 = vunpack.c.l.b16 %v4127
        %v4260 = vunpack.c.l.b16 %v4128
        %v4261 = vunpack.c.l.b16 %v4129
        %v4262 = vunpack.c.l.b16 %v4130
        %v4263 = vunpack.c.l.b16 %v4131
        %v4264 = vunpack.c.l.b16 %v4132
        %v4265 = vunpack.c.l.b16 %v4133
        %v4266 = vunpack.c.l.b16 %v4134
        %v4267 = vunpack.c.l.b16 %v4135
        %v4268 = vunpack.c.l.b16 %v4136
        %v4269 = vunpack.c.l.b16 %v4137
        %v4270 = vunpack.c.l.b16 %v4138
        %v4271 = vunpack.c.l.b16 %v4139
        %v4272 = vunpack.c.l.b16 %v4140
        %v4273 = vunpack.c.l.b16 %v4141
        %v4274 = vunpack.c.l.b16 %v4142
        %v4275 = vunpack.c.l.b16 %v4143
        %v4276 = vunpack.c.l.b16 %v4144
        %v4277 = vunpack.c.l.b16 %v4145
        %v4278 = vunpack.c.l.b16 %v4146
        %v4279 = vunpack.c.l.b16 %v4147
        %v4280 = vunpack.c.l.b16 %v4148
        %v4281 = vunpack.c.l.b16 %v4149
        %v4282 = vunpack.c.l.b16 %v4150
        %v4283 = vunpack.c.l.b16 %v4151
        %v4284 = vunpack.c.l.b16 %v4152
        %v4285 = vunpack.c.l.b16 %v4153
        %v4286 = vunpack.c.l.b16 %v4154
        %v4287 = vunpack.c.l.b16 %v4155
        %v4288 = vunpack.c.l.b16 %v4156
        %v4289 = vunpack.c.l.b16 %v4157
        %v4290 = vunpack.c.l.b16 %v4158
        %v4291 = vunpack.c.l.b16 %v4159
        %v4292 = vunpack.c.l.b16 %v4160
        %v4293 = vunpack.c.l.b16 %v4161
        %v4294 = vunpack.c.l.b16 %v4162
        %v4295 = vunpack.c.l.b16 %v4163
        %v4296 = vunpack.c.l.b16 %v4164
        %v4297 = vunpack.c.l.b16 %v4165
        %v4298 = vunpack.c.l.b16 %v4166
        %v4299 = vunpack.c.l.b16 %v4167
        %v4300 = vunpack.c.l.b16 %v4168
        %v4301 = vunpack.c.l.b16 %v4169
        %v4302 = vunpack.c.l.b16 %v4170
        %v4303 = vunpack.c.l.b16 %v4171
        %v4304 = vunpack.c.l.b16 %v4172
        %v4305 = vunpack.c.l.b16 %v4173
        %v4306 = vunpack.c.l.b16 %v4174
        %v4307 = vunpack.c.l.b16 %v4175
        %v4308 = vunpack.c.l.b16 %v4176
        %v4309 = vunpack.c.l.b16 %v4177
        %v4310 = vunpack.c.l.b16 %v4178
        %v4311 = vunpack.c.l.b16 %v4179
        %v4312 = vunpack.c.l.b16 %v4180
        %v4313 = vunpack.c.l.b16 %v4181
        %v4314 = vunpack.c.l.b16 %v4182
        %v4315 = vunpack.c.l.b16 %v4183
        %v4316 = vunpack.c.l.b16 %v4184
        %v4317 = vpack.c.b16 %v4254, %v4253
        %v4318 = vpack.c.b16 %v4256, %v4255
        %v4319 = vpack.c.b16 %v4258, %v4257
        %v4320 = vpack.c.b16 %v4260, %v4259
        %v4321 = vpack.c.b16 %v4262, %v4261
        %v4322 = vpack.c.b16 %v4264, %v4263
        %v4323 = vpack.c.b16 %v4266, %v4265
        %v4324 = vpack.c.b16 %v4268, %v4267
        %v4325 = vpack.c.b16 %v4270, %v4269
        %v4326 = vpack.c.b16 %v4272, %v4271
        %v4327 = vpack.c.b16 %v4274, %v4273
        %v4328 = vpack.c.b16 %v4276, %v4275
        %v4329 = vpack.c.b16 %v4278, %v4277
        %v4330 = vpack.c.b16 %v4280, %v4279
        %v4331 = vpack.c.b16 %v4282, %v4281
        %v4332 = vpack.c.b16 %v4284, %v4283
        %v4333 = vpack.c.b16 %v4286, %v4285
        %v4334 = vpack.c.b16 %v4288, %v4287
        %v4335 = vpack.c.b16 %v4290, %v4289
        %v4336 = vpack.c.b16 %v4292, %v4291
        %v4337 = vpack.c.b16 %v4294, %v4293
        %v4338 = vpack.c.b16 %v4296, %v4295
        %v4339 = vpack.c.b16 %v4298, %v4297
        %v4340 = vpack.c.b16 %v4300, %v4299
        %v4341 = vpack.c.b16 %v4302, %v4301
        %v4342 = vpack.c.b16 %v4304, %v4303
        %v4343 = vpack.c.b16 %v4306, %v4305
        %v4344 = vpack.c.b16 %v4308, %v4307
        %v4345 = vpack.c.b16 %v4310, %v4309
        %v4346 = vpack.c.b16 %v4312, %v4311
        %v4347 = vpack.c.b16 %v4314, %v4313
        %v4348 = vpack.c.b16 %v4316, %v4315
        %4381 = vmatprep.subr.bf16.mxu0 0
        %4382 = vmatpush1.bf16.msra.mxu0 %v4317
        %4383 = vmatprep.subr.bf16.mxu0 0
        %4384 = vmatpush1.bf16.msra.mxu0 %v4318
        %4385 = vmatprep.subr.bf16.mxu0 0
        %4386 = vmatpush1.bf16.msra.mxu0 %v4319
        %4387 = vmatprep.subr.bf16.mxu0 0
        %4388 = vmatpush1.bf16.msra.mxu0 %v4320
        %4389 = vmatprep.subr.bf16.mxu0 0
        %4390 = vmatpush1.bf16.msra.mxu0 %v4321
        %4391 = vmatprep.subr.bf16.mxu0 0
        %4392 = vmatpush1.bf16.msra.mxu0 %v4322
        %4393 = vmatprep.subr.bf16.mxu0 0
        %4394 = vmatpush1.bf16.msra.mxu0 %v4323
        %4395 = vmatprep.subr.bf16.mxu0 0
        %4396 = vmatpush1.bf16.msra.mxu0 %v4324
        %4397 = vmatprep.subr.bf16.mxu0 0
        %4398 = vmatpush1.bf16.msra.mxu0 %v4325
        %4399 = vmatprep.subr.bf16.mxu0 0
        %4400 = vmatpush1.bf16.msra.mxu0 %v4326
        %4401 = vmatprep.subr.bf16.mxu0 0
        %4402 = vmatpush1.bf16.msra.mxu0 %v4327
        %4403 = vmatprep.subr.bf16.mxu0 0
        %4404 = vmatpush1.bf16.msra.mxu0 %v4328
        %4405 = vmatprep.subr.bf16.mxu0 0
        %4406 = vmatpush1.bf16.msra.mxu0 %v4329
        %4407 = vmatprep.subr.bf16.mxu0 0
        %4408 = vmatpush1.bf16.msra.mxu0 %v4330
        %4409 = vmatprep.subr.bf16.mxu0 0
        %4410 = vmatpush1.bf16.msra.mxu0 %v4331
        %4411 = vmatprep.subr.bf16.mxu0 0
        %4412 = vmatpush1.bf16.msra.mxu0 %v4332
        %4413 = vmatprep.mubr.bf16.mxu0 %v4117
        %4414 = vmatmul.mubr.bf16.gmra.mrb[0].mxu0 %v4116
        %v4415 = vpop.f32.mrb[0].mxu0
        %v4416 = vadd.f32 %v4188, %v4415
        %v4417 = vpop.f32.mrb[0].mxu0
        %v4418 = vpop.f32.mrb[0].mxu0
        %v4419 = vpop.f32.mrb[0].mxu0
        %4420 = vdwg.mxu0
        %4421 = vmatprep.subr.bf16.mxu0 0
        %4422 = vmatpush1.bf16.msra.mxu0 %v4333
        %4423 = vmatprep.subr.bf16.mxu0 0
        %4424 = vmatpush1.bf16.msra.mxu0 %v4334
        %4425 = vmatprep.subr.bf16.mxu0 0
        %4426 = vmatpush1.bf16.msra.mxu0 %v4335
        %4427 = vmatprep.subr.bf16.mxu0 0
        %4428 = vmatpush1.bf16.msra.mxu0 %v4336
        %4429 = vmatprep.subr.bf16.mxu0 0
        %4430 = vmatpush1.bf16.msra.mxu0 %v4337
        %4431 = vmatprep.subr.bf16.mxu0 0
        %4432 = vmatpush1.bf16.msra.mxu0 %v4338
        %4433 = vmatprep.subr.bf16.mxu0 0
        %4434 = vmatpush1.bf16.msra.mxu0 %v4339
        %4435 = vmatprep.subr.bf16.mxu0 0
        %4436 = vmatpush1.bf16.msra.mxu0 %v4340
        %4437 = vmatprep.subr.bf16.mxu0 0
        %4438 = vmatpush1.bf16.msra.mxu0 %v4341
        %4439 = vmatprep.subr.bf16.mxu0 0
        %4440 = vmatpush1.bf16.msra.mxu0 %v4342
        %4441 = vmatprep.subr.bf16.mxu0 0
        %4442 = vmatpush1.bf16.msra.mxu0 %v4343
        %4443 = vmatprep.subr.bf16.mxu0 0
        %4444 = vmatpush1.bf16.msra.mxu0 %v4344
        %4445 = vmatprep.subr.bf16.mxu0 0
        %4446 = vmatpush1.bf16.msra.mxu0 %v4345
        %4447 = vmatprep.subr.bf16.mxu0 0
        %4448 = vmatpush1.bf16.msra.mxu0 %v4346
        %4449 = vmatprep.subr.bf16.mxu0 0
        %4450 = vmatpush1.bf16.msra.mxu0 %v4347
        %4451 = vmatprep.subr.bf16.mxu0 0
        %4452 = vmatpush1.bf16.msra.mxu0 %v4348
        %4453 = vmatprep.mubr.bf16.mxu0 %v4119
        %4454 = vmatmul.mubr.bf16.gmra.mrb[0].mxu0 %v4118
        %v4455 = vpop.f32.mrb[0].mxu0
        %v4456 = vadd.f32 %v4416, %v4455
        %v4457 = vpop.f32.mrb[0].mxu0
        %v4458 = vpop.f32.mrb[0].mxu0
        %v4459 = vpop.f32.mrb[0].mxu0
        %4460 = vdwg.mxu0
        %v4461 = vmax.f32 %v4456, 0.0
        %v4463 = vrot.slane %v4461, 1
        %v4465 = vrot.slane %v4461, 2
        %v4467 = vrot.slane %v4461, 3
        %v4469 = vpack.c.bf16 %v4461, %v4461
        %v4470 = vpack.c.bf16 %v4463, %v4463
        %v4471 = vpack.c.bf16 %v4465, %v4465
        %v4472 = vpack.c.bf16 %v4467, %v4467
        %s4473 = scalar_lea.vmem [#allocation7], 768
        %v4474 = vld [vmem:[%s4473] sm:$0xf]
        %v4475 = vld [vmem:[%s4473 + $0x4] sm:$0xf]
        %v4476 = vld [vmem:[%s4473 + $0x8] sm:$0xf]
        %v4477 = vld [vmem:[%s4473 + $0xc] sm:$0xf]
        %v4478 = vld [vmem:[%s4473 + $0x10] sm:$0xf]
        %v4479 = vld [vmem:[%s4473 + $0x14] sm:$0xf]
        %v4480 = vld [vmem:[%s4473 + $0x18] sm:$0xf]
        %v4481 = vld [vmem:[%s4473 + $0x1c] sm:$0xf]
        %v4482 = vld [vmem:[%s4473 + $0x20] sm:$0xf]
        %v4483 = vld [vmem:[%s4473 + $0x24] sm:$0xf]
        %v4484 = vld [vmem:[%s4473 + $0x28] sm:$0xf]
        %v4485 = vld [vmem:[%s4473 + $0x2c] sm:$0xf]
        %v4486 = vld [vmem:[%s4473 + $0x30] sm:$0xf]
        %v4487 = vld [vmem:[%s4473 + $0x34] sm:$0xf]
        %v4488 = vld [vmem:[%s4473 + $0x38] sm:$0xf]
        %v4489 = vld [vmem:[%s4473 + $0x3c] sm:$0xf]
        %v4490 = vld [vmem:[%s4473 + $0x40] sm:$0xf]
        %v4491 = vld [vmem:[%s4473 + $0x44] sm:$0xf]
        %v4492 = vld [vmem:[%s4473 + $0x48] sm:$0xf]
        %v4493 = vld [vmem:[%s4473 + $0x4c] sm:$0xf]
        %v4494 = vld [vmem:[%s4473 + $0x50] sm:$0xf]
        %v4495 = vld [vmem:[%s4473 + $0x54] sm:$0xf]
        %v4496 = vld [vmem:[%s4473 + $0x58] sm:$0xf]
        %v4497 = vld [vmem:[%s4473 + $0x5c] sm:$0xf]
        %v4498 = vld [vmem:[%s4473 + $0x60] sm:$0xf]
        %v4499 = vld [vmem:[%s4473 + $0x64] sm:$0xf]
        %v4500 = vld [vmem:[%s4473 + $0x68] sm:$0xf]
        %v4501 = vld [vmem:[%s4473 + $0x6c] sm:$0xf]
        %v4502 = vld [vmem:[%s4473 + $0x70] sm:$0xf]
        %v4503 = vld [vmem:[%s4473 + $0x74] sm:$0xf]
        %v4504 = vld [vmem:[%s4473 + $0x78] sm:$0xf]
        %v4505 = vld [vmem:[%s4473 + $0x7c] sm:$0xf]
        %v4506 = vld [vmem:[%s4473 + $0x80] sm:$0xf]
        %v4507 = vld [vmem:[%s4473 + $0x84] sm:$0xf]
        %v4508 = vld [vmem:[%s4473 + $0x88] sm:$0xf]
        %v4509 = vld [vmem:[%s4473 + $0x8c] sm:$0xf]
        %v4510 = vld [vmem:[%s4473 + $0x90] sm:$0xf]
        %v4511 = vld [vmem:[%s4473 + $0x94] sm:$0xf]
        %v4512 = vld [vmem:[%s4473 + $0x98] sm:$0xf]
        %v4513 = vld [vmem:[%s4473 + $0x9c] sm:$0xf]
        %v4514 = vld [vmem:[%s4473 + $0xa0] sm:$0xf]
        %v4515 = vld [vmem:[%s4473 + $0xa4] sm:$0xf]
        %v4516 = vld [vmem:[%s4473 + $0xa8] sm:$0xf]
        %v4517 = vld [vmem:[%s4473 + $0xac] sm:$0xf]
        %v4518 = vld [vmem:[%s4473 + $0xb0] sm:$0xf]
        %v4519 = vld [vmem:[%s4473 + $0xb4] sm:$0xf]
        %v4520 = vld [vmem:[%s4473 + $0xb8] sm:$0xf]
        %v4521 = vld [vmem:[%s4473 + $0xbc] sm:$0xf]
        %v4522 = vld [vmem:[%s4473 + $0xc0] sm:$0xf]
        %v4523 = vld [vmem:[%s4473 + $0xc4] sm:$0xf]
        %v4524 = vld [vmem:[%s4473 + $0xc8] sm:$0xf]
        %v4525 = vld [vmem:[%s4473 + $0xcc] sm:$0xf]
        %v4526 = vld [vmem:[%s4473 + $0xd0] sm:$0xf]
        %v4527 = vld [vmem:[%s4473 + $0xd4] sm:$0xf]
        %v4528 = vld [vmem:[%s4473 + $0xd8] sm:$0xf]
        %v4529 = vld [vmem:[%s4473 + $0xdc] sm:$0xf]
        %v4530 = vld [vmem:[%s4473 + $0xe0] sm:$0xf]
        %v4531 = vld [vmem:[%s4473 + $0xe4] sm:$0xf]
        %v4532 = vld [vmem:[%s4473 + $0xe8] sm:$0xf]
        %v4533 = vld [vmem:[%s4473 + $0xec] sm:$0xf]
        %v4534 = vld [vmem:[%s4473 + $0xf0] sm:$0xf]
        %v4535 = vld [vmem:[%s4473 + $0xf4] sm:$0xf]
        %v4536 = vld [vmem:[%s4473 + $0xf8] sm:$0xf]
        %v4537 = vld [vmem:[%s4473 + $0xfc] sm:$0xf]
        %v4602 = vunpack.c.l.b16 %v4474
        %v4603 = vunpack.c.l.b16 %v4475
        %v4604 = vunpack.c.l.b16 %v4476
        %v4605 = vunpack.c.l.b16 %v4477
        %v4606 = vunpack.c.l.b16 %v4478
        %v4607 = vunpack.c.l.b16 %v4479
        %v4608 = vunpack.c.l.b16 %v4480
        %v4609 = vunpack.c.l.b16 %v4481
        %v4610 = vunpack.c.l.b16 %v4482
        %v4611 = vunpack.c.l.b16 %v4483
        %v4612 = vunpack.c.l.b16 %v4484
        %v4613 = vunpack.c.l.b16 %v4485
        %v4614 = vunpack.c.l.b16 %v4486
        %v4615 = vunpack.c.l.b16 %v4487
        %v4616 = vunpack.c.l.b16 %v4488
        %v4617 = vunpack.c.l.b16 %v4489
        %v4618 = vunpack.c.l.b16 %v4490
        %v4619 = vunpack.c.l.b16 %v4491
        %v4620 = vunpack.c.l.b16 %v4492
        %v4621 = vunpack.c.l.b16 %v4493
        %v4622 = vunpack.c.l.b16 %v4494
        %v4623 = vunpack.c.l.b16 %v4495
        %v4624 = vunpack.c.l.b16 %v4496
        %v4625 = vunpack.c.l.b16 %v4497
        %v4626 = vunpack.c.l.b16 %v4498
        %v4627 = vunpack.c.l.b16 %v4499
        %v4628 = vunpack.c.l.b16 %v4500
        %v4629 = vunpack.c.l.b16 %v4501
        %v4630 = vunpack.c.l.b16 %v4502
        %v4631 = vunpack.c.l.b16 %v4503
        %v4632 = vunpack.c.l.b16 %v4504
        %v4633 = vunpack.c.l.b16 %v4505
        %v4634 = vunpack.c.l.b16 %v4506
        %v4635 = vunpack.c.l.b16 %v4507
        %v4636 = vunpack.c.l.b16 %v4508
        %v4637 = vunpack.c.l.b16 %v4509
        %v4638 = vunpack.c.l.b16 %v4510
        %v4639 = vunpack.c.l.b16 %v4511
        %v4640 = vunpack.c.l.b16 %v4512
        %v4641 = vunpack.c.l.b16 %v4513
        %v4642 = vunpack.c.l.b16 %v4514
        %v4643 = vunpack.c.l.b16 %v4515
        %v4644 = vunpack.c.l.b16 %v4516
        %v4645 = vunpack.c.l.b16 %v4517
        %v4646 = vunpack.c.l.b16 %v4518
        %v4647 = vunpack.c.l.b16 %v4519
        %v4648 = vunpack.c.l.b16 %v4520
        %v4649 = vunpack.c.l.b16 %v4521
        %v4650 = vunpack.c.l.b16 %v4522
        %v4651 = vunpack.c.l.b16 %v4523
        %v4652 = vunpack.c.l.b16 %v4524
        %v4653 = vunpack.c.l.b16 %v4525
        %v4654 = vunpack.c.l.b16 %v4526
        %v4655 = vunpack.c.l.b16 %v4527
        %v4656 = vunpack.c.l.b16 %v4528
        %v4657 = vunpack.c.l.b16 %v4529
        %v4658 = vunpack.c.l.b16 %v4530
        %v4659 = vunpack.c.l.b16 %v4531
        %v4660 = vunpack.c.l.b16 %v4532
        %v4661 = vunpack.c.l.b16 %v4533
        %v4662 = vunpack.c.l.b16 %v4534
        %v4663 = vunpack.c.l.b16 %v4535
        %v4664 = vunpack.c.l.b16 %v4536
        %v4665 = vunpack.c.l.b16 %v4537
        %v4666 = vpack.c.b16 %v4603, %v4602
        %v4667 = vpack.c.b16 %v4605, %v4604
        %v4668 = vpack.c.b16 %v4607, %v4606
        %v4669 = vpack.c.b16 %v4609, %v4608
        %v4670 = vpack.c.b16 %v4611, %v4610
        %v4671 = vpack.c.b16 %v4613, %v4612
        %v4672 = vpack.c.b16 %v4615, %v4614
        %v4673 = vpack.c.b16 %v4617, %v4616
        %v4674 = vpack.c.b16 %v4619, %v4618
        %v4675 = vpack.c.b16 %v4621, %v4620
        %v4676 = vpack.c.b16 %v4623, %v4622
        %v4677 = vpack.c.b16 %v4625, %v4624
        %v4678 = vpack.c.b16 %v4627, %v4626
        %v4679 = vpack.c.b16 %v4629, %v4628
        %v4680 = vpack.c.b16 %v4631, %v4630
        %v4681 = vpack.c.b16 %v4633, %v4632
        %v4682 = vpack.c.b16 %v4635, %v4634
        %v4683 = vpack.c.b16 %v4637, %v4636
        %v4684 = vpack.c.b16 %v4639, %v4638
        %v4685 = vpack.c.b16 %v4641, %v4640
        %v4686 = vpack.c.b16 %v4643, %v4642
        %v4687 = vpack.c.b16 %v4645, %v4644
        %v4688 = vpack.c.b16 %v4647, %v4646
        %v4689 = vpack.c.b16 %v4649, %v4648
        %v4690 = vpack.c.b16 %v4651, %v4650
        %v4691 = vpack.c.b16 %v4653, %v4652
        %v4692 = vpack.c.b16 %v4655, %v4654
        %v4693 = vpack.c.b16 %v4657, %v4656
        %v4694 = vpack.c.b16 %v4659, %v4658
        %v4695 = vpack.c.b16 %v4661, %v4660
        %v4696 = vpack.c.b16 %v4663, %v4662
        %v4697 = vpack.c.b16 %v4665, %v4664
        %v4731 = vrot.slane %v300, 4
        %4733 = vmatprep.subr.bf16.mxu0 0
        %4734 = vmatpush1.bf16.msra.mxu0 %v4666
        %4735 = vmatprep.subr.bf16.mxu0 0
        %4736 = vmatpush1.bf16.msra.mxu0 %v4667
        %4737 = vmatprep.subr.bf16.mxu0 0
        %4738 = vmatpush1.bf16.msra.mxu0 %v4668
        %4739 = vmatprep.subr.bf16.mxu0 0
        %4740 = vmatpush1.bf16.msra.mxu0 %v4669
        %4741 = vmatprep.subr.bf16.mxu0 0
        %4742 = vmatpush1.bf16.msra.mxu0 %v4670
        %4743 = vmatprep.subr.bf16.mxu0 0
        %4744 = vmatpush1.bf16.msra.mxu0 %v4671
        %4745 = vmatprep.subr.bf16.mxu0 0
        %4746 = vmatpush1.bf16.msra.mxu0 %v4672
        %4747 = vmatprep.subr.bf16.mxu0 0
        %4748 = vmatpush1.bf16.msra.mxu0 %v4673
        %4749 = vmatprep.subr.bf16.mxu0 0
        %4750 = vmatpush1.bf16.msra.mxu0 %v4674
        %4751 = vmatprep.subr.bf16.mxu0 0
        %4752 = vmatpush1.bf16.msra.mxu0 %v4675
        %4753 = vmatprep.subr.bf16.mxu0 0
        %4754 = vmatpush1.bf16.msra.mxu0 %v4676
        %4755 = vmatprep.subr.bf16.mxu0 0
        %4756 = vmatpush1.bf16.msra.mxu0 %v4677
        %4757 = vmatprep.subr.bf16.mxu0 0
        %4758 = vmatpush1.bf16.msra.mxu0 %v4678
        %4759 = vmatprep.subr.bf16.mxu0 0
        %4760 = vmatpush1.bf16.msra.mxu0 %v4679
        %4761 = vmatprep.subr.bf16.mxu0 0
        %4762 = vmatpush1.bf16.msra.mxu0 %v4680
        %4763 = vmatprep.subr.bf16.mxu0 0
        %4764 = vmatpush1.bf16.msra.mxu0 %v4681
        %4765 = vmatprep.mubr.bf16.mxu0 %v4470
        %4766 = vmatmul.mubr.bf16.gmra.mrb[0].mxu0 %v4469
        %v4767 = vpop.f32.mrb[0].mxu0
        %v4768 = vadd.f32 %v4731, %v4767
        %v4769 = vpop.f32.mrb[0].mxu0
        %v4770 = vpop.f32.mrb[0].mxu0
        %v4771 = vpop.f32.mrb[0].mxu0
        %4772 = vdwg.mxu0
        %4773 = vmatprep.subr.bf16.mxu0 0
        %4774 = vmatpush1.bf16.msra.mxu0 %v4682
        %4775 = vmatprep.subr.bf16.mxu0 0
        %4776 = vmatpush1.bf16.msra.mxu0 %v4683
        %4777 = vmatprep.subr.bf16.mxu0 0
        %4778 = vmatpush1.bf16.msra.mxu0 %v4684
        %4779 = vmatprep.subr.bf16.mxu0 0
        %4780 = vmatpush1.bf16.msra.mxu0 %v4685
        %4781 = vmatprep.subr.bf16.mxu0 0
        %4782 = vmatpush1.bf16.msra.mxu0 %v4686
        %4783 = vmatprep.subr.bf16.mxu0 0
        %4784 = vmatpush1.bf16.msra.mxu0 %v4687
        %4785 = vmatprep.subr.bf16.mxu0 0
        %4786 = vmatpush1.bf16.msra.mxu0 %v4688
        %4787 = vmatprep.subr.bf16.mxu0 0
        %4788 = vmatpush1.bf16.msra.mxu0 %v4689
        %4789 = vmatprep.subr.bf16.mxu0 0
        %4790 = vmatpush1.bf16.msra.mxu0 %v4690
        %4791 = vmatprep.subr.bf16.mxu0 0
        %4792 = vmatpush1.bf16.msra.mxu0 %v4691
        %4793 = vmatprep.subr.bf16.mxu0 0
        %4794 = vmatpush1.bf16.msra.mxu0 %v4692
        %4795 = vmatprep.subr.bf16.mxu0 0
        %4796 = vmatpush1.bf16.msra.mxu0 %v4693
        %4797 = vmatprep.subr.bf16.mxu0 0
        %4798 = vmatpush1.bf16.msra.mxu0 %v4694
        %4799 = vmatprep.subr.bf16.mxu0 0
        %4800 = vmatpush1.bf16.msra.mxu0 %v4695
        %4801 = vmatprep.subr.bf16.mxu0 0
        %4802 = vmatpush1.bf16.msra.mxu0 %v4696
        %4803 = vmatprep.subr.bf16.mxu0 0
        %4804 = vmatpush1.bf16.msra.mxu0 %v4697
        %4805 = vmatprep.mubr.bf16.mxu0 %v4472
        %4806 = vmatmul.mubr.bf16.gmra.mrb[0].mxu0 %v4471
        %v4807 = vpop.f32.mrb[0].mxu0
        %v4808 = vadd.f32 %v4768, %v4807
        %v4809 = vpop.f32.mrb[0].mxu0
        %v4810 = vpop.f32.mrb[0].mxu0
        %v4811 = vpop.f32.mrb[0].mxu0
        %4812 = vdwg.mxu0
        %v4813 = vmax.f32 %v4808, 0.0
        %v4814 = vld [vmem:[%s4] sm:$0xff]
        %v4815 = vld [vmem:[%s4 + $0x8] sm:$0xff]
        %v4816 = vld [vmem:[%s4 + $0x10] sm:$0xff]
        %v4817 = vld [vmem:[%s4 + $0x18] sm:$0xff]
        %v4818 = vld [vmem:[%s4 + $0x20] sm:$0xff]
        %v4819 = vld [vmem:[%s4 + $0x28] sm:$0xff]
        %v4820 = vld [vmem:[%s4 + $0x30] sm:$0xff]
        %v4821 = vld [vmem:[%s4 + $0x38] sm:$0xff]
        %v4822 = vld [vmem:[%s4 + $0x40] sm:$0xff]
        %v4823 = vld [vmem:[%s4 + $0x48] sm:$0xff]
        %v4824 = vld [vmem:[%s4 + $0x50] sm:$0xff]
        %v4825 = vld [vmem:[%s4 + $0x58] sm:$0xff]
        %v4826 = vld [vmem:[%s4 + $0x60] sm:$0xff]
        %v4827 = vld [vmem:[%s4 + $0x68] sm:$0xff]
        %v4828 = vld [vmem:[%s4 + $0x70] sm:$0xff]
        %v4829 = vld [vmem:[%s4 + $0x78] sm:$0xff]
        %v4830 = vrot.slane %v300, 5
        %4832 = vmatprep.subr.mxu0 0.0
        %4833 = vmatpush1.msra.mxu0 %v4814
        %4834 = vmatprep.subr.mxu0 0.0
        %4835 = vmatpush1.msra.mxu0 %v4815
        %4836 = vmatprep.subr.mxu0 0.0
        %4837 = vmatpush1.msra.mxu0 %v4816
        %4838 = vmatprep.subr.mxu0 0.0
        %4839 = vmatpush1.msra.mxu0 %v4817
        %4840 = vmatprep.subr.mxu0 0.0
        %4841 = vmatpush1.msra.mxu0 %v4818
        %4842 = vmatprep.subr.mxu0 0.0
        %4843 = vmatpush1.msra.mxu0 %v4819
        %4844 = vmatprep.subr.mxu0 0.0
        %4845 = vmatpush1.msra.mxu0 %v4820
        %4846 = vmatprep.subr.mxu0 0.0
        %4847 = vmatpush1.msra.mxu0 %v4821
        %4848 = vmatprep.subr.mxu0 0.0
        %4849 = vmatpush1.msra.mxu0 %v4822
        %4850 = vmatprep.subr.mxu0 0.0
        %4851 = vmatpush1.msra.mxu0 %v4823
        %4852 = vmatprep.subr.mxu0 0.0
        %4853 = vmatpush1.msra.mxu0 %v4824
        %4854 = vmatprep.subr.mxu0 0.0
        %4855 = vmatpush1.msra.mxu0 %v4825
        %4856 = vmatprep.subr.mxu0 0.0
        %4857 = vmatpush1.msra.mxu0 %v4826
        %4858 = vmatprep.subr.mxu0 0.0
        %4859 = vmatpush1.msra.mxu0 %v4827
        %4860 = vmatprep.subr.mxu0 0.0
        %4861 = vmatpush1.msra.mxu0 %v4828
        %4862 = vmatprep.subr.mxu0 0.0
        %4863 = vmatpush1.msra.mxu0 %v4829
        %4864 = vmatprep.subr.mxu0 0.0
        %4865 = vmatpush1.msra.mxu0 0.0
        %4866 = vmatprep.subr.mxu0 0.0
        %4867 = vmatpush1.msra.mxu0 0.0
        %4868 = vmatprep.subr.mxu0 0.0
        %4869 = vmatpush1.msra.mxu0 0.0
        %4870 = vmatprep.subr.mxu0 0.0
        %4871 = vmatpush1.msra.mxu0 0.0
        %4872 = vmatprep.subr.mxu0 0.0
        %4873 = vmatpush1.msra.mxu0 0.0
        %4874 = vmatprep.subr.mxu0 0.0
        %4875 = vmatpush1.msra.mxu0 0.0
        %4876 = vmatprep.subr.mxu0 0.0
        %4877 = vmatpush1.msra.mxu0 0.0
        %4878 = vmatprep.subr.mxu0 0.0
        %4879 = vmatpush1.msra.mxu0 0.0
        %4880 = vmatprep.subr.mxu0 0.0
        %4881 = vmatpush1.msra.mxu0 0.0
        %4882 = vmatprep.subr.mxu0 0.0
        %4883 = vmatpush1.msra.mxu0 0.0
        %4884 = vmatprep.subr.mxu0 0.0
        %4885 = vmatpush1.msra.mxu0 0.0
        %4886 = vmatprep.subr.mxu0 0.0
        %4887 = vmatpush1.msra.mxu0 0.0
        %4888 = vmatprep.subr.mxu0 0.0
        %4889 = vmatpush1.msra.mxu0 0.0
        %4890 = vmatprep.subr.mxu0 0.0
        %4891 = vmatpush1.msra.mxu0 0.0
        %4892 = vmatprep.subr.mxu0 0.0
        %4893 = vmatpush1.msra.mxu0 0.0
        %4894 = vmatprep.subr.mxu0 0.0
        %4895 = vmatpush1.msra.mxu0 0.0
        %4896 = vmatprep.mubr.f32.mxu0 0.0
        %4897 = vmatmul.mubr.f32.gmra.mrb[0].mxu0 %v4813
        %v4898 = vpop.f32.mrb[0].mxu0
        %v4899 = vadd.f32 %v4830, %v4898
        %v4900 = vpop.f32.mrb[0].mxu0
        %4901 = vdwg.mxu0
        %vm4902 = vcmask 57344
        %4903 = vst.msk [vmem:[%s285] sm:$0x1] %vm4902, %v4899
        %s4904 = sand.u32 %s146, 1
        %s4905 = scalar_lea.sflag [#allocation4], %s4904
        %s4906 = sand.u32 %s146, 1
        %s4907 = scalar_lea.vmem [#allocation8], %s4906
        // Predicated region
        $region53: #{tpu_custom_call.1} parent=39 // pred_check
          %p4908 = pneg %p156
        $region54: #{tpu_custom_call.1} parent=39 // pred_check_branch
          %4910 = sbr.rel (%p4908) target = $region56
        $region55: #{tpu_custom_call.1} parent=39 // pred_region
          %s4912 = ssub.s32 16, 16
          %4913 = vsyncadd %s4905, %s4912
          %s4914 = smul.addr %s23, 16
          %s4915 = scalar_lea.hbm %s5, %s4914
          %s4917 = sshll.u32 %s4907, 4
          %s4918 = int_to_ptr.vmem [resolvable:$true] %s4917
          %4920 = dma.vmem_to_hbm [thread:$0]  %s4918, 16, %s4915, %s4905
        $region56: #{tpu_custom_call.1} parent=39 // pred_fallthru
          _
      $region40: #{tpu_custom_call.1} parent=5 // pred_fallthru
        _
      %p4921 = scmp.le.s32.totalorder 2, %s18
      // Predicated region
      $region57: #{tpu_custom_call.1} parent=5 // pred_check
        %p4922 = pneg %p4921
      $region58: #{tpu_custom_call.1} parent=5 // pred_check_branch
        %4924 = sbr.rel (%p4922) target = $region60
      $region59: #{tpu_custom_call.1} parent=5 // pred_region
        %s4925 = ssub.s32 %s18, 2
        // Predicated region
        $region61: #{tpu_custom_call.1} parent=59 // pred_check
          %p4926 = pneg %p162
        $region62: #{tpu_custom_call.1} parent=59 // pred_check_branch
          %4928 = sbr.rel (%p4926) target = $region64
        $region63: #{tpu_custom_call.1} parent=59 // pred_region
          %s4929 = sand.u32 %s147, 1
          %s4930 = scalar_lea.sflag [#allocation4], %s4929
          %s4931 = sand.u32 %s147, 1
          %s4932 = scalar_lea.vmem [#allocation8], %s4931
          %4933 = dma.done %s4930, 16
        $region64: #{tpu_custom_call.1} parent=59 // pred_fallthru
          _
      $region60: #{tpu_custom_call.1} parent=5 // pred_fallthru
        _
    $region6: #{tpu_custom_call.1} parent=1 // loop_footer
      %s22 = sadd.s32 1, %s18
    $region7: #{tpu_custom_call.1} parent=1 // loop_footer_branch
      %17 = sbr.rel target = $region3
    $region8: #{tpu_custom_call.1} parent=1 // loop_exit
      _
    %4934 = vsyncpa [#allocation3], 1
    %s4935 = scalar_lea.sflag [#allocation3], 1
    %4936 = vsyncpa %s4935, 1
    %4937 = vsyncpa [#allocation6], 1
    %4938 = vsyncpa [#allocation4], 1
    %s4939 = scalar_lea.sflag [#allocation4], 1
    %4940 = vsyncpa %s4939, 1

</llo_original>
